<compile_context>
chip_gen: v7x
topology: tpu7x:2x2x1
jax: 0.10.0
libtpu: 0.0.40
codegen_flags: <defaults>
</compile_context>

<pallas_src>
import functools

import jax
import jax.numpy as jnp
from jax.experimental import pallas as pl
from jax.experimental.pallas import tpu as pltpu

_LANES = 128      # lane width of the packed parameter slab
_GAT3_OUT = 8     # GAT layer-3 output features (hard-coded in the PyTorch module)


def _round8(n):
    return -(-n // 8) * 8


def _build_layout(in_features, hidden1, hidden2, region_size):
    """Static row-offset layout of every parameter inside the packed (rows, 128) f32 slab."""
    dims = ((in_features, hidden1), (hidden1, hidden2), (hidden2, _GAT3_OUT))
    layout = {}
    off = 0

    def add(name, rows, cols):
        nonlocal off
        layout[name] = (off, rows, cols)
        off += _round8(rows)

    for li, (fi, fo) in enumerate(dims, start=1):
        add(f"W{li}", fi, fo)            # projection weight
    for li, (_, fo) in enumerate(dims, start=1):
        add(f"a1_{li}", fo, 1)           # a[:fo] as a column  -> s1 via skinny MXU matmul
    for li, (_, fo) in enumerate(dims, start=1):
        add(f"a2_{li}", 1, fo)           # a[fo:] as a row     -> s2 via skinny MXU matmul
    for li in range(1, 4):
        add(f"sp{li}", region_size, region_size)
    add("w_row", 1, _GAT3_OUT)           # Linear(8 -> 1) weight as a row
    add("scale", 1, region_size)         # eval BatchNorm scale (per node)
    add("shift", 1, region_size)         # eval BatchNorm shift + folded linear bias
    return layout, off, dims


# ----------------------------- fused whole-network kernel -----------------------------
def _fused_kernel(x_ref, ew_ref, slab_ref, out_ref, fc3_ref, h_scr,
                  *, B, N, alpha, dims, layout):
    def piece(name):
        off, rows, cols = layout[name]
        return slab_ref[off:off + rows, 0:cols]

    # Layer-1 adjacency is (1 - edge_weight); layers 2/3 reuse the previous attention.
    adj = [1.0 - ew_ref[b] for b in range(B)]

    for li, (fi, fo) in enumerate(dims, start=1):
        # Stacked (B*N, fi) @ (fi, fo) projection: batches share W -> one MXU matmul.
        h_prev = x_ref[...] if li == 1 else h_scr[:, 0:fi]
        h_stack = jnp.dot(h_prev, piece(f"W{li}"), preferred_element_type=jnp.float32)

        a1 = piece(f"a1_{li}")            # (fo, 1)
        a2 = piece(f"a2_{li}")            # (1, fo)
        sp = piece(f"sp{li}")             # (N, N)

        # s1[i] = a1 . h_i for both batches in one skinny MXU matmul
        # (replaces the cross-lane XLU reduction of the previous version).
        s1_all = jnp.dot(h_stack, a1, preferred_element_type=jnp.float32)   # (B*N, 1)

        att_list = []
        for b in range(B):                # B == 2 -> static unroll
            h_b = h_stack[b * N:(b + 1) * N, :]                   # (N, fo), tile-aligned slice
            # s2[j] = a2 . h_j as a row (per batch; avoids lane-offset value slicing).
            s2 = jax.lax.dot_general(a2, h_b, (((1,), (1,)), ((), ())),
                                     preferred_element_type=jnp.float32)    # (1, N)
            e = s1_all[b * N:(b + 1) * N, :] + s2                 # (N, N)
            e = jnp.where(e > 0, e, alpha * e)                    # LeakyReLU(alpha)
            att = jnp.where(adj[b] > 1e-5, e, jnp.full_like(e, -1e13))
            att = jnp.dot(att, sp, preferred_element_type=jnp.float32)
            m = jnp.max(att, axis=-1, keepdims=True)              # softmax over last dim
            p = jnp.exp(att - m)
            att = p / jnp.sum(p, axis=-1, keepdims=True)
            att = (att + att.T) * 0.5                             # symmetrize
            att_list.append(att)
            # concat=False -> no ELU; write h' into the persistent scratch that feeds the
            # next layer's stacked projection (no jnp.concatenate relayouts).
            h_scr[b * N:(b + 1) * N, 0:fo] = jnp.dot(
                att, h_b, preferred_element_type=jnp.float32)
        adj = att_list                                            # next layer's adjacency

    # -------- VanillaGCN tail: LeakyReLU_0.01(BatchNorm_eval(Linear(att3 @ h3))) --------
    w_row = piece("w_row")                # (1, 8)
    scale = piece("scale")                # (1, N)
    shift = piece("shift")                # (1, N)  (includes the linear bias)
    fo3 = dims[-1][1]
    for b in range(B):
        h3_b = h_scr[b * N:(b + 1) * N, 0:fo3]                    # (N, 8) = GAT-3 output
        hw = jax.lax.dot_general(w_row, h3_b, (((1,), (1,)), ((), ())),
                                 preferred_element_type=jnp.float32)        # (1, N)
        # att3 is exactly symmetric, so (att3 @ h3 @ w^T)^T == (h3 @ w^T)^T @ att3:
        # the row form keeps the GCN output store lane-major instead of a (N, 1) column.
        z = jnp.dot(hw, adj[b], preferred_element_type=jnp.float32)          # (1, N)
        z = z * scale + shift
        out_ref[b] = jnp.where(z > 0, z, 0.01 * z).astype(out_ref.dtype)     # LeakyReLU(0.01)
        fc3_ref[b] = adj[b].astype(fc3_ref.dtype)


def make_whole_network(region_size, in_features, hidden1, hidden2, alpha=0.01):
    """Returns forward(param_slab, x, edge_weight) -> (gcn_out (B,N,1), fc3 (B,N,N))."""
    layout, _, dims = _build_layout(in_features, hidden1, hidden2, region_size)
    scratch_cols = max(hidden1, hidden2, _GAT3_OUT)

    def forward(slab, x, edge_weight):
        B, N, Fin = x.shape
        kernel = functools.partial(_fused_kernel, B=B, N=N, alpha=alpha,
                                   dims=dims, layout=layout)
        out, fc3 = pl.pallas_call(
            kernel,
            out_shape=(jax.ShapeDtypeStruct((B, 1, N), jnp.float32),   # GCN out (lane-major)
                       jax.ShapeDtypeStruct((B, N, N), jnp.float32)),  # layer-3 attention
            scratch_shapes=[pltpu.VMEM((B * N, scratch_cols), jnp.float32)],
        )(x.reshape(B * N, Fin), edge_weight, slab)
        return out.reshape(B, N, 1), fc3

    return forward


# ----------------------------- parameter init / packing (deterministic) ----------------
def _xavier_uniform(key, shape, gain=1.414):
    fan_in, fan_out = shape[0], shape[1]
    bound = gain * (6.0 / (fan_in + fan_out)) ** 0.5
    return jax.random.uniform(key, shape, jnp.float32, -bound, bound)


def init_params(key, region_size, in_features, hidden1, hidden2):
    """Deterministic parameters mirroring the PyTorch module's initialization."""
    dims = ((in_features, hidden1), (hidden1, hidden2), (hidden2, _GAT3_OUT))
    ks = jax.random.split(key, 10)
    params = {}
    for li, (fi, fo) in enumerate(dims, start=1):
        params[f"W_g{li}"] = _xavier_uniform(ks[3 * (li - 1)], (fi, fo))
        params[f"a_g{li}"] = _xavier_uniform(ks[3 * (li - 1) + 1], (2 * fo, 1))
        params[f"sparse_g{li}"] = _xavier_uniform(ks[3 * (li - 1) + 2],
                                                  (region_size, region_size))
    # VanillaGCN: Linear(8 -> 1) kaiming-normal weight, zero bias; BatchNorm1d(1, 0) stats.
    params["w_lin"] = (2.0 / _GAT3_OUT) ** 0.5 * jax.random.normal(
        ks[9], (1, _GAT3_OUT), jnp.float32)
    params["b_lin"] = jnp.zeros((1,), jnp.float32)
    params["bn_gamma"] = jnp.ones((region_size,), jnp.float32)
    params["bn_beta"] = jnp.zeros((region_size,), jnp.float32)
    params["bn_mean"] = jnp.zeros((region_size,), jnp.float32)
    params["bn_var"] = jnp.ones((region_size,), jnp.float32)
    return params


def pack_params(params, region_size, in_features, hidden1, hidden2, eps=1e-5):
    """Pack all 17 small parameters into a single (rows, 128) f32 slab (one HBM->VMEM DMA)."""
    layout, total_rows, dims = _build_layout(in_features, hidden1, hidden2, region_size)
    slab = jnp.zeros((total_rows, _LANES), jnp.float32)

    def put(s, name, val):
        off, rows, cols = layout[name]
        val = jnp.asarray(val, jnp.float32).reshape(rows, cols)
        return s.at[off:off + rows, 0:cols].set(val)

    for li, (fi, fo) in enumerate(dims, start=1):
        a = params[f"a_g{li}"]
        slab = put(slab, f"W{li}", params[f"W_g{li}"])
        slab = put(slab, f"a1_{li}", a[:fo, :])          # column -> multiplies h_i
        slab = put(slab, f"a2_{li}", a[fo:, :].T)        # row    -> multiplies h_j
        slab = put(slab, f"sp{li}", params[f"sparse_g{li}"])
    slab = put(slab, "w_row", params["w_lin"])
    # eval-mode BatchNorm1d folded with the linear bias:  y = z * scale + shift
    scale = params["bn_gamma"] * jax.lax.rsqrt(params["bn_var"] + eps)
    shift = params["bn_beta"] + (params["b_lin"][0] - params["bn_mean"]) * scale
    slab = put(slab, "scale", scale)
    slab = put(slab, "shift", shift)
    return slab


if __name__ == "__main__":
    B = 2
    region_size = 16       # N (graph nodes / regions)
    in_features = 32
    hidden1 = 32
    hidden2 = 16

    key = jax.random.PRNGKey(0)
    kp, kx, ke = jax.random.split(key, 3)
    params = init_params(kp, region_size, in_features, hidden1, hidden2)
    slab = pack_params(params, region_size, in_features, hidden1, hidden2)

    x = jax.random.normal(kx, (B, region_size, in_features), jnp.float32)
    edge_weight = jax.random.uniform(ke, (B, region_size, region_size), jnp.float32)

    fwd = jax.jit(make_whole_network(region_size, in_features, hidden1, hidden2))
    out, fc3 = fwd(slab, x, edge_weight)
    jax.block_until_ready((out, fc3))

    assert out.shape == (B, region_size, 1)
    assert fc3.shape == (B, region_size, region_size)
    assert bool(jnp.all(jnp.isfinite(out))) and bool(jnp.all(jnp.isfinite(fc3)))
    print("KERNEL_OK")
</pallas_src>

<mosaic_0001>
module attributes {stable_mosaic.version = 11 : i64} {
  func.func @_fused_kernel(%arg0: memref<32x32xf32, #tpu.memory_space<vmem>>, %arg1: memref<2x16x16xf32, #tpu.memory_space<vmem>>, %arg2: memref<232x128xf32, #tpu.memory_space<vmem>>, %arg3: memref<2x1x16xf32, #tpu.memory_space<vmem>>, %arg4: memref<2x16x16xf32, #tpu.memory_space<vmem>>, %arg5: memref<32x32xf32, #tpu.memory_space<vmem>>) attributes {dimension_semantics = [], scalar_prefetch = 0 : i64, scratch_operands = 1 : i64, tpu.core_type = #tpu.core_type<tc>} {
    %c0 = arith.constant 0 : index
    %c0_0 = arith.constant 0 : index
    %c0_1 = arith.constant 0 : index
    %0 = vector.load %arg1[%c0, %c0_0, %c0_1] : memref<2x16x16xf32, #tpu.memory_space<vmem>>, vector<1x16x16xf32>
    %1 = vector.shape_cast %0 : vector<1x16x16xf32> to vector<16x16xf32>
    %cst = arith.constant 1.000000e+00 : f32
    %2 = vector.broadcast %cst : f32 to vector<16x16xf32>
    %3 = arith.subf %2, %1 : vector<16x16xf32>
    %c1 = arith.constant 1 : index
    %c0_2 = arith.constant 0 : index
    %c0_3 = arith.constant 0 : index
    %4 = vector.load %arg1[%c1, %c0_2, %c0_3] : memref<2x16x16xf32, #tpu.memory_space<vmem>>, vector<1x16x16xf32>
    %5 = vector.shape_cast %4 : vector<1x16x16xf32> to vector<16x16xf32>
    %cst_4 = arith.constant 1.000000e+00 : f32
    %6 = vector.broadcast %cst_4 : f32 to vector<16x16xf32>
    %7 = arith.subf %6, %5 : vector<16x16xf32>
    %c0_5 = arith.constant 0 : index
    %c0_6 = arith.constant 0 : index
    %8 = vector.load %arg0[%c0_5, %c0_6] : memref<32x32xf32, #tpu.memory_space<vmem>>, vector<32x32xf32>
    %c0_7 = arith.constant 0 : index
    %c0_8 = arith.constant 0 : index
    %9 = vector.load %arg2[%c0_7, %c0_8] : memref<232x128xf32, #tpu.memory_space<vmem>>, vector<32x32xf32>
    %cst_9 = arith.constant dense<0.000000e+00> : vector<32x32xf32>
    %10 = tpu.matmul %8, %9, %cst_9 {dimension_numbers = #tpu.dot_dimension_numbers<[1], [0], [0], [1], [0, 0, 1, 1], [], []>} : vector<32x32xf32>, vector<32x32xf32>, vector<32x32xf32> -> vector<32x32xf32>
    %c80 = arith.constant 80 : index
    %c0_10 = arith.constant 0 : index
    %11 = vector.load %arg2[%c80, %c0_10] : memref<232x128xf32, #tpu.memory_space<vmem>>, vector<32x1xf32>
    %c136 = arith.constant 136 : index
    %c0_11 = arith.constant 0 : index
    %12 = vector.load %arg2[%c136, %c0_11] : memref<232x128xf32, #tpu.memory_space<vmem>>, vector<1x32xf32>
    %c160 = arith.constant 160 : index
    %c0_12 = arith.constant 0 : index
    %13 = vector.load %arg2[%c160, %c0_12] : memref<232x128xf32, #tpu.memory_space<vmem>>, vector<16x16xf32>
    %cst_13 = arith.constant dense<0.000000e+00> : vector<32x1xf32>
    %14 = tpu.matmul %10, %11, %cst_13 {dimension_numbers = #tpu.dot_dimension_numbers<[1], [0], [0], [1], [0, 0, 1, 1], [], []>} : vector<32x32xf32>, vector<32x1xf32>, vector<32x1xf32> -> vector<32x1xf32>
    %15 = vector.extract_strided_slice %10 {offsets = [0, 0], sizes = [16, 32], strides = [1, 1]} : vector<32x32xf32> to vector<16x32xf32>
    %cst_14 = arith.constant dense<0.000000e+00> : vector<1x16xf32>
    %16 = tpu.matmul %12, %15, %cst_14 {dimension_numbers = #tpu.dot_dimension_numbers<[1], [1], [0], [0], [0, 0, 1, 0], [], []>} : vector<1x32xf32>, vector<16x32xf32>, vector<1x16xf32> -> vector<1x16xf32>
    %17 = vector.extract_strided_slice %14 {offsets = [0, 0], sizes = [16, 1], strides = [1, 1]} : vector<32x1xf32> to vector<16x1xf32>
    %18 = vector.broadcast %17 : vector<16x1xf32> to vector<16x16xf32>
    %19 = vector.broadcast %16 : vector<1x16xf32> to vector<16x16xf32>
    %20 = arith.addf %18, %19 : vector<16x16xf32>
    %cst_15 = arith.constant 0.000000e+00 : f32
    %21 = vector.broadcast %cst_15 : f32 to vector<16x16xf32>
    %22 = arith.cmpf ogt, %20, %21 : vector<16x16xf32>
    %cst_16 = arith.constant 0.00999999977 : f32
    %23 = vector.broadcast %cst_16 : f32 to vector<16x16xf32>
    %24 = arith.mulf %23, %20 : vector<16x16xf32>
    %25 = arith.select %22, %20, %24 : vector<16x16xi1>, vector<16x16xf32>
    %cst_17 = arith.constant 9.99999974E-6 : f32
    %26 = vector.broadcast %cst_17 : f32 to vector<16x16xf32>
    %27 = arith.cmpf ogt, %3, %26 : vector<16x16xf32>
    %cst_18 = arith.constant -9.99999982E+12 : f32
    %28 = vector.broadcast %cst_18 : f32 to vector<16x16xf32>
    %29 = arith.select %27, %25, %28 : vector<16x16xi1>, vector<16x16xf32>
    %cst_19 = arith.constant dense<0.000000e+00> : vector<16x16xf32>
    %30 = tpu.matmul %29, %13, %cst_19 {dimension_numbers = #tpu.dot_dimension_numbers<[1], [0], [0], [1], [0, 0, 1, 1], [], []>} : vector<16x16xf32>, vector<16x16xf32>, vector<16x16xf32> -> vector<16x16xf32>
    %cst_20 = arith.constant dense<0xFF800000> : vector<16xf32>
    %31 = vector.multi_reduction <maximumf>, %30, %cst_20 [1] : vector<16x16xf32> to vector<16xf32>
    %32 = vector.shape_cast %31 : vector<16xf32> to vector<16x1xf32>
    %33 = vector.broadcast %32 : vector<16x1xf32> to vector<16x16xf32>
    %34 = arith.subf %30, %33 : vector<16x16xf32>
    %35 = math.exp %34 : vector<16x16xf32>
    %cst_21 = arith.constant dense<0.000000e+00> : vector<16xf32>
    %36 = vector.multi_reduction <add>, %35, %cst_21 [1] : vector<16x16xf32> to vector<16xf32>
    %37 = vector.shape_cast %36 : vector<16xf32> to vector<16x1xf32>
    %38 = vector.broadcast %37 : vector<16x1xf32> to vector<16x16xf32>
    %39 = arith.divf %35, %38 : vector<16x16xf32>
    %40 = tpu.transpose %39, [1, 0] : vector<16x16xf32> -> vector<16x16xf32>
    %41 = arith.addf %39, %40 : vector<16x16xf32>
    %cst_22 = arith.constant 5.000000e-01 : f32
    %42 = vector.broadcast %cst_22 : f32 to vector<16x16xf32>
    %43 = arith.mulf %41, %42 : vector<16x16xf32>
    %cst_23 = arith.constant dense<0.000000e+00> : vector<16x32xf32>
    %44 = tpu.matmul %43, %15, %cst_23 {dimension_numbers = #tpu.dot_dimension_numbers<[1], [0], [0], [1], [0, 0, 1, 1], [], []>} : vector<16x16xf32>, vector<16x32xf32>, vector<16x32xf32> -> vector<16x32xf32>
    %c0_24 = arith.constant 0 : index
    %c0_25 = arith.constant 0 : index
    %45 = vector.load %arg5[%c0_24, %c0_25] : memref<32x32xf32, #tpu.memory_space<vmem>>, vector<16x32xf32>
    tpu.vector_store %arg5[%c0_24, %c0_25], %44 {strides = array<i32>} : memref<32x32xf32, #tpu.memory_space<vmem>>, vector<16x32xf32>,
    %46 = vector.extract_strided_slice %10 {offsets = [16, 0], sizes = [16, 32], strides = [1, 1]} : vector<32x32xf32> to vector<16x32xf32>
    %cst_26 = arith.constant dense<0.000000e+00> : vector<1x16xf32>
    %47 = tpu.matmul %12, %46, %cst_26 {dimension_numbers = #tpu.dot_dimension_numbers<[1], [1], [0], [0], [0, 0, 1, 0], [], []>} : vector<1x32xf32>, vector<16x32xf32>, vector<1x16xf32> -> vector<1x16xf32>
    %48 = vector.extract_strided_slice %14 {offsets = [16, 0], sizes = [16, 1], strides = [1, 1]} : vector<32x1xf32> to vector<16x1xf32>
    %49 = vector.broadcast %48 : vector<16x1xf32> to vector<16x16xf32>
    %50 = vector.broadcast %47 : vector<1x16xf32> to vector<16x16xf32>
    %51 = arith.addf %49, %50 : vector<16x16xf32>
    %cst_27 = arith.constant 0.000000e+00 : f32
    %52 = vector.broadcast %cst_27 : f32 to vector<16x16xf32>
    %53 = arith.cmpf ogt, %51, %52 : vector<16x16xf32>
    %cst_28 = arith.constant 0.00999999977 : f32
    %54 = vector.broadcast %cst_28 : f32 to vector<16x16xf32>
    %55 = arith.mulf %54, %51 : vector<16x16xf32>
    %56 = arith.select %53, %51, %55 : vector<16x16xi1>, vector<16x16xf32>
    %cst_29 = arith.constant 9.99999974E-6 : f32
    %57 = vector.broadcast %cst_29 : f32 to vector<16x16xf32>
    %58 = arith.cmpf ogt, %7, %57 : vector<16x16xf32>
    %cst_30 = arith.constant -9.99999982E+12 : f32
    %59 = vector.broadcast %cst_30 : f32 to vector<16x16xf32>
    %60 = arith.select %58, %56, %59 : vector<16x16xi1>, vector<16x16xf32>
    %cst_31 = arith.constant dense<0.000000e+00> : vector<16x16xf32>
    %61 = tpu.matmul %60, %13, %cst_31 {dimension_numbers = #tpu.dot_dimension_numbers<[1], [0], [0], [1], [0, 0, 1, 1], [], []>} : vector<16x16xf32>, vector<16x16xf32>, vector<16x16xf32> -> vector<16x16xf32>
    %cst_32 = arith.constant dense<0xFF800000> : vector<16xf32>
    %62 = vector.multi_reduction <maximumf>, %61, %cst_32 [1] : vector<16x16xf32> to vector<16xf32>
    %63 = vector.shape_cast %62 : vector<16xf32> to vector<16x1xf32>
    %64 = vector.broadcast %63 : vector<16x1xf32> to vector<16x16xf32>
    %65 = arith.subf %61, %64 : vector<16x16xf32>
    %66 = math.exp %65 : vector<16x16xf32>
    %cst_33 = arith.constant dense<0.000000e+00> : vector<16xf32>
    %67 = vector.multi_reduction <add>, %66, %cst_33 [1] : vector<16x16xf32> to vector<16xf32>
    %68 = vector.shape_cast %67 : vector<16xf32> to vector<16x1xf32>
    %69 = vector.broadcast %68 : vector<16x1xf32> to vector<16x16xf32>
    %70 = arith.divf %66, %69 : vector<16x16xf32>
    %71 = tpu.transpose %70, [1, 0] : vector<16x16xf32> -> vector<16x16xf32>
    %72 = arith.addf %70, %71 : vector<16x16xf32>
    %cst_34 = arith.constant 5.000000e-01 : f32
    %73 = vector.broadcast %cst_34 : f32 to vector<16x16xf32>
    %74 = arith.mulf %72, %73 : vector<16x16xf32>
    %cst_35 = arith.constant dense<0.000000e+00> : vector<16x32xf32>
    %75 = tpu.matmul %74, %46, %cst_35 {dimension_numbers = #tpu.dot_dimension_numbers<[1], [0], [0], [1], [0, 0, 1, 1], [], []>} : vector<16x16xf32>, vector<16x32xf32>, vector<16x32xf32> -> vector<16x32xf32>
    %c16 = arith.constant 16 : index
    %c0_36 = arith.constant 0 : index
    %76 = vector.load %arg5[%c16, %c0_36] : memref<32x32xf32, #tpu.memory_space<vmem>>, vector<16x32xf32>
    tpu.vector_store %arg5[%c16, %c0_36], %75 {strides = array<i32>} : memref<32x32xf32, #tpu.memory_space<vmem>>, vector<16x32xf32>,
    %c0_37 = arith.constant 0 : index
    %c0_38 = arith.constant 0 : index
    %77 = vector.load %arg5[%c0_37, %c0_38] : memref<32x32xf32, #tpu.memory_space<vmem>>, vector<32x32xf32>
    %c32 = arith.constant 32 : index
    %c0_39 = arith.constant 0 : index
    %78 = vector.load %arg2[%c32, %c0_39] : memref<232x128xf32, #tpu.memory_space<vmem>>, vector<32x16xf32>
    %cst_40 = arith.constant dense<0.000000e+00> : vector<32x16xf32>
    %79 = tpu.matmul %77, %78, %cst_40 {dimension_numbers = #tpu.dot_dimension_numbers<[1], [0], [0], [1], [0, 0, 1, 1], [], []>} : vector<32x32xf32>, vector<32x16xf32>, vector<32x16xf32> -> vector<32x16xf32>
    %c112 = arith.constant 112 : index
    %c0_41 = arith.constant 0 : index
    %80 = vector.load %arg2[%c112, %c0_41] : memref<232x128xf32, #tpu.memory_space<vmem>>, vector<16x1xf32>
    %c144 = arith.constant 144 : index
    %c0_42 = arith.constant 0 : index
    %81 = vector.load %arg2[%c144, %c0_42] : memref<232x128xf32, #tpu.memory_space<vmem>>, vector<1x16xf32>
    %c176 = arith.constant 176 : index
    %c0_43 = arith.constant 0 : index
    %82 = vector.load %arg2[%c176, %c0_43] : memref<232x128xf32, #tpu.memory_space<vmem>>, vector<16x16xf32>
    %cst_44 = arith.constant dense<0.000000e+00> : vector<32x1xf32>
    %83 = tpu.matmul %79, %80, %cst_44 {dimension_numbers = #tpu.dot_dimension_numbers<[1], [0], [0], [1], [0, 0, 1, 1], [], []>} : vector<32x16xf32>, vector<16x1xf32>, vector<32x1xf32> -> vector<32x1xf32>
    %84 = vector.extract_strided_slice %79 {offsets = [0, 0], sizes = [16, 16], strides = [1, 1]} : vector<32x16xf32> to vector<16x16xf32>
    %cst_45 = arith.constant dense<0.000000e+00> : vector<1x16xf32>
    %85 = tpu.matmul %81, %84, %cst_45 {dimension_numbers = #tpu.dot_dimension_numbers<[1], [1], [0], [0], [0, 0, 1, 0], [], []>} : vector<1x16xf32>, vector<16x16xf32>, vector<1x16xf32> -> vector<1x16xf32>
    %86 = vector.extract_strided_slice %83 {offsets = [0, 0], sizes = [16, 1], strides = [1, 1]} : vector<32x1xf32> to vector<16x1xf32>
    %87 = vector.broadcast %86 : vector<16x1xf32> to vector<16x16xf32>
    %88 = vector.broadcast %85 : vector<1x16xf32> to vector<16x16xf32>
    %89 = arith.addf %87, %88 : vector<16x16xf32>
    %cst_46 = arith.constant 0.000000e+00 : f32
    %90 = vector.broadcast %cst_46 : f32 to vector<16x16xf32>
    %91 = arith.cmpf ogt, %89, %90 : vector<16x16xf32>
    %cst_47 = arith.constant 0.00999999977 : f32
    %92 = vector.broadcast %cst_47 : f32 to vector<16x16xf32>
    %93 = arith.mulf %92, %89 : vector<16x16xf32>
    %94 = arith.select %91, %89, %93 : vector<16x16xi1>, vector<16x16xf32>
    %cst_48 = arith.constant 9.99999974E-6 : f32
    %95 = vector.broadcast %cst_48 : f32 to vector<16x16xf32>
    %96 = arith.cmpf ogt, %43, %95 : vector<16x16xf32>
    %cst_49 = arith.constant -9.99999982E+12 : f32
    %97 = vector.broadcast %cst_49 : f32 to vector<16x16xf32>
    %98 = arith.select %96, %94, %97 : vector<16x16xi1>, vector<16x16xf32>
    %cst_50 = arith.constant dense<0.000000e+00> : vector<16x16xf32>
    %99 = tpu.matmul %98, %82, %cst_50 {dimension_numbers = #tpu.dot_dimension_numbers<[1], [0], [0], [1], [0, 0, 1, 1], [], []>} : vector<16x16xf32>, vector<16x16xf32>, vector<16x16xf32> -> vector<16x16xf32>
    %cst_51 = arith.constant dense<0xFF800000> : vector<16xf32>
    %100 = vector.multi_reduction <maximumf>, %99, %cst_51 [1] : vector<16x16xf32> to vector<16xf32>
    %101 = vector.shape_cast %100 : vector<16xf32> to vector<16x1xf32>
    %102 = vector.broadcast %101 : vector<16x1xf32> to vector<16x16xf32>
    %103 = arith.subf %99, %102 : vector<16x16xf32>
    %104 = math.exp %103 : vector<16x16xf32>
    %cst_52 = arith.constant dense<0.000000e+00> : vector<16xf32>
    %105 = vector.multi_reduction <add>, %104, %cst_52 [1] : vector<16x16xf32> to vector<16xf32>
    %106 = vector.shape_cast %105 : vector<16xf32> to vector<16x1xf32>
    %107 = vector.broadcast %106 : vector<16x1xf32> to vector<16x16xf32>
    %108 = arith.divf %104, %107 : vector<16x16xf32>
    %109 = tpu.transpose %108, [1, 0] : vector<16x16xf32> -> vector<16x16xf32>
    %110 = arith.addf %108, %109 : vector<16x16xf32>
    %cst_53 = arith.constant 5.000000e-01 : f32
    %111 = vector.broadcast %cst_53 : f32 to vector<16x16xf32>
    %112 = arith.mulf %110, %111 : vector<16x16xf32>
    %cst_54 = arith.constant dense<0.000000e+00> : vector<16x16xf32>
    %113 = tpu.matmul %112, %84, %cst_54 {dimension_numbers = #tpu.dot_dimension_numbers<[1], [0], [0], [1], [0, 0, 1, 1], [], []>} : vector<16x16xf32>, vector<16x16xf32>, vector<16x16xf32> -> vector<16x16xf32>
    %c0_55 = arith.constant 0 : index
    %c0_56 = arith.constant 0 : index
    %114 = vector.load %arg5[%c0_55, %c0_56] : memref<32x32xf32, #tpu.memory_space<vmem>>, vector<16x16xf32>
    tpu.vector_store %arg5[%c0_55, %c0_56], %113 {strides = array<i32>} : memref<32x32xf32, #tpu.memory_space<vmem>>, vector<16x16xf32>,
    %115 = vector.extract_strided_slice %79 {offsets = [16, 0], sizes = [16, 16], strides = [1, 1]} : vector<32x16xf32> to vector<16x16xf32>
    %cst_57 = arith.constant dense<0.000000e+00> : vector<1x16xf32>
    %116 = tpu.matmul %81, %115, %cst_57 {dimension_numbers = #tpu.dot_dimension_numbers<[1], [1], [0], [0], [0, 0, 1, 0], [], []>} : vector<1x16xf32>, vector<16x16xf32>, vector<1x16xf32> -> vector<1x16xf32>
    %117 = vector.extract_strided_slice %83 {offsets = [16, 0], sizes = [16, 1], strides = [1, 1]} : vector<32x1xf32> to vector<16x1xf32>
    %118 = vector.broadcast %117 : vector<16x1xf32> to vector<16x16xf32>
    %119 = vector.broadcast %116 : vector<1x16xf32> to vector<16x16xf32>
    %120 = arith.addf %118, %119 : vector<16x16xf32>
    %cst_58 = arith.constant 0.000000e+00 : f32
    %121 = vector.broadcast %cst_58 : f32 to vector<16x16xf32>
    %122 = arith.cmpf ogt, %120, %121 : vector<16x16xf32>
    %cst_59 = arith.constant 0.00999999977 : f32
    %123 = vector.broadcast %cst_59 : f32 to vector<16x16xf32>
    %124 = arith.mulf %123, %120 : vector<16x16xf32>
    %125 = arith.select %122, %120, %124 : vector<16x16xi1>, vector<16x16xf32>
    %cst_60 = arith.constant 9.99999974E-6 : f32
    %126 = vector.broadcast %cst_60 : f32 to vector<16x16xf32>
    %127 = arith.cmpf ogt, %74, %126 : vector<16x16xf32>
    %cst_61 = arith.constant -9.99999982E+12 : f32
    %128 = vector.broadcast %cst_61 : f32 to vector<16x16xf32>
    %129 = arith.select %127, %125, %128 : vector<16x16xi1>, vector<16x16xf32>
    %cst_62 = arith.constant dense<0.000000e+00> : vector<16x16xf32>
    %130 = tpu.matmul %129, %82, %cst_62 {dimension_numbers = #tpu.dot_dimension_numbers<[1], [0], [0], [1], [0, 0, 1, 1], [], []>} : vector<16x16xf32>, vector<16x16xf32>, vector<16x16xf32> -> vector<16x16xf32>
    %cst_63 = arith.constant dense<0xFF800000> : vector<16xf32>
    %131 = vector.multi_reduction <maximumf>, %130, %cst_63 [1] : vector<16x16xf32> to vector<16xf32>
    %132 = vector.shape_cast %131 : vector<16xf32> to vector<16x1xf32>
    %133 = vector.broadcast %132 : vector<16x1xf32> to vector<16x16xf32>
    %134 = arith.subf %130, %133 : vector<16x16xf32>
    %135 = math.exp %134 : vector<16x16xf32>
    %cst_64 = arith.constant dense<0.000000e+00> : vector<16xf32>
    %136 = vector.multi_reduction <add>, %135, %cst_64 [1] : vector<16x16xf32> to vector<16xf32>
    %137 = vector.shape_cast %136 : vector<16xf32> to vector<16x1xf32>
    %138 = vector.broadcast %137 : vector<16x1xf32> to vector<16x16xf32>
    %139 = arith.divf %135, %138 : vector<16x16xf32>
    %140 = tpu.transpose %139, [1, 0] : vector<16x16xf32> -> vector<16x16xf32>
    %141 = arith.addf %139, %140 : vector<16x16xf32>
    %cst_65 = arith.constant 5.000000e-01 : f32
    %142 = vector.broadcast %cst_65 : f32 to vector<16x16xf32>
    %143 = arith.mulf %141, %142 : vector<16x16xf32>
    %cst_66 = arith.constant dense<0.000000e+00> : vector<16x16xf32>
    %144 = tpu.matmul %143, %115, %cst_66 {dimension_numbers = #tpu.dot_dimension_numbers<[1], [0], [0], [1], [0, 0, 1, 1], [], []>} : vector<16x16xf32>, vector<16x16xf32>, vector<16x16xf32> -> vector<16x16xf32>
    %c16_67 = arith.constant 16 : index
    %c0_68 = arith.constant 0 : index
    %145 = vector.load %arg5[%c16_67, %c0_68] : memref<32x32xf32, #tpu.memory_space<vmem>>, vector<16x16xf32>
    tpu.vector_store %arg5[%c16_67, %c0_68], %144 {strides = array<i32>} : memref<32x32xf32, #tpu.memory_space<vmem>>, vector<16x16xf32>,
    %c0_69 = arith.constant 0 : index
    %c0_70 = arith.constant 0 : index
    %146 = vector.load %arg5[%c0_69, %c0_70] : memref<32x32xf32, #tpu.memory_space<vmem>>, vector<32x16xf32>
    %c64 = arith.constant 64 : index
    %c0_71 = arith.constant 0 : index
    %147 = vector.load %arg2[%c64, %c0_71] : memref<232x128xf32, #tpu.memory_space<vmem>>, vector<16x8xf32>
    %cst_72 = arith.constant dense<0.000000e+00> : vector<32x8xf32>
    %148 = tpu.matmul %146, %147, %cst_72 {dimension_numbers = #tpu.dot_dimension_numbers<[1], [0], [0], [1], [0, 0, 1, 1], [], []>} : vector<32x16xf32>, vector<16x8xf32>, vector<32x8xf32> -> vector<32x8xf32>
    %c128 = arith.constant 128 : index
    %c0_73 = arith.constant 0 : index
    %149 = vector.load %arg2[%c128, %c0_73] : memref<232x128xf32, #tpu.memory_space<vmem>>, vector<8x1xf32>
    %c152 = arith.constant 152 : index
    %c0_74 = arith.constant 0 : index
    %150 = vector.load %arg2[%c152, %c0_74] : memref<232x128xf32, #tpu.memory_space<vmem>>, vector<1x8xf32>
    %c192 = arith.constant 192 : index
    %c0_75 = arith.constant 0 : index
    %151 = vector.load %arg2[%c192, %c0_75] : memref<232x128xf32, #tpu.memory_space<vmem>>, vector<16x16xf32>
    %cst_76 = arith.constant dense<0.000000e+00> : vector<32x1xf32>
    %152 = tpu.matmul %148, %149, %cst_76 {dimension_numbers = #tpu.dot_dimension_numbers<[1], [0], [0], [1], [0, 0, 1, 1], [], []>} : vector<32x8xf32>, vector<8x1xf32>, vector<32x1xf32> -> vector<32x1xf32>
    %153 = vector.extract_strided_slice %148 {offsets = [0, 0], sizes = [16, 8], strides = [1, 1]} : vector<32x8xf32> to vector<16x8xf32>
    %cst_77 = arith.constant dense<0.000000e+00> : vector<1x16xf32>
    %154 = tpu.matmul %150, %153, %cst_77 {dimension_numbers = #tpu.dot_dimension_numbers<[1], [1], [0], [0], [0, 0, 1, 0], [], []>} : vector<1x8xf32>, vector<16x8xf32>, vector<1x16xf32> -> vector<1x16xf32>
    %155 = vector.extract_strided_slice %152 {offsets = [0, 0], sizes = [16, 1], strides = [1, 1]} : vector<32x1xf32> to vector<16x1xf32>
    %156 = vector.broadcast %155 : vector<16x1xf32> to vector<16x16xf32>
    %157 = vector.broadcast %154 : vector<1x16xf32> to vector<16x16xf32>
    %158 = arith.addf %156, %157 : vector<16x16xf32>
    %cst_78 = arith.constant 0.000000e+00 : f32
    %159 = vector.broadcast %cst_78 : f32 to vector<16x16xf32>
    %160 = arith.cmpf ogt, %158, %159 : vector<16x16xf32>
    %cst_79 = arith.constant 0.00999999977 : f32
    %161 = vector.broadcast %cst_79 : f32 to vector<16x16xf32>
    %162 = arith.mulf %161, %158 : vector<16x16xf32>
    %163 = arith.select %160, %158, %162 : vector<16x16xi1>, vector<16x16xf32>
    %cst_80 = arith.constant 9.99999974E-6 : f32
    %164 = vector.broadcast %cst_80 : f32 to vector<16x16xf32>
    %165 = arith.cmpf ogt, %112, %164 : vector<16x16xf32>
    %cst_81 = arith.constant -9.99999982E+12 : f32
    %166 = vector.broadcast %cst_81 : f32 to vector<16x16xf32>
    %167 = arith.select %165, %163, %166 : vector<16x16xi1>, vector<16x16xf32>
    %cst_82 = arith.constant dense<0.000000e+00> : vector<16x16xf32>
    %168 = tpu.matmul %167, %151, %cst_82 {dimension_numbers = #tpu.dot_dimension_numbers<[1], [0], [0], [1], [0, 0, 1, 1], [], []>} : vector<16x16xf32>, vector<16x16xf32>, vector<16x16xf32> -> vector<16x16xf32>
    %cst_83 = arith.constant dense<0xFF800000> : vector<16xf32>
    %169 = vector.multi_reduction <maximumf>, %168, %cst_83 [1] : vector<16x16xf32> to vector<16xf32>
    %170 = vector.shape_cast %169 : vector<16xf32> to vector<16x1xf32>
    %171 = vector.broadcast %170 : vector<16x1xf32> to vector<16x16xf32>
    %172 = arith.subf %168, %171 : vector<16x16xf32>
    %173 = math.exp %172 : vector<16x16xf32>
    %cst_84 = arith.constant dense<0.000000e+00> : vector<16xf32>
    %174 = vector.multi_reduction <add>, %173, %cst_84 [1] : vector<16x16xf32> to vector<16xf32>
    %175 = vector.shape_cast %174 : vector<16xf32> to vector<16x1xf32>
    %176 = vector.broadcast %175 : vector<16x1xf32> to vector<16x16xf32>
    %177 = arith.divf %173, %176 : vector<16x16xf32>
    %178 = tpu.transpose %177, [1, 0] : vector<16x16xf32> -> vector<16x16xf32>
    %179 = arith.addf %177, %178 : vector<16x16xf32>
    %cst_85 = arith.constant 5.000000e-01 : f32
    %180 = vector.broadcast %cst_85 : f32 to vector<16x16xf32>
    %181 = arith.mulf %179, %180 : vector<16x16xf32>
    %cst_86 = arith.constant dense<0.000000e+00> : vector<16x8xf32>
    %182 = tpu.matmul %181, %153, %cst_86 {dimension_numbers = #tpu.dot_dimension_numbers<[1], [0], [0], [1], [0, 0, 1, 1], [], []>} : vector<16x16xf32>, vector<16x8xf32>, vector<16x8xf32> -> vector<16x8xf32>
    %c0_87 = arith.constant 0 : index
    %c0_88 = arith.constant 0 : index
    %183 = vector.load %arg5[%c0_87, %c0_88] : memref<32x32xf32, #tpu.memory_space<vmem>>, vector<16x8xf32>
    tpu.vector_store %arg5[%c0_87, %c0_88], %182 {strides = array<i32>} : memref<32x32xf32, #tpu.memory_space<vmem>>, vector<16x8xf32>,
    %184 = vector.extract_strided_slice %148 {offsets = [16, 0], sizes = [16, 8], strides = [1, 1]} : vector<32x8xf32> to vector<16x8xf32>
    %cst_89 = arith.constant dense<0.000000e+00> : vector<1x16xf32>
    %185 = tpu.matmul %150, %184, %cst_89 {dimension_numbers = #tpu.dot_dimension_numbers<[1], [1], [0], [0], [0, 0, 1, 0], [], []>} : vector<1x8xf32>, vector<16x8xf32>, vector<1x16xf32> -> vector<1x16xf32>
    %186 = vector.extract_strided_slice %152 {offsets = [16, 0], sizes = [16, 1], strides = [1, 1]} : vector<32x1xf32> to vector<16x1xf32>
    %187 = vector.broadcast %186 : vector<16x1xf32> to vector<16x16xf32>
    %188 = vector.broadcast %185 : vector<1x16xf32> to vector<16x16xf32>
    %189 = arith.addf %187, %188 : vector<16x16xf32>
    %cst_90 = arith.constant 0.000000e+00 : f32
    %190 = vector.broadcast %cst_90 : f32 to vector<16x16xf32>
    %191 = arith.cmpf ogt, %189, %190 : vector<16x16xf32>
    %cst_91 = arith.constant 0.00999999977 : f32
    %192 = vector.broadcast %cst_91 : f32 to vector<16x16xf32>
    %193 = arith.mulf %192, %189 : vector<16x16xf32>
    %194 = arith.select %191, %189, %193 : vector<16x16xi1>, vector<16x16xf32>
    %cst_92 = arith.constant 9.99999974E-6 : f32
    %195 = vector.broadcast %cst_92 : f32 to vector<16x16xf32>
    %196 = arith.cmpf ogt, %143, %195 : vector<16x16xf32>
    %cst_93 = arith.constant -9.99999982E+12 : f32
    %197 = vector.broadcast %cst_93 : f32 to vector<16x16xf32>
    %198 = arith.select %196, %194, %197 : vector<16x16xi1>, vector<16x16xf32>
    %cst_94 = arith.constant dense<0.000000e+00> : vector<16x16xf32>
    %199 = tpu.matmul %198, %151, %cst_94 {dimension_numbers = #tpu.dot_dimension_numbers<[1], [0], [0], [1], [0, 0, 1, 1], [], []>} : vector<16x16xf32>, vector<16x16xf32>, vector<16x16xf32> -> vector<16x16xf32>
    %cst_95 = arith.constant dense<0xFF800000> : vector<16xf32>
    %200 = vector.multi_reduction <maximumf>, %199, %cst_95 [1] : vector<16x16xf32> to vector<16xf32>
    %201 = vector.shape_cast %200 : vector<16xf32> to vector<16x1xf32>
    %202 = vector.broadcast %201 : vector<16x1xf32> to vector<16x16xf32>
    %203 = arith.subf %199, %202 : vector<16x16xf32>
    %204 = math.exp %203 : vector<16x16xf32>
    %cst_96 = arith.constant dense<0.000000e+00> : vector<16xf32>
    %205 = vector.multi_reduction <add>, %204, %cst_96 [1] : vector<16x16xf32> to vector<16xf32>
    %206 = vector.shape_cast %205 : vector<16xf32> to vector<16x1xf32>
    %207 = vector.broadcast %206 : vector<16x1xf32> to vector<16x16xf32>
    %208 = arith.divf %204, %207 : vector<16x16xf32>
    %209 = tpu.transpose %208, [1, 0] : vector<16x16xf32> -> vector<16x16xf32>
    %210 = arith.addf %208, %209 : vector<16x16xf32>
    %cst_97 = arith.constant 5.000000e-01 : f32
    %211 = vector.broadcast %cst_97 : f32 to vector<16x16xf32>
    %212 = arith.mulf %210, %211 : vector<16x16xf32>
    %cst_98 = arith.constant dense<0.000000e+00> : vector<16x8xf32>
    %213 = tpu.matmul %212, %184, %cst_98 {dimension_numbers = #tpu.dot_dimension_numbers<[1], [0], [0], [1], [0, 0, 1, 1], [], []>} : vector<16x16xf32>, vector<16x8xf32>, vector<16x8xf32> -> vector<16x8xf32>
    %c16_99 = arith.constant 16 : index
    %c0_100 = arith.constant 0 : index
    %214 = vector.load %arg5[%c16_99, %c0_100] : memref<32x32xf32, #tpu.memory_space<vmem>>, vector<16x8xf32>
    tpu.vector_store %arg5[%c16_99, %c0_100], %213 {strides = array<i32>} : memref<32x32xf32, #tpu.memory_space<vmem>>, vector<16x8xf32>,
    %c208 = arith.constant 208 : index
    %c0_101 = arith.constant 0 : index
    %215 = vector.load %arg2[%c208, %c0_101] : memref<232x128xf32, #tpu.memory_space<vmem>>, vector<1x8xf32>
    %c216 = arith.constant 216 : index
    %c0_102 = arith.constant 0 : index
    %216 = vector.load %arg2[%c216, %c0_102] : memref<232x128xf32, #tpu.memory_space<vmem>>, vector<1x16xf32>
    %c224 = arith.constant 224 : index
    %c0_103 = arith.constant 0 : index
    %217 = vector.load %arg2[%c224, %c0_103] : memref<232x128xf32, #tpu.memory_space<vmem>>, vector<1x16xf32>
    %c0_104 = arith.constant 0 : index
    %c0_105 = arith.constant 0 : index
    %218 = vector.load %arg5[%c0_104, %c0_105] : memref<32x32xf32, #tpu.memory_space<vmem>>, vector<16x8xf32>
    %cst_106 = arith.constant dense<0.000000e+00> : vector<1x16xf32>
    %219 = tpu.matmul %215, %218, %cst_106 {dimension_numbers = #tpu.dot_dimension_numbers<[1], [1], [0], [0], [0, 0, 1, 0], [], []>} : vector<1x8xf32>, vector<16x8xf32>, vector<1x16xf32> -> vector<1x16xf32>
    %cst_107 = arith.constant dense<0.000000e+00> : vector<1x16xf32>
    %220 = tpu.matmul %219, %181, %cst_107 {dimension_numbers = #tpu.dot_dimension_numbers<[1], [0], [0], [1], [0, 0, 1, 1], [], []>} : vector<1x16xf32>, vector<16x16xf32>, vector<1x16xf32> -> vector<1x16xf32>
    %221 = arith.mulf %220, %216 : vector<1x16xf32>
    %222 = arith.addf %221, %217 : vector<1x16xf32>
    %cst_108 = arith.constant 0.000000e+00 : f32
    %223 = vector.broadcast %cst_108 : f32 to vector<1x16xf32>
    %224 = arith.cmpf ogt, %222, %223 : vector<1x16xf32>
    %cst_109 = arith.constant 0.00999999977 : f32
    %225 = vector.broadcast %cst_109 : f32 to vector<1x16xf32>
    %226 = arith.mulf %225, %222 : vector<1x16xf32>
    %227 = arith.select %224, %222, %226 : vector<1x16xi1>, vector<1x16xf32>
    %c0_110 = arith.constant 0 : index
    %c0_111 = arith.constant 0 : index
    %c0_112 = arith.constant 0 : index
    %228 = vector.load %arg3[%c0_110, %c0_111, %c0_112] : memref<2x1x16xf32, #tpu.memory_space<vmem>>, vector<1x1x16xf32>
    %229 = vector.shape_cast %228 : vector<1x1x16xf32> to vector<1x16xf32>
    %230 = vector.shape_cast %227 : vector<1x16xf32> to vector<1x1x16xf32>
    tpu.vector_store %arg3[%c0_110, %c0_111, %c0_112], %230 {strides = array<i32>} : memref<2x1x16xf32, #tpu.memory_space<vmem>>, vector<1x1x16xf32>,
    %c0_113 = arith.constant 0 : index
    %c0_114 = arith.constant 0 : index
    %c0_115 = arith.constant 0 : index
    %231 = vector.load %arg4[%c0_113, %c0_114, %c0_115] : memref<2x16x16xf32, #tpu.memory_space<vmem>>, vector<1x16x16xf32>
    %232 = vector.shape_cast %231 : vector<1x16x16xf32> to vector<16x16xf32>
    %233 = vector.shape_cast %181 : vector<16x16xf32> to vector<1x16x16xf32>
    tpu.vector_store %arg4[%c0_113, %c0_114, %c0_115], %233 {strides = array<i32>} : memref<2x16x16xf32, #tpu.memory_space<vmem>>, vector<1x16x16xf32>,
    %c16_116 = arith.constant 16 : index
    %c0_117 = arith.constant 0 : index
    %234 = vector.load %arg5[%c16_116, %c0_117] : memref<32x32xf32, #tpu.memory_space<vmem>>, vector<16x8xf32>
    %cst_118 = arith.constant dense<0.000000e+00> : vector<1x16xf32>
    %235 = tpu.matmul %215, %234, %cst_118 {dimension_numbers = #tpu.dot_dimension_numbers<[1], [1], [0], [0], [0, 0, 1, 0], [], []>} : vector<1x8xf32>, vector<16x8xf32>, vector<1x16xf32> -> vector<1x16xf32>
    %cst_119 = arith.constant dense<0.000000e+00> : vector<1x16xf32>
    %236 = tpu.matmul %235, %212, %cst_119 {dimension_numbers = #tpu.dot_dimension_numbers<[1], [0], [0], [1], [0, 0, 1, 1], [], []>} : vector<1x16xf32>, vector<16x16xf32>, vector<1x16xf32> -> vector<1x16xf32>
    %237 = arith.mulf %236, %216 : vector<1x16xf32>
    %238 = arith.addf %237, %217 : vector<1x16xf32>
    %cst_120 = arith.constant 0.000000e+00 : f32
    %239 = vector.broadcast %cst_120 : f32 to vector<1x16xf32>
    %240 = arith.cmpf ogt, %238, %239 : vector<1x16xf32>
    %cst_121 = arith.constant 0.00999999977 : f32
    %241 = vector.broadcast %cst_121 : f32 to vector<1x16xf32>
    %242 = arith.mulf %241, %238 : vector<1x16xf32>
    %243 = arith.select %240, %238, %242 : vector<1x16xi1>, vector<1x16xf32>
    %c1_122 = arith.constant 1 : index
    %c0_123 = arith.constant 0 : index
    %c0_124 = arith.constant 0 : index
    %244 = vector.load %arg3[%c1_122, %c0_123, %c0_124] : memref<2x1x16xf32, #tpu.memory_space<vmem>>, vector<1x1x16xf32>
    %245 = vector.shape_cast %244 : vector<1x1x16xf32> to vector<1x16xf32>
    %246 = vector.shape_cast %243 : vector<1x16xf32> to vector<1x1x16xf32>
    tpu.vector_store %arg3[%c1_122, %c0_123, %c0_124], %246 {strides = array<i32>} : memref<2x1x16xf32, #tpu.memory_space<vmem>>, vector<1x1x16xf32>,
    %c1_125 = arith.constant 1 : index
    %c0_126 = arith.constant 0 : index
    %c0_127 = arith.constant 0 : index
    %247 = vector.load %arg4[%c1_125, %c0_126, %c0_127] : memref<2x16x16xf32, #tpu.memory_space<vmem>>, vector<1x16x16xf32>
    %248 = vector.shape_cast %247 : vector<1x16x16xf32> to vector<16x16xf32>
    %249 = vector.shape_cast %212 : vector<16x16xf32> to vector<1x16x16xf32>
    tpu.vector_store %arg4[%c1_125, %c0_126, %c0_127], %249 {strides = array<i32>} : memref<2x16x16xf32, #tpu.memory_space<vmem>>, vector<1x16x16xf32>,
    return
  }
}

</mosaic_0001>

<llo_original>
// kernel: forward.1
$region0: #{forward.1}
  #allocation0 [shape = 'u32[]', space=smem, size = 0x4, offset = 0x4, fixed_abs, tag = 'smem constant byte address 0x4 - core index']
  #allocation1 [shape = 'u32[144,128]{1,0:T(1,128)}', space=vmem, size = 0x12000, scoped, tag = 'internal scratch']
  #allocation2 [shape = 'f32[32,32]{1,0:T(8,128)}', space=vmem, size = 0x4000, scoped, tag = 'scratch operand']
  %s0 = inlined_call_operand.hbm [shape: f32[32,32], index: 0, kind: input, shape index: {}]
  %s1 = inlined_call_operand.hbm [shape: f32[2,16,16], index: 1, kind: input, shape index: {}]
  %s2 = inlined_call_operand.hbm [shape: f32[232,128], index: 2, kind: input, shape index: {}]
  %s3 = inlined_call_operand.hbm [shape: f32[2,1,16], index: 3, kind: output, shape index: {0}]
  %s4 = inlined_call_operand.hbm [shape: f32[2,16,16], index: 4, kind: output, shape index: {1}]
  %5 = xla_tuple %s3, %s4
  %s6 = sld [smem:[#allocation0]]
  $region42: #{forward.1} parent=0
    _
  %s8 = ssub.s32 1, %s6
  %s9 = scalar_select 0, %s8, %s6
  $region1: #{forward.1} parent=0
    #allocation3 [shape = 'u8[16384]{0}', space=vmem, size = 0x4000, scoped, tag = 'input window, operand 0, single buffered']
    #allocation4 [shape = 's32[1]{0}', space=sflag, size = 0x4, scoped, tag = 'scoped memory for forward.1']
    #allocation5 [shape = 's32[1]{0}', space=sflag, size = 0x4, scoped, tag = 'scoped memory for forward.1']
    #allocation6 [shape = 'u8[16384]{0}', space=vmem, size = 0x4000, scoped, tag = 'input window, operand 1, single buffered']
    #allocation7 [shape = 's32[1]{0}', space=sflag, size = 0x4, scoped, tag = 'scoped memory for forward.1']
    #allocation8 [shape = 'u8[118784]{0}', space=vmem, size = 0x1d000, scoped, tag = 'input window, operand 2, single buffered']
    #allocation9 [shape = 'u8[1024]{0}', space=vmem, size = 0x400, scoped, tag = 'output window, operand 0, single buffered']
    #allocation10 [shape = 'u8[16384]{0}', space=vmem, size = 0x4000, scoped, tag = 'output window, operand 1, single buffered']
    #allocation11 [shape = 's32[1]{0}', space=sflag, size = 0x4, scoped, tag = 'scoped memory for forward.1']
    %10 = vsyncpa [#allocation4], 0
    %11 = vsyncpa [#allocation7], 0
    %12 = vsyncpa [#allocation5], 0
    %13 = vsyncpa [#allocation11], 0
    // Predicated region
    $region2: #{forward.1} parent=1 // pred_check
      _
    $region3: #{forward.1} parent=1 // pred_check_branch
      %15 = sbr.rel (0) target = $region5
    $region4: #{forward.1} parent=1 // pred_region
      %s17 = ssub.s32 512, 512
      %18 = vsyncadd [#allocation4], %s17
      %s19 = sshll.u32 [#allocation3], 4
      %s20 = int_to_ptr.vmem [resolvable:$true] %s19
      %25 = dma.hbm_to_vmem [thread:$0]  %s0, 512, %s20, [#allocation4], 128, 128, 8
    $region5: #{forward.1} parent=1 // pred_fallthru
      _
    // Predicated region
    $region6: #{forward.1} parent=1 // pred_check
      _
    $region7: #{forward.1} parent=1 // pred_check_branch
      %27 = sbr.rel (0) target = $region9
    $region8: #{forward.1} parent=1 // pred_region
      %s29 = ssub.s32 512, 512
      %30 = vsyncadd [#allocation7], %s29
      %s31 = sshll.u32 [#allocation6], 4
      %s32 = int_to_ptr.vmem [resolvable:$true] %s31
      %37 = dma.hbm_to_vmem [thread:$0]  %s1, 512, %s32, [#allocation7], 128, 128, 8
    $region9: #{forward.1} parent=1 // pred_fallthru
      _
    // Predicated region
    $region10: #{forward.1} parent=1 // pred_check
      _
    $region11: #{forward.1} parent=1 // pred_check_branch
      %39 = sbr.rel (0) target = $region13
    $region12: #{forward.1} parent=1 // pred_region
      %s41 = ssub.s32 3712, 3712
      %42 = vsyncadd [#allocation7], %s41
      %s43 = sshll.u32 [#allocation8], 4
      %s44 = int_to_ptr.vmem [resolvable:$true] %s43
      %49 = dma.hbm_to_vmem [thread:$0]  %s2, 3712, %s44, [#allocation7], 128, 128, 8
    $region13: #{forward.1} parent=1 // pred_fallthru
      _
    // Predicated region
    $region14: #{forward.1} parent=1 // pred_check
      _
    $region15: #{forward.1} parent=1 // pred_check_branch
      %51 = sbr.rel (0) target = $region17
    $region16: #{forward.1} parent=1 // pred_region
      %52 = dma.done [#allocation4], 512
    $region17: #{forward.1} parent=1 // pred_fallthru
      _
    // Predicated region
    $region18: #{forward.1} parent=1 // pred_check
      _
    $region19: #{forward.1} parent=1 // pred_check_branch
      %54 = sbr.rel (0) target = $region21
    $region20: #{forward.1} parent=1 // pred_region
      %55 = dma.done [#allocation7], 512
    $region21: #{forward.1} parent=1 // pred_fallthru
      _
    // Predicated region
    $region22: #{forward.1} parent=1 // pred_check
      _
    $region23: #{forward.1} parent=1 // pred_check_branch
      %57 = sbr.rel (0) target = $region25
    $region24: #{forward.1} parent=1 // pred_region
      %58 = dma.done [#allocation7], 3712
    $region25: #{forward.1} parent=1 // pred_fallthru
      _
    %v59 = vld [vmem:[#allocation6] sm:$0xff]
    %v60 = vld [vmem:[#allocation6 + $0x8] sm:$0xff]
    %v61 = vsub.f32 1.0, %v59
    %v62 = vsub.f32 1.0, %v60
    %s63 = scalar_lea.vmem [#allocation6], 16
    %v64 = vld [vmem:[%s63] sm:$0xff]
    %v65 = vld [vmem:[%s63 + $0x8] sm:$0xff]
    %v66 = vsub.f32 1.0, %v64
    %v67 = vsub.f32 1.0, %v65
    %v68 = vld [vmem:[#allocation3] sm:$0xff]
    %v69 = vld [vmem:[#allocation3 + $0x8] sm:$0xff]
    %v70 = vld [vmem:[#allocation3 + $0x10] sm:$0xff]
    %v71 = vld [vmem:[#allocation3 + $0x18] sm:$0xff]
    %v72 = vld [vmem:[#allocation8] sm:$0xff]
    %v73 = vld [vmem:[#allocation8 + $0x8] sm:$0xff]
    %v74 = vld [vmem:[#allocation8 + $0x10] sm:$0xff]
    %v75 = vld [vmem:[#allocation8 + $0x18] sm:$0xff]
    %vm76 = vcmask 261120
    %v78 = vsel %vm76, %v68, 0
    %v81 = vsel %vm76, %v69, 0
    %v84 = vsel %vm76, %v70, 0
    %v87 = vsel %vm76, %v71, 0
    %89 = vmatprep.subr.mxu0 0.0
    %90 = vmatpush1.msra.mxu0 %v72
    %91 = vmatprep.subr.mxu0 0.0
    %92 = vmatpush1.msra.mxu0 %v73
    %93 = vmatprep.subr.mxu0 0.0
    %94 = vmatpush1.msra.mxu0 %v74
    %95 = vmatprep.subr.mxu0 0.0
    %96 = vmatpush1.msra.mxu0 %v75
    %97 = vmatprep.subr.mxu0 0.0
    %98 = vmatpush1.msra.mxu0 0.0
    %99 = vmatprep.subr.mxu0 0.0
    %100 = vmatpush1.msra.mxu0 0.0
    %101 = vmatprep.subr.mxu0 0.0
    %102 = vmatpush1.msra.mxu0 0.0
    %103 = vmatprep.subr.mxu0 0.0
    %104 = vmatpush1.msra.mxu0 0.0
    %105 = vmatprep.subr.mxu0 0.0
    %106 = vmatpush1.msra.mxu0 0.0
    %107 = vmatprep.subr.mxu0 0.0
    %108 = vmatpush1.msra.mxu0 0.0
    %109 = vmatprep.subr.mxu0 0.0
    %110 = vmatpush1.msra.mxu0 0.0
    %111 = vmatprep.subr.mxu0 0.0
    %112 = vmatpush1.msra.mxu0 0.0
    %113 = vmatprep.subr.mxu0 0.0
    %114 = vmatpush1.msra.mxu0 0.0
    %115 = vmatprep.subr.mxu0 0.0
    %116 = vmatpush1.msra.mxu0 0.0
    %117 = vmatprep.subr.mxu0 0.0
    %118 = vmatpush1.msra.mxu0 0.0
    %119 = vmatprep.subr.mxu0 0.0
    %120 = vmatpush1.msra.mxu0 0.0
    %121 = vmatprep.subr.mxu0 0.0
    %122 = vmatpush1.msra.mxu0 0.0
    %123 = vmatprep.subr.mxu0 0.0
    %124 = vmatpush1.msra.mxu0 0.0
    %125 = vmatprep.subr.mxu0 0.0
    %126 = vmatpush1.msra.mxu0 0.0
    %127 = vmatprep.subr.mxu0 0.0
    %128 = vmatpush1.msra.mxu0 0.0
    %129 = vmatprep.subr.mxu0 0.0
    %130 = vmatpush1.msra.mxu0 0.0
    %131 = vmatprep.subr.mxu0 0.0
    %132 = vmatpush1.msra.mxu0 0.0
    %133 = vmatprep.subr.mxu0 0.0
    %134 = vmatpush1.msra.mxu0 0.0
    %135 = vmatprep.subr.mxu0 0.0
    %136 = vmatpush1.msra.mxu0 0.0
    %137 = vmatprep.subr.mxu0 0.0
    %138 = vmatpush1.msra.mxu0 0.0
    %139 = vmatprep.subr.mxu0 0.0
    %140 = vmatpush1.msra.mxu0 0.0
    %141 = vmatprep.subr.mxu0 0.0
    %142 = vmatpush1.msra.mxu0 0.0
    %143 = vmatprep.subr.mxu0 0.0
    %144 = vmatpush1.msra.mxu0 0.0
    %145 = vmatprep.subr.mxu0 0.0
    %146 = vmatpush1.msra.mxu0 0.0
    %147 = vmatprep.subr.mxu0 0.0
    %148 = vmatpush1.msra.mxu0 0.0
    %149 = vmatprep.subr.mxu0 0.0
    %150 = vmatpush1.msra.mxu0 0.0
    %151 = vmatprep.subr.mxu0 0.0
    %152 = vmatpush1.msra.mxu0 0.0
    %153 = vmatprep.mubr.f32.mxu0 0.0
    %154 = vmatmul.mubr.f32.gmra.mrb[0].mxu0 %v78
    %v155 = vpop.f32.mrb[0].mxu0
    %v156 = vadd.f32 0.0, %v155
    %v157 = vpop.f32.mrb[0].mxu0
    %158 = vmatprep.mubr.f32.mxu0 0.0
    %159 = vmatmul.mubr.f32.gmra.mrb[0].mxu0 %v81
    %v160 = vpop.f32.mrb[0].mxu0
    %v161 = vadd.f32 0.0, %v160
    %v162 = vpop.f32.mrb[0].mxu0
    %163 = vmatprep.mubr.f32.mxu0 0.0
    %164 = vmatmul.mubr.f32.gmra.mrb[0].mxu0 %v84
    %v165 = vpop.f32.mrb[0].mxu0
    %v166 = vadd.f32 0.0, %v165
    %v167 = vpop.f32.mrb[0].mxu0
    %168 = vmatprep.mubr.f32.mxu0 0.0
    %169 = vmatmul.mubr.f32.gmra.mrb[0].mxu0 %v87
    %v170 = vpop.f32.mrb[0].mxu0
    %v171 = vadd.f32 0.0, %v170
    %v172 = vpop.f32.mrb[0].mxu0
    %173 = vdwg.mxu0
    %v174 = vld [vmem:[#allocation8 + $0x50] sm:$0xff]
    %v175 = vld [vmem:[#allocation8 + $0x58] sm:$0xff]
    %v176 = vld [vmem:[#allocation8 + $0x60] sm:$0xff]
    %v177 = vld [vmem:[#allocation8 + $0x68] sm:$0xff]
    %v178 = vld [vmem:[#allocation8 + $0x88] sm:$0x1]
    %v179 = vld [vmem:[#allocation8 + $0xa0] sm:$0xff]
    %v180 = vld [vmem:[#allocation8 + $0xa8] sm:$0xff]
    %v182 = vsel %vm76, %v156, 0
    %v185 = vsel %vm76, %v161, 0
    %v188 = vsel %vm76, %v166, 0
    %v191 = vsel %vm76, %v171, 0
    %193 = vmatprep.subr.mxu0 0.0
    %194 = vmatpush1.msra.mxu0 %v174
    %195 = vmatprep.subr.mxu0 0.0
    %196 = vmatpush1.msra.mxu0 %v175
    %197 = vmatprep.subr.mxu0 0.0
    %198 = vmatpush1.msra.mxu0 %v176
    %199 = vmatprep.subr.mxu0 0.0
    %200 = vmatpush1.msra.mxu0 %v177
    %201 = vmatprep.subr.mxu0 0.0
    %202 = vmatpush1.msra.mxu0 0.0
    %203 = vmatprep.subr.mxu0 0.0
    %204 = vmatpush1.msra.mxu0 0.0
    %205 = vmatprep.subr.mxu0 0.0
    %206 = vmatpush1.msra.mxu0 0.0
    %207 = vmatprep.subr.mxu0 0.0
    %208 = vmatpush1.msra.mxu0 0.0
    %209 = vmatprep.subr.mxu0 0.0
    %210 = vmatpush1.msra.mxu0 0.0
    %211 = vmatprep.subr.mxu0 0.0
    %212 = vmatpush1.msra.mxu0 0.0
    %213 = vmatprep.subr.mxu0 0.0
    %214 = vmatpush1.msra.mxu0 0.0
    %215 = vmatprep.subr.mxu0 0.0
    %216 = vmatpush1.msra.mxu0 0.0
    %217 = vmatprep.subr.mxu0 0.0
    %218 = vmatpush1.msra.mxu0 0.0
    %219 = vmatprep.subr.mxu0 0.0
    %220 = vmatpush1.msra.mxu0 0.0
    %221 = vmatprep.subr.mxu0 0.0
    %222 = vmatpush1.msra.mxu0 0.0
    %223 = vmatprep.subr.mxu0 0.0
    %224 = vmatpush1.msra.mxu0 0.0
    %225 = vmatprep.subr.mxu0 0.0
    %226 = vmatpush1.msra.mxu0 0.0
    %227 = vmatprep.subr.mxu0 0.0
    %228 = vmatpush1.msra.mxu0 0.0
    %229 = vmatprep.subr.mxu0 0.0
    %230 = vmatpush1.msra.mxu0 0.0
    %231 = vmatprep.subr.mxu0 0.0
    %232 = vmatpush1.msra.mxu0 0.0
    %233 = vmatprep.subr.mxu0 0.0
    %234 = vmatpush1.msra.mxu0 0.0
    %235 = vmatprep.subr.mxu0 0.0
    %236 = vmatpush1.msra.mxu0 0.0
    %237 = vmatprep.subr.mxu0 0.0
    %238 = vmatpush1.msra.mxu0 0.0
    %239 = vmatprep.subr.mxu0 0.0
    %240 = vmatpush1.msra.mxu0 0.0
    %241 = vmatprep.subr.mxu0 0.0
    %242 = vmatpush1.msra.mxu0 0.0
    %243 = vmatprep.subr.mxu0 0.0
    %244 = vmatpush1.msra.mxu0 0.0
    %245 = vmatprep.subr.mxu0 0.0
    %246 = vmatpush1.msra.mxu0 0.0
    %247 = vmatprep.subr.mxu0 0.0
    %248 = vmatpush1.msra.mxu0 0.0
    %249 = vmatprep.subr.mxu0 0.0
    %250 = vmatpush1.msra.mxu0 0.0
    %251 = vmatprep.subr.mxu0 0.0
    %252 = vmatpush1.msra.mxu0 0.0
    %253 = vmatprep.subr.mxu0 0.0
    %254 = vmatpush1.msra.mxu0 0.0
    %255 = vmatprep.subr.mxu0 0.0
    %256 = vmatpush1.msra.mxu0 0.0
    %257 = vmatprep.mubr.f32.mxu0 0.0
    %258 = vmatmul.mubr.f32.gmra.mrb[0].mxu0 %v182
    %v259 = vpop.f32.mrb[0].mxu0
    %v260 = vadd.f32 0.0, %v259
    %v261 = vpop.f32.mrb[0].mxu0
    %262 = vmatprep.mubr.f32.mxu0 0.0
    %263 = vmatmul.mubr.f32.gmra.mrb[0].mxu0 %v185
    %v264 = vpop.f32.mrb[0].mxu0
    %v265 = vadd.f32 0.0, %v264
    %v266 = vpop.f32.mrb[0].mxu0
    %267 = vmatprep.mubr.f32.mxu0 0.0
    %268 = vmatmul.mubr.f32.gmra.mrb[0].mxu0 %v188
    %v269 = vpop.f32.mrb[0].mxu0
    %v270 = vadd.f32 0.0, %v269
    %v271 = vpop.f32.mrb[0].mxu0
    %272 = vmatprep.mubr.f32.mxu0 0.0
    %273 = vmatmul.mubr.f32.gmra.mrb[0].mxu0 %v191
    %v274 = vpop.f32.mrb[0].mxu0
    %v275 = vadd.f32 0.0, %v274
    %v276 = vpop.f32.mrb[0].mxu0
    %277 = vdwg.mxu0
    %v279 = vsel %vm76, %v178, 0
    %281 = vmatprep.subr.mxu0 0.0
    %282 = vmatpush1.xpose.msra.mxu0 %v182
    %283 = vmatprep.subr.mxu0 0.0
    %284 = vmatpush1.xpose.msra.mxu0 %v185
    %285 = vmatprep.subr.mxu0 0.0
    %286 = vmatpush1.xpose.msra.mxu0 0.0
    %287 = vmatprep.subr.mxu0 0.0
    %288 = vmatpush1.xpose.msra.mxu0 0.0
    %289 = vmatprep.subr.mxu0 0.0
    %290 = vmatpush1.xpose.msra.mxu0 0.0
    %291 = vmatprep.subr.mxu0 0.0
    %292 = vmatpush1.xpose.msra.mxu0 0.0
    %293 = vmatprep.subr.mxu0 0.0
    %294 = vmatpush1.xpose.msra.mxu0 0.0
    %295 = vmatprep.subr.mxu0 0.0
    %296 = vmatpush1.xpose.msra.mxu0 0.0
    %297 = vmatprep.subr.mxu0 0.0
    %298 = vmatpush1.xpose.msra.mxu0 0.0
    %299 = vmatprep.subr.mxu0 0.0
    %300 = vmatpush1.xpose.msra.mxu0 0.0
    %301 = vmatprep.subr.mxu0 0.0
    %302 = vmatpush1.xpose.msra.mxu0 0.0
    %303 = vmatprep.subr.mxu0 0.0
    %304 = vmatpush1.xpose.msra.mxu0 0.0
    %305 = vmatprep.subr.mxu0 0.0
    %306 = vmatpush1.xpose.msra.mxu0 0.0
    %307 = vmatprep.subr.mxu0 0.0
    %308 = vmatpush1.xpose.msra.mxu0 0.0
    %309 = vmatprep.subr.mxu0 0.0
    %310 = vmatpush1.xpose.msra.mxu0 0.0
    %311 = vmatprep.subr.mxu0 0.0
    %312 = vmatpush1.xpose.msra.mxu0 0.0
    %313 = vmatprep.subr.mxu0 0.0
    %314 = vmatpush1.xpose.msra.mxu0 0.0
    %315 = vmatprep.subr.mxu0 0.0
    %316 = vmatpush1.xpose.msra.mxu0 0.0
    %317 = vmatprep.subr.mxu0 0.0
    %318 = vmatpush1.xpose.msra.mxu0 0.0
    %319 = vmatprep.subr.mxu0 0.0
    %320 = vmatpush1.xpose.msra.mxu0 0.0
    %321 = vmatprep.subr.mxu0 0.0
    %322 = vmatpush1.xpose.msra.mxu0 0.0
    %323 = vmatprep.subr.mxu0 0.0
    %324 = vmatpush1.xpose.msra.mxu0 0.0
    %325 = vmatprep.subr.mxu0 0.0
    %326 = vmatpush1.xpose.msra.mxu0 0.0
    %327 = vmatprep.subr.mxu0 0.0
    %328 = vmatpush1.xpose.msra.mxu0 0.0
    %329 = vmatprep.subr.mxu0 0.0
    %330 = vmatpush1.xpose.msra.mxu0 0.0
    %331 = vmatprep.subr.mxu0 0.0
    %332 = vmatpush1.xpose.msra.mxu0 0.0
    %333 = vmatprep.subr.mxu0 0.0
    %334 = vmatpush1.xpose.msra.mxu0 0.0
    %335 = vmatprep.subr.mxu0 0.0
    %336 = vmatpush1.xpose.msra.mxu0 0.0
    %337 = vmatprep.subr.mxu0 0.0
    %338 = vmatpush1.xpose.msra.mxu0 0.0
    %339 = vmatprep.subr.mxu0 0.0
    %340 = vmatpush1.xpose.msra.mxu0 0.0
    %341 = vmatprep.subr.mxu0 0.0
    %342 = vmatpush1.xpose.msra.mxu0 0.0
    %343 = vmatprep.subr.mxu0 0.0
    %344 = vmatpush1.xpose.msra.mxu0 0.0
    %345 = vmatprep.mubr.f32.mxu0 0.0
    %346 = vmatmul.mubr.f32.gmra.mrb[0].mxu0 %v279
    %v347 = vpop.f32.mrb[0].mxu0
    %v348 = vadd.f32 0.0, %v347
    %v349 = vpop.f32.mrb[0].mxu0
    %350 = vdwg.mxu0
    %352 = vset.pattern.permute.xlu0 0
    %353 = vperm.xlu0 %352, %v260
    %v354 = vpop.permute.xlu0 %353
    %357 = vset.pattern.permute.xlu0 0
    %358 = vperm.xlu0 %357, %v265
    %v359 = vpop.permute.xlu0 %358
    %v361 = vlaneseq
    %v362 = vshrl.u32 %v361, 7
    %v363 = vsub.s32 0, %v362
    %v364 = vrot.slane %v348, %v363
    %v365 = vadd.f32 %v354, %v364
    %v366 = vadd.f32 %v359, %v364
    %vm367 = vcmp.gt.f32.partialorder %v365, 0.0
    %vm368 = vcmp.gt.f32.partialorder %v366, 0.0
    %v369 = vmul.f32 %v365, 0.01
    %v370 = vmul.f32 %v366, 0.01
    %v371 = vsel %vm367, %v365, %v369
    %v372 = vsel %vm368, %v366, %v370
    %vm373 = vcmp.gt.f32.partialorder %v61, 1e-05
    %vm374 = vcmp.gt.f32.partialorder %v62, 1e-05
    %v375 = vsel %vm373, %v371, -1e+13
    %v376 = vsel %vm374, %v372, -1e+13
    %vm377 = vcmask 130048
    %v379 = vsel %vm377, %v375, 0
    %v382 = vsel %vm377, %v376, 0
    %384 = vmatprep.subr.mxu0 0.0
    %385 = vmatpush1.msra.mxu0 %v179
    %386 = vmatprep.subr.mxu0 0.0
    %387 = vmatpush1.msra.mxu0 %v180
    %388 = vmatprep.subr.mxu0 0.0
    %389 = vmatpush1.msra.mxu0 0.0
    %390 = vmatprep.subr.mxu0 0.0
    %391 = vmatpush1.msra.mxu0 0.0
    %392 = vmatprep.subr.mxu0 0.0
    %393 = vmatpush1.msra.mxu0 0.0
    %394 = vmatprep.subr.mxu0 0.0
    %395 = vmatpush1.msra.mxu0 0.0
    %396 = vmatprep.subr.mxu0 0.0
    %397 = vmatpush1.msra.mxu0 0.0
    %398 = vmatprep.subr.mxu0 0.0
    %399 = vmatpush1.msra.mxu0 0.0
    %400 = vmatprep.subr.mxu0 0.0
    %401 = vmatpush1.msra.mxu0 0.0
    %402 = vmatprep.subr.mxu0 0.0
    %403 = vmatpush1.msra.mxu0 0.0
    %404 = vmatprep.subr.mxu0 0.0
    %405 = vmatpush1.msra.mxu0 0.0
    %406 = vmatprep.subr.mxu0 0.0
    %407 = vmatpush1.msra.mxu0 0.0
    %408 = vmatprep.subr.mxu0 0.0
    %409 = vmatpush1.msra.mxu0 0.0
    %410 = vmatprep.subr.mxu0 0.0
    %411 = vmatpush1.msra.mxu0 0.0
    %412 = vmatprep.subr.mxu0 0.0
    %413 = vmatpush1.msra.mxu0 0.0
    %414 = vmatprep.subr.mxu0 0.0
    %415 = vmatpush1.msra.mxu0 0.0
    %416 = vmatprep.subr.mxu0 0.0
    %417 = vmatpush1.msra.mxu0 0.0
    %418 = vmatprep.subr.mxu0 0.0
    %419 = vmatpush1.msra.mxu0 0.0
    %420 = vmatprep.subr.mxu0 0.0
    %421 = vmatpush1.msra.mxu0 0.0
    %422 = vmatprep.subr.mxu0 0.0
    %423 = vmatpush1.msra.mxu0 0.0
    %424 = vmatprep.subr.mxu0 0.0
    %425 = vmatpush1.msra.mxu0 0.0
    %426 = vmatprep.subr.mxu0 0.0
    %427 = vmatpush1.msra.mxu0 0.0
    %428 = vmatprep.subr.mxu0 0.0
    %429 = vmatpush1.msra.mxu0 0.0
    %430 = vmatprep.subr.mxu0 0.0
    %431 = vmatpush1.msra.mxu0 0.0
    %432 = vmatprep.subr.mxu0 0.0
    %433 = vmatpush1.msra.mxu0 0.0
    %434 = vmatprep.subr.mxu0 0.0
    %435 = vmatpush1.msra.mxu0 0.0
    %436 = vmatprep.subr.mxu0 0.0
    %437 = vmatpush1.msra.mxu0 0.0
    %438 = vmatprep.subr.mxu0 0.0
    %439 = vmatpush1.msra.mxu0 0.0
    %440 = vmatprep.subr.mxu0 0.0
    %441 = vmatpush1.msra.mxu0 0.0
    %442 = vmatprep.subr.mxu0 0.0
    %443 = vmatpush1.msra.mxu0 0.0
    %444 = vmatprep.subr.mxu0 0.0
    %445 = vmatpush1.msra.mxu0 0.0
    %446 = vmatprep.subr.mxu0 0.0
    %447 = vmatpush1.msra.mxu0 0.0
    %448 = vmatprep.mubr.f32.mxu0 0.0
    %449 = vmatmul.mubr.f32.gmra.mrb[0].mxu0 %v379
    %v450 = vpop.f32.mrb[0].mxu0
    %v451 = vadd.f32 0.0, %v450
    %v452 = vpop.f32.mrb[0].mxu0
    %453 = vmatprep.mubr.f32.mxu0 0.0
    %454 = vmatmul.mubr.f32.gmra.mrb[0].mxu0 %v382
    %v455 = vpop.f32.mrb[0].mxu0
    %v456 = vadd.f32 0.0, %v455
    %v457 = vpop.f32.mrb[0].mxu0
    %458 = vdwg.mxu0
    %v459 = vsel %vm377, %v451, -inf
    %460 = vmax.xlane.f32.xlu0 %v459
    %v461 = vpop.xlane.xlu0 %460
    %v462 = vsel %vm377, %v456, -inf
    %463 = vmax.xlane.f32.xlu0 %v462
    %v464 = vpop.xlane.xlu0 %463
    %v465 = vsub.f32 %v451, %v461
    %v466 = vsub.f32 %v456, %v464
    %v467 = vmul.f32 %v465, 1.442695
    %v468 = vpow.pop %v467
    %v469 = vmul.f32 %v466, 1.442695
    %v470 = vpow.pop %v469
    %v471 = vsel %vm377, %v468, 0.0
    %472 = vadd.xlane.f32.xlu0 %v471
    %v473 = vpop.xlane.xlu0 %472
    %v474 = vsel %vm377, %v470, 0.0
    %475 = vadd.xlane.f32.xlu0 %v474
    %v476 = vpop.xlane.xlu0 %475
    %v477 = vrcp.pop %v473
    %v478 = vmul.f32 %v468, %v477
    %v479 = vrcp.pop %v476
    %v480 = vmul.f32 %v470, %v479
    %481 = vxpose.xlu0.b32.start [1/16] %v478, 128
    %482 = vxpose.xlu0.b32.cont [2/16] %v480, 128
    %483 = vxpose.xlu0.b32.cont [3/16] 0.0, 128
    %484 = vxpose.xlu0.b32.cont [4/16] 0.0, 128
    %485 = vxpose.xlu0.b32.cont [5/16] 0.0, 128
    %486 = vxpose.xlu0.b32.cont [6/16] 0.0, 128
    %487 = vxpose.xlu0.b32.cont [7/16] 0.0, 128
    %488 = vxpose.xlu0.b32.cont [8/16] 0.0, 128
    %489 = vxpose.xlu0.b32.cont [9/16] 0.0, 128
    %490 = vxpose.xlu0.b32.cont [10/16] 0.0, 128
    %491 = vxpose.xlu0.b32.cont [11/16] 0.0, 128
    %492 = vxpose.xlu0.b32.cont [12/16] 0.0, 128
    %493 = vxpose.xlu0.b32.cont [13/16] 0.0, 128
    %494 = vxpose.xlu0.b32.cont [14/16] 0.0, 128
    %495 = vxpose.xlu0.b32.cont [15/16] 0.0, 128
    %496 = vxpose.xlu0.b32.end [16/16] 0.0, 128
    %v497 = vpop.trf.xlu0
    %v498 = vpop.trf.xlu0
    %v499 = vpop.trf.xlu0
    %v500 = vpop.trf.xlu0
    %v501 = vpop.trf.xlu0
    %v502 = vpop.trf.xlu0
    %v503 = vpop.trf.xlu0
    %v504 = vpop.trf.xlu0
    %v505 = vpop.trf.xlu0
    %v506 = vpop.trf.xlu0
    %v507 = vpop.trf.xlu0
    %v508 = vpop.trf.xlu0
    %v509 = vpop.trf.xlu0
    %v510 = vpop.trf.xlu0
    %v511 = vpop.trf.xlu0
    %v512 = vpop.trf.xlu0
    %v513 = vadd.f32 %v478, %v497
    %v514 = vadd.f32 %v480, %v498
    %v515 = vmul.f32 %v513, 0.5
    %v516 = vmul.f32 %v514, 0.5
    %v518 = vsel %vm377, %v515, 0
    %v521 = vsel %vm377, %v516, 0
    %523 = vmatprep.subr.mxu0 0.0
    %524 = vmatpush1.msra.mxu0 %v156
    %525 = vmatprep.subr.mxu0 0.0
    %526 = vmatpush1.msra.mxu0 %v161
    %527 = vmatprep.subr.mxu0 0.0
    %528 = vmatpush1.msra.mxu0 0.0
    %529 = vmatprep.subr.mxu0 0.0
    %530 = vmatpush1.msra.mxu0 0.0
    %531 = vmatprep.subr.mxu0 0.0
    %532 = vmatpush1.msra.mxu0 0.0
    %533 = vmatprep.subr.mxu0 0.0
    %534 = vmatpush1.msra.mxu0 0.0
    %535 = vmatprep.subr.mxu0 0.0
    %536 = vmatpush1.msra.mxu0 0.0
    %537 = vmatprep.subr.mxu0 0.0
    %538 = vmatpush1.msra.mxu0 0.0
    %539 = vmatprep.subr.mxu0 0.0
    %540 = vmatpush1.msra.mxu0 0.0
    %541 = vmatprep.subr.mxu0 0.0
    %542 = vmatpush1.msra.mxu0 0.0
    %543 = vmatprep.subr.mxu0 0.0
    %544 = vmatpush1.msra.mxu0 0.0
    %545 = vmatprep.subr.mxu0 0.0
    %546 = vmatpush1.msra.mxu0 0.0
    %547 = vmatprep.subr.mxu0 0.0
    %548 = vmatpush1.msra.mxu0 0.0
    %549 = vmatprep.subr.mxu0 0.0
    %550 = vmatpush1.msra.mxu0 0.0
    %551 = vmatprep.subr.mxu0 0.0
    %552 = vmatpush1.msra.mxu0 0.0
    %553 = vmatprep.subr.mxu0 0.0
    %554 = vmatpush1.msra.mxu0 0.0
    %555 = vmatprep.subr.mxu0 0.0
    %556 = vmatpush1.msra.mxu0 0.0
    %557 = vmatprep.subr.mxu0 0.0
    %558 = vmatpush1.msra.mxu0 0.0
    %559 = vmatprep.subr.mxu0 0.0
    %560 = vmatpush1.msra.mxu0 0.0
    %561 = vmatprep.subr.mxu0 0.0
    %562 = vmatpush1.msra.mxu0 0.0
    %563 = vmatprep.subr.mxu0 0.0
    %564 = vmatpush1.msra.mxu0 0.0
    %565 = vmatprep.subr.mxu0 0.0
    %566 = vmatpush1.msra.mxu0 0.0
    %567 = vmatprep.subr.mxu0 0.0
    %568 = vmatpush1.msra.mxu0 0.0
    %569 = vmatprep.subr.mxu0 0.0
    %570 = vmatpush1.msra.mxu0 0.0
    %571 = vmatprep.subr.mxu0 0.0
    %572 = vmatpush1.msra.mxu0 0.0
    %573 = vmatprep.subr.mxu0 0.0
    %574 = vmatpush1.msra.mxu0 0.0
    %575 = vmatprep.subr.mxu0 0.0
    %576 = vmatpush1.msra.mxu0 0.0
    %577 = vmatprep.subr.mxu0 0.0
    %578 = vmatpush1.msra.mxu0 0.0
    %579 = vmatprep.subr.mxu0 0.0
    %580 = vmatpush1.msra.mxu0 0.0
    %581 = vmatprep.subr.mxu0 0.0
    %582 = vmatpush1.msra.mxu0 0.0
    %583 = vmatprep.subr.mxu0 0.0
    %584 = vmatpush1.msra.mxu0 0.0
    %585 = vmatprep.subr.mxu0 0.0
    %586 = vmatpush1.msra.mxu0 0.0
    %587 = vmatprep.mubr.f32.mxu0 0.0
    %588 = vmatmul.mubr.f32.gmra.mrb[0].mxu0 %v518
    %v589 = vpop.f32.mrb[0].mxu0
    %v590 = vadd.f32 0.0, %v589
    %v591 = vpop.f32.mrb[0].mxu0
    %592 = vmatprep.mubr.f32.mxu0 0.0
    %593 = vmatmul.mubr.f32.gmra.mrb[0].mxu0 %v521
    %v594 = vpop.f32.mrb[0].mxu0
    %v595 = vadd.f32 0.0, %v594
    %v596 = vpop.f32.mrb[0].mxu0
    %597 = vdwg.mxu0
    %598 = vst.msk [vmem:[#allocation2] sm:$0xff] %vm76, %v590
    %599 = vst.msk [vmem:[#allocation2 + $0x8] sm:$0xff] %vm76, %v595
    %600 = vmatprep.subr.mxu0 0.0
    %601 = vmatpush1.xpose.msra.mxu0 %v188
    %602 = vmatprep.subr.mxu0 0.0
    %603 = vmatpush1.xpose.msra.mxu0 %v191
    %604 = vmatprep.subr.mxu0 0.0
    %605 = vmatpush1.xpose.msra.mxu0 0.0
    %606 = vmatprep.subr.mxu0 0.0
    %607 = vmatpush1.xpose.msra.mxu0 0.0
    %608 = vmatprep.subr.mxu0 0.0
    %609 = vmatpush1.xpose.msra.mxu0 0.0
    %610 = vmatprep.subr.mxu0 0.0
    %611 = vmatpush1.xpose.msra.mxu0 0.0
    %612 = vmatprep.subr.mxu0 0.0
    %613 = vmatpush1.xpose.msra.mxu0 0.0
    %614 = vmatprep.subr.mxu0 0.0
    %615 = vmatpush1.xpose.msra.mxu0 0.0
    %616 = vmatprep.subr.mxu0 0.0
    %617 = vmatpush1.xpose.msra.mxu0 0.0
    %618 = vmatprep.subr.mxu0 0.0
    %619 = vmatpush1.xpose.msra.mxu0 0.0
    %620 = vmatprep.subr.mxu0 0.0
    %621 = vmatpush1.xpose.msra.mxu0 0.0
    %622 = vmatprep.subr.mxu0 0.0
    %623 = vmatpush1.xpose.msra.mxu0 0.0
    %624 = vmatprep.subr.mxu0 0.0
    %625 = vmatpush1.xpose.msra.mxu0 0.0
    %626 = vmatprep.subr.mxu0 0.0
    %627 = vmatpush1.xpose.msra.mxu0 0.0
    %628 = vmatprep.subr.mxu0 0.0
    %629 = vmatpush1.xpose.msra.mxu0 0.0
    %630 = vmatprep.subr.mxu0 0.0
    %631 = vmatpush1.xpose.msra.mxu0 0.0
    %632 = vmatprep.subr.mxu0 0.0
    %633 = vmatpush1.xpose.msra.mxu0 0.0
    %634 = vmatprep.subr.mxu0 0.0
    %635 = vmatpush1.xpose.msra.mxu0 0.0
    %636 = vmatprep.subr.mxu0 0.0
    %637 = vmatpush1.xpose.msra.mxu0 0.0
    %638 = vmatprep.subr.mxu0 0.0
    %639 = vmatpush1.xpose.msra.mxu0 0.0
    %640 = vmatprep.subr.mxu0 0.0
    %641 = vmatpush1.xpose.msra.mxu0 0.0
    %642 = vmatprep.subr.mxu0 0.0
    %643 = vmatpush1.xpose.msra.mxu0 0.0
    %644 = vmatprep.subr.mxu0 0.0
    %645 = vmatpush1.xpose.msra.mxu0 0.0
    %646 = vmatprep.subr.mxu0 0.0
    %647 = vmatpush1.xpose.msra.mxu0 0.0
    %648 = vmatprep.subr.mxu0 0.0
    %649 = vmatpush1.xpose.msra.mxu0 0.0
    %650 = vmatprep.subr.mxu0 0.0
    %651 = vmatpush1.xpose.msra.mxu0 0.0
    %652 = vmatprep.subr.mxu0 0.0
    %653 = vmatpush1.xpose.msra.mxu0 0.0
    %654 = vmatprep.subr.mxu0 0.0
    %655 = vmatpush1.xpose.msra.mxu0 0.0
    %656 = vmatprep.subr.mxu0 0.0
    %657 = vmatpush1.xpose.msra.mxu0 0.0
    %658 = vmatprep.subr.mxu0 0.0
    %659 = vmatpush1.xpose.msra.mxu0 0.0
    %660 = vmatprep.subr.mxu0 0.0
    %661 = vmatpush1.xpose.msra.mxu0 0.0
    %662 = vmatprep.subr.mxu0 0.0
    %663 = vmatpush1.xpose.msra.mxu0 0.0
    %664 = vmatprep.mubr.f32.mxu0 0.0
    %665 = vmatmul.mubr.f32.gmra.mrb[0].mxu0 %v279
    %v666 = vpop.f32.mrb[0].mxu0
    %v667 = vadd.f32 0.0, %v666
    %v668 = vpop.f32.mrb[0].mxu0
    %669 = vdwg.mxu0
    %671 = vset.pattern.permute.xlu0 0
    %672 = vperm.xlu0 %671, %v270
    %v673 = vpop.permute.xlu0 %672
    %676 = vset.pattern.permute.xlu0 0
    %677 = vperm.xlu0 %676, %v275
    %v678 = vpop.permute.xlu0 %677
    %v680 = vlaneseq
    %v681 = vshrl.u32 %v680, 7
    %v682 = vsub.s32 0, %v681
    %v683 = vrot.slane %v667, %v682
    %v684 = vadd.f32 %v673, %v683
    %v685 = vadd.f32 %v678, %v683
    %vm686 = vcmp.gt.f32.partialorder %v684, 0.0
    %vm687 = vcmp.gt.f32.partialorder %v685, 0.0
    %v688 = vmul.f32 %v684, 0.01
    %v689 = vmul.f32 %v685, 0.01
    %v690 = vsel %vm686, %v684, %v688
    %v691 = vsel %vm687, %v685, %v689
    %vm692 = vcmp.gt.f32.partialorder %v66, 1e-05
    %vm693 = vcmp.gt.f32.partialorder %v67, 1e-05
    %v694 = vsel %vm692, %v690, -1e+13
    %v695 = vsel %vm693, %v691, -1e+13
    %v697 = vsel %vm377, %v694, 0
    %v700 = vsel %vm377, %v695, 0
    %702 = vmatprep.subr.mxu0 0.0
    %703 = vmatpush1.msra.mxu0 %v179
    %704 = vmatprep.subr.mxu0 0.0
    %705 = vmatpush1.msra.mxu0 %v180
    %706 = vmatprep.subr.mxu0 0.0
    %707 = vmatpush1.msra.mxu0 0.0
    %708 = vmatprep.subr.mxu0 0.0
    %709 = vmatpush1.msra.mxu0 0.0
    %710 = vmatprep.subr.mxu0 0.0
    %711 = vmatpush1.msra.mxu0 0.0
    %712 = vmatprep.subr.mxu0 0.0
    %713 = vmatpush1.msra.mxu0 0.0
    %714 = vmatprep.subr.mxu0 0.0
    %715 = vmatpush1.msra.mxu0 0.0
    %716 = vmatprep.subr.mxu0 0.0
    %717 = vmatpush1.msra.mxu0 0.0
    %718 = vmatprep.subr.mxu0 0.0
    %719 = vmatpush1.msra.mxu0 0.0
    %720 = vmatprep.subr.mxu0 0.0
    %721 = vmatpush1.msra.mxu0 0.0
    %722 = vmatprep.subr.mxu0 0.0
    %723 = vmatpush1.msra.mxu0 0.0
    %724 = vmatprep.subr.mxu0 0.0
    %725 = vmatpush1.msra.mxu0 0.0
    %726 = vmatprep.subr.mxu0 0.0
    %727 = vmatpush1.msra.mxu0 0.0
    %728 = vmatprep.subr.mxu0 0.0
    %729 = vmatpush1.msra.mxu0 0.0
    %730 = vmatprep.subr.mxu0 0.0
    %731 = vmatpush1.msra.mxu0 0.0
    %732 = vmatprep.subr.mxu0 0.0
    %733 = vmatpush1.msra.mxu0 0.0
    %734 = vmatprep.subr.mxu0 0.0
    %735 = vmatpush1.msra.mxu0 0.0
    %736 = vmatprep.subr.mxu0 0.0
    %737 = vmatpush1.msra.mxu0 0.0
    %738 = vmatprep.subr.mxu0 0.0
    %739 = vmatpush1.msra.mxu0 0.0
    %740 = vmatprep.subr.mxu0 0.0
    %741 = vmatpush1.msra.mxu0 0.0
    %742 = vmatprep.subr.mxu0 0.0
    %743 = vmatpush1.msra.mxu0 0.0
    %744 = vmatprep.subr.mxu0 0.0
    %745 = vmatpush1.msra.mxu0 0.0
    %746 = vmatprep.subr.mxu0 0.0
    %747 = vmatpush1.msra.mxu0 0.0
    %748 = vmatprep.subr.mxu0 0.0
    %749 = vmatpush1.msra.mxu0 0.0
    %750 = vmatprep.subr.mxu0 0.0
    %751 = vmatpush1.msra.mxu0 0.0
    %752 = vmatprep.subr.mxu0 0.0
    %753 = vmatpush1.msra.mxu0 0.0
    %754 = vmatprep.subr.mxu0 0.0
    %755 = vmatpush1.msra.mxu0 0.0
    %756 = vmatprep.subr.mxu0 0.0
    %757 = vmatpush1.msra.mxu0 0.0
    %758 = vmatprep.subr.mxu0 0.0
    %759 = vmatpush1.msra.mxu0 0.0
    %760 = vmatprep.subr.mxu0 0.0
    %761 = vmatpush1.msra.mxu0 0.0
    %762 = vmatprep.subr.mxu0 0.0
    %763 = vmatpush1.msra.mxu0 0.0
    %764 = vmatprep.subr.mxu0 0.0
    %765 = vmatpush1.msra.mxu0 0.0
    %766 = vmatprep.mubr.f32.mxu0 0.0
    %767 = vmatmul.mubr.f32.gmra.mrb[0].mxu0 %v697
    %v768 = vpop.f32.mrb[0].mxu0
    %v769 = vadd.f32 0.0, %v768
    %v770 = vpop.f32.mrb[0].mxu0
    %771 = vmatprep.mubr.f32.mxu0 0.0
    %772 = vmatmul.mubr.f32.gmra.mrb[0].mxu0 %v700
    %v773 = vpop.f32.mrb[0].mxu0
    %v774 = vadd.f32 0.0, %v773
    %v775 = vpop.f32.mrb[0].mxu0
    %776 = vdwg.mxu0
    %v777 = vsel %vm377, %v769, -inf
    %778 = vmax.xlane.f32.xlu0 %v777
    %v779 = vpop.xlane.xlu0 %778
    %v780 = vsel %vm377, %v774, -inf
    %781 = vmax.xlane.f32.xlu0 %v780
    %v782 = vpop.xlane.xlu0 %781
    %v783 = vsub.f32 %v769, %v779
    %v784 = vsub.f32 %v774, %v782
    %v785 = vmul.f32 %v783, 1.442695
    %v786 = vpow.pop %v785
    %v787 = vmul.f32 %v784, 1.442695
    %v788 = vpow.pop %v787
    %v789 = vsel %vm377, %v786, 0.0
    %790 = vadd.xlane.f32.xlu0 %v789
    %v791 = vpop.xlane.xlu0 %790
    %v792 = vsel %vm377, %v788, 0.0
    %793 = vadd.xlane.f32.xlu0 %v792
    %v794 = vpop.xlane.xlu0 %793
    %v795 = vrcp.pop %v791
    %v796 = vmul.f32 %v786, %v795
    %v797 = vrcp.pop %v794
    %v798 = vmul.f32 %v788, %v797
    %799 = vxpose.xlu0.b32.start [1/16] %v796, 128
    %800 = vxpose.xlu0.b32.cont [2/16] %v798, 128
    %801 = vxpose.xlu0.b32.cont [3/16] 0.0, 128
    %802 = vxpose.xlu0.b32.cont [4/16] 0.0, 128
    %803 = vxpose.xlu0.b32.cont [5/16] 0.0, 128
    %804 = vxpose.xlu0.b32.cont [6/16] 0.0, 128
    %805 = vxpose.xlu0.b32.cont [7/16] 0.0, 128
    %806 = vxpose.xlu0.b32.cont [8/16] 0.0, 128
    %807 = vxpose.xlu0.b32.cont [9/16] 0.0, 128
    %808 = vxpose.xlu0.b32.cont [10/16] 0.0, 128
    %809 = vxpose.xlu0.b32.cont [11/16] 0.0, 128
    %810 = vxpose.xlu0.b32.cont [12/16] 0.0, 128
    %811 = vxpose.xlu0.b32.cont [13/16] 0.0, 128
    %812 = vxpose.xlu0.b32.cont [14/16] 0.0, 128
    %813 = vxpose.xlu0.b32.cont [15/16] 0.0, 128
    %814 = vxpose.xlu0.b32.end [16/16] 0.0, 128
    %v815 = vpop.trf.xlu0
    %v816 = vpop.trf.xlu0
    %v817 = vpop.trf.xlu0
    %v818 = vpop.trf.xlu0
    %v819 = vpop.trf.xlu0
    %v820 = vpop.trf.xlu0
    %v821 = vpop.trf.xlu0
    %v822 = vpop.trf.xlu0
    %v823 = vpop.trf.xlu0
    %v824 = vpop.trf.xlu0
    %v825 = vpop.trf.xlu0
    %v826 = vpop.trf.xlu0
    %v827 = vpop.trf.xlu0
    %v828 = vpop.trf.xlu0
    %v829 = vpop.trf.xlu0
    %v830 = vpop.trf.xlu0
    %v831 = vadd.f32 %v796, %v815
    %v832 = vadd.f32 %v798, %v816
    %v833 = vmul.f32 %v831, 0.5
    %v834 = vmul.f32 %v832, 0.5
    %v836 = vsel %vm377, %v833, 0
    %v839 = vsel %vm377, %v834, 0
    %841 = vmatprep.subr.mxu0 0.0
    %842 = vmatpush1.msra.mxu0 %v166
    %843 = vmatprep.subr.mxu0 0.0
    %844 = vmatpush1.msra.mxu0 %v171
    %845 = vmatprep.subr.mxu0 0.0
    %846 = vmatpush1.msra.mxu0 0.0
    %847 = vmatprep.subr.mxu0 0.0
    %848 = vmatpush1.msra.mxu0 0.0
    %849 = vmatprep.subr.mxu0 0.0
    %850 = vmatpush1.msra.mxu0 0.0
    %851 = vmatprep.subr.mxu0 0.0
    %852 = vmatpush1.msra.mxu0 0.0
    %853 = vmatprep.subr.mxu0 0.0
    %854 = vmatpush1.msra.mxu0 0.0
    %855 = vmatprep.subr.mxu0 0.0
    %856 = vmatpush1.msra.mxu0 0.0
    %857 = vmatprep.subr.mxu0 0.0
    %858 = vmatpush1.msra.mxu0 0.0
    %859 = vmatprep.subr.mxu0 0.0
    %860 = vmatpush1.msra.mxu0 0.0
    %861 = vmatprep.subr.mxu0 0.0
    %862 = vmatpush1.msra.mxu0 0.0
    %863 = vmatprep.subr.mxu0 0.0
    %864 = vmatpush1.msra.mxu0 0.0
    %865 = vmatprep.subr.mxu0 0.0
    %866 = vmatpush1.msra.mxu0 0.0
    %867 = vmatprep.subr.mxu0 0.0
    %868 = vmatpush1.msra.mxu0 0.0
    %869 = vmatprep.subr.mxu0 0.0
    %870 = vmatpush1.msra.mxu0 0.0
    %871 = vmatprep.subr.mxu0 0.0
    %872 = vmatpush1.msra.mxu0 0.0
    %873 = vmatprep.subr.mxu0 0.0
    %874 = vmatpush1.msra.mxu0 0.0
    %875 = vmatprep.subr.mxu0 0.0
    %876 = vmatpush1.msra.mxu0 0.0
    %877 = vmatprep.subr.mxu0 0.0
    %878 = vmatpush1.msra.mxu0 0.0
    %879 = vmatprep.subr.mxu0 0.0
    %880 = vmatpush1.msra.mxu0 0.0
    %881 = vmatprep.subr.mxu0 0.0
    %882 = vmatpush1.msra.mxu0 0.0
    %883 = vmatprep.subr.mxu0 0.0
    %884 = vmatpush1.msra.mxu0 0.0
    %885 = vmatprep.subr.mxu0 0.0
    %886 = vmatpush1.msra.mxu0 0.0
    %887 = vmatprep.subr.mxu0 0.0
    %888 = vmatpush1.msra.mxu0 0.0
    %889 = vmatprep.subr.mxu0 0.0
    %890 = vmatpush1.msra.mxu0 0.0
    %891 = vmatprep.subr.mxu0 0.0
    %892 = vmatpush1.msra.mxu0 0.0
    %893 = vmatprep.subr.mxu0 0.0
    %894 = vmatpush1.msra.mxu0 0.0
    %895 = vmatprep.subr.mxu0 0.0
    %896 = vmatpush1.msra.mxu0 0.0
    %897 = vmatprep.subr.mxu0 0.0
    %898 = vmatpush1.msra.mxu0 0.0
    %899 = vmatprep.subr.mxu0 0.0
    %900 = vmatpush1.msra.mxu0 0.0
    %901 = vmatprep.subr.mxu0 0.0
    %902 = vmatpush1.msra.mxu0 0.0
    %903 = vmatprep.subr.mxu0 0.0
    %904 = vmatpush1.msra.mxu0 0.0
    %905 = vmatprep.mubr.f32.mxu0 0.0
    %906 = vmatmul.mubr.f32.gmra.mrb[0].mxu0 %v836
    %v907 = vpop.f32.mrb[0].mxu0
    %v908 = vadd.f32 0.0, %v907
    %v909 = vpop.f32.mrb[0].mxu0
    %910 = vmatprep.mubr.f32.mxu0 0.0
    %911 = vmatmul.mubr.f32.gmra.mrb[0].mxu0 %v839
    %v912 = vpop.f32.mrb[0].mxu0
    %v913 = vadd.f32 0.0, %v912
    %v914 = vpop.f32.mrb[0].mxu0
    %915 = vdwg.mxu0
    %916 = vst.msk [vmem:[#allocation2 + $0x10] sm:$0xff] %vm76, %v908
    %917 = vst.msk [vmem:[#allocation2 + $0x18] sm:$0xff] %vm76, %v913
    %v918 = vld [vmem:[#allocation2] sm:$0xff]
    %v919 = vld [vmem:[#allocation2 + $0x8] sm:$0xff]
    %v920 = vld [vmem:[#allocation2 + $0x10] sm:$0xff]
    %v921 = vld [vmem:[#allocation2 + $0x18] sm:$0xff]
    %v922 = vld [vmem:[#allocation8 + $0x20] sm:$0xff]
    %v923 = vld [vmem:[#allocation8 + $0x28] sm:$0xff]
    %v924 = vld [vmem:[#allocation8 + $0x30] sm:$0xff]
    %v925 = vld [vmem:[#allocation8 + $0x38] sm:$0xff]
    %v927 = vsel %vm76, %v918, 0
    %v930 = vsel %vm76, %v919, 0
    %v933 = vsel %vm76, %v920, 0
    %v936 = vsel %vm76, %v921, 0
    %938 = vmatprep.subr.mxu0 0.0
    %939 = vmatpush1.msra.mxu0 %v922
    %940 = vmatprep.subr.mxu0 0.0
    %941 = vmatpush1.msra.mxu0 %v923
    %942 = vmatprep.subr.mxu0 0.0
    %943 = vmatpush1.msra.mxu0 %v924
    %944 = vmatprep.subr.mxu0 0.0
    %945 = vmatpush1.msra.mxu0 %v925
    %946 = vmatprep.subr.mxu0 0.0
    %947 = vmatpush1.msra.mxu0 0.0
    %948 = vmatprep.subr.mxu0 0.0
    %949 = vmatpush1.msra.mxu0 0.0
    %950 = vmatprep.subr.mxu0 0.0
    %951 = vmatpush1.msra.mxu0 0.0
    %952 = vmatprep.subr.mxu0 0.0
    %953 = vmatpush1.msra.mxu0 0.0
    %954 = vmatprep.subr.mxu0 0.0
    %955 = vmatpush1.msra.mxu0 0.0
    %956 = vmatprep.subr.mxu0 0.0
    %957 = vmatpush1.msra.mxu0 0.0
    %958 = vmatprep.subr.mxu0 0.0
    %959 = vmatpush1.msra.mxu0 0.0
    %960 = vmatprep.subr.mxu0 0.0
    %961 = vmatpush1.msra.mxu0 0.0
    %962 = vmatprep.subr.mxu0 0.0
    %963 = vmatpush1.msra.mxu0 0.0
    %964 = vmatprep.subr.mxu0 0.0
    %965 = vmatpush1.msra.mxu0 0.0
    %966 = vmatprep.subr.mxu0 0.0
    %967 = vmatpush1.msra.mxu0 0.0
    %968 = vmatprep.subr.mxu0 0.0
    %969 = vmatpush1.msra.mxu0 0.0
    %970 = vmatprep.subr.mxu0 0.0
    %971 = vmatpush1.msra.mxu0 0.0
    %972 = vmatprep.subr.mxu0 0.0
    %973 = vmatpush1.msra.mxu0 0.0
    %974 = vmatprep.subr.mxu0 0.0
    %975 = vmatpush1.msra.mxu0 0.0
    %976 = vmatprep.subr.mxu0 0.0
    %977 = vmatpush1.msra.mxu0 0.0
    %978 = vmatprep.subr.mxu0 0.0
    %979 = vmatpush1.msra.mxu0 0.0
    %980 = vmatprep.subr.mxu0 0.0
    %981 = vmatpush1.msra.mxu0 0.0
    %982 = vmatprep.subr.mxu0 0.0
    %983 = vmatpush1.msra.mxu0 0.0
    %984 = vmatprep.subr.mxu0 0.0
    %985 = vmatpush1.msra.mxu0 0.0
    %986 = vmatprep.subr.mxu0 0.0
    %987 = vmatpush1.msra.mxu0 0.0
    %988 = vmatprep.subr.mxu0 0.0
    %989 = vmatpush1.msra.mxu0 0.0
    %990 = vmatprep.subr.mxu0 0.0
    %991 = vmatpush1.msra.mxu0 0.0
    %992 = vmatprep.subr.mxu0 0.0
    %993 = vmatpush1.msra.mxu0 0.0
    %994 = vmatprep.subr.mxu0 0.0
    %995 = vmatpush1.msra.mxu0 0.0
    %996 = vmatprep.subr.mxu0 0.0
    %997 = vmatpush1.msra.mxu0 0.0
    %998 = vmatprep.subr.mxu0 0.0
    %999 = vmatpush1.msra.mxu0 0.0
    %1000 = vmatprep.subr.mxu0 0.0
    %1001 = vmatpush1.msra.mxu0 0.0
    %1002 = vmatprep.mubr.f32.mxu0 0.0
    %1003 = vmatmul.mubr.f32.gmra.mrb[0].mxu0 %v927
    %v1004 = vpop.f32.mrb[0].mxu0
    %v1005 = vadd.f32 0.0, %v1004
    %v1006 = vpop.f32.mrb[0].mxu0
    %1007 = vmatprep.mubr.f32.mxu0 0.0
    %1008 = vmatmul.mubr.f32.gmra.mrb[0].mxu0 %v930
    %v1009 = vpop.f32.mrb[0].mxu0
    %v1010 = vadd.f32 0.0, %v1009
    %v1011 = vpop.f32.mrb[0].mxu0
    %1012 = vmatprep.mubr.f32.mxu0 0.0
    %1013 = vmatmul.mubr.f32.gmra.mrb[0].mxu0 %v933
    %v1014 = vpop.f32.mrb[0].mxu0
    %v1015 = vadd.f32 0.0, %v1014
    %v1016 = vpop.f32.mrb[0].mxu0
    %1017 = vmatprep.mubr.f32.mxu0 0.0
    %1018 = vmatmul.mubr.f32.gmra.mrb[0].mxu0 %v936
    %v1019 = vpop.f32.mrb[0].mxu0
    %v1020 = vadd.f32 0.0, %v1019
    %v1021 = vpop.f32.mrb[0].mxu0
    %1022 = vdwg.mxu0
    %v1023 = vld [vmem:[#allocation8 + $0x70] sm:$0xff]
    %v1024 = vld [vmem:[#allocation8 + $0x78] sm:$0xff]
    %v1025 = vld [vmem:[#allocation8 + $0x90] sm:$0x1]
    %v1026 = vld [vmem:[#allocation8 + $0xb0] sm:$0xff]
    %v1027 = vld [vmem:[#allocation8 + $0xb8] sm:$0xff]
    %v1029 = vsel %vm377, %v1005, 0
    %v1032 = vsel %vm377, %v1010, 0
    %v1035 = vsel %vm377, %v1015, 0
    %v1038 = vsel %vm377, %v1020, 0
    %1040 = vmatprep.subr.mxu0 0.0
    %1041 = vmatpush1.msra.mxu0 %v1023
    %1042 = vmatprep.subr.mxu0 0.0
    %1043 = vmatpush1.msra.mxu0 %v1024
    %1044 = vmatprep.subr.mxu0 0.0
    %1045 = vmatpush1.msra.mxu0 0.0
    %1046 = vmatprep.subr.mxu0 0.0
    %1047 = vmatpush1.msra.mxu0 0.0
    %1048 = vmatprep.subr.mxu0 0.0
    %1049 = vmatpush1.msra.mxu0 0.0
    %1050 = vmatprep.subr.mxu0 0.0
    %1051 = vmatpush1.msra.mxu0 0.0
    %1052 = vmatprep.subr.mxu0 0.0
    %1053 = vmatpush1.msra.mxu0 0.0
    %1054 = vmatprep.subr.mxu0 0.0
    %1055 = vmatpush1.msra.mxu0 0.0
    %1056 = vmatprep.subr.mxu0 0.0
    %1057 = vmatpush1.msra.mxu0 0.0
    %1058 = vmatprep.subr.mxu0 0.0
    %1059 = vmatpush1.msra.mxu0 0.0
    %1060 = vmatprep.subr.mxu0 0.0
    %1061 = vmatpush1.msra.mxu0 0.0
    %1062 = vmatprep.subr.mxu0 0.0
    %1063 = vmatpush1.msra.mxu0 0.0
    %1064 = vmatprep.subr.mxu0 0.0
    %1065 = vmatpush1.msra.mxu0 0.0
    %1066 = vmatprep.subr.mxu0 0.0
    %1067 = vmatpush1.msra.mxu0 0.0
    %1068 = vmatprep.subr.mxu0 0.0
    %1069 = vmatpush1.msra.mxu0 0.0
    %1070 = vmatprep.subr.mxu0 0.0
    %1071 = vmatpush1.msra.mxu0 0.0
    %1072 = vmatprep.subr.mxu0 0.0
    %1073 = vmatpush1.msra.mxu0 0.0
    %1074 = vmatprep.subr.mxu0 0.0
    %1075 = vmatpush1.msra.mxu0 0.0
    %1076 = vmatprep.subr.mxu0 0.0
    %1077 = vmatpush1.msra.mxu0 0.0
    %1078 = vmatprep.subr.mxu0 0.0
    %1079 = vmatpush1.msra.mxu0 0.0
    %1080 = vmatprep.subr.mxu0 0.0
    %1081 = vmatpush1.msra.mxu0 0.0
    %1082 = vmatprep.subr.mxu0 0.0
    %1083 = vmatpush1.msra.mxu0 0.0
    %1084 = vmatprep.subr.mxu0 0.0
    %1085 = vmatpush1.msra.mxu0 0.0
    %1086 = vmatprep.subr.mxu0 0.0
    %1087 = vmatpush1.msra.mxu0 0.0
    %1088 = vmatprep.subr.mxu0 0.0
    %1089 = vmatpush1.msra.mxu0 0.0
    %1090 = vmatprep.subr.mxu0 0.0
    %1091 = vmatpush1.msra.mxu0 0.0
    %1092 = vmatprep.subr.mxu0 0.0
    %1093 = vmatpush1.msra.mxu0 0.0
    %1094 = vmatprep.subr.mxu0 0.0
    %1095 = vmatpush1.msra.mxu0 0.0
    %1096 = vmatprep.subr.mxu0 0.0
    %1097 = vmatpush1.msra.mxu0 0.0
    %1098 = vmatprep.subr.mxu0 0.0
    %1099 = vmatpush1.msra.mxu0 0.0
    %1100 = vmatprep.subr.mxu0 0.0
    %1101 = vmatpush1.msra.mxu0 0.0
    %1102 = vmatprep.subr.mxu0 0.0
    %1103 = vmatpush1.msra.mxu0 0.0
    %1104 = vmatprep.mubr.f32.mxu0 0.0
    %1105 = vmatmul.mubr.f32.gmra.mrb[0].mxu0 %v1029
    %v1106 = vpop.f32.mrb[0].mxu0
    %v1107 = vadd.f32 0.0, %v1106
    %v1108 = vpop.f32.mrb[0].mxu0
    %1109 = vmatprep.mubr.f32.mxu0 0.0
    %1110 = vmatmul.mubr.f32.gmra.mrb[0].mxu0 %v1032
    %v1111 = vpop.f32.mrb[0].mxu0
    %v1112 = vadd.f32 0.0, %v1111
    %v1113 = vpop.f32.mrb[0].mxu0
    %1114 = vmatprep.mubr.f32.mxu0 0.0
    %1115 = vmatmul.mubr.f32.gmra.mrb[0].mxu0 %v1035
    %v1116 = vpop.f32.mrb[0].mxu0
    %v1117 = vadd.f32 0.0, %v1116
    %v1118 = vpop.f32.mrb[0].mxu0
    %1119 = vmatprep.mubr.f32.mxu0 0.0
    %1120 = vmatmul.mubr.f32.gmra.mrb[0].mxu0 %v1038
    %v1121 = vpop.f32.mrb[0].mxu0
    %v1122 = vadd.f32 0.0, %v1121
    %v1123 = vpop.f32.mrb[0].mxu0
    %1124 = vdwg.mxu0
    %v1126 = vsel %vm377, %v1025, 0
    %1128 = vmatprep.subr.mxu0 0.0
    %1129 = vmatpush1.xpose.msra.mxu0 %v1029
    %1130 = vmatprep.subr.mxu0 0.0
    %1131 = vmatpush1.xpose.msra.mxu0 %v1032
    %1132 = vmatprep.subr.mxu0 0.0
    %1133 = vmatpush1.xpose.msra.mxu0 0.0
    %1134 = vmatprep.subr.mxu0 0.0
    %1135 = vmatpush1.xpose.msra.mxu0 0.0
    %1136 = vmatprep.subr.mxu0 0.0
    %1137 = vmatpush1.xpose.msra.mxu0 0.0
    %1138 = vmatprep.subr.mxu0 0.0
    %1139 = vmatpush1.xpose.msra.mxu0 0.0
    %1140 = vmatprep.subr.mxu0 0.0
    %1141 = vmatpush1.xpose.msra.mxu0 0.0
    %1142 = vmatprep.subr.mxu0 0.0
    %1143 = vmatpush1.xpose.msra.mxu0 0.0
    %1144 = vmatprep.subr.mxu0 0.0
    %1145 = vmatpush1.xpose.msra.mxu0 0.0
    %1146 = vmatprep.subr.mxu0 0.0
    %1147 = vmatpush1.xpose.msra.mxu0 0.0
    %1148 = vmatprep.subr.mxu0 0.0
    %1149 = vmatpush1.xpose.msra.mxu0 0.0
    %1150 = vmatprep.subr.mxu0 0.0
    %1151 = vmatpush1.xpose.msra.mxu0 0.0
    %1152 = vmatprep.subr.mxu0 0.0
    %1153 = vmatpush1.xpose.msra.mxu0 0.0
    %1154 = vmatprep.subr.mxu0 0.0
    %1155 = vmatpush1.xpose.msra.mxu0 0.0
    %1156 = vmatprep.subr.mxu0 0.0
    %1157 = vmatpush1.xpose.msra.mxu0 0.0
    %1158 = vmatprep.subr.mxu0 0.0
    %1159 = vmatpush1.xpose.msra.mxu0 0.0
    %1160 = vmatprep.subr.mxu0 0.0
    %1161 = vmatpush1.xpose.msra.mxu0 0.0
    %1162 = vmatprep.subr.mxu0 0.0
    %1163 = vmatpush1.xpose.msra.mxu0 0.0
    %1164 = vmatprep.subr.mxu0 0.0
    %1165 = vmatpush1.xpose.msra.mxu0 0.0
    %1166 = vmatprep.subr.mxu0 0.0
    %1167 = vmatpush1.xpose.msra.mxu0 0.0
    %1168 = vmatprep.subr.mxu0 0.0
    %1169 = vmatpush1.xpose.msra.mxu0 0.0
    %1170 = vmatprep.subr.mxu0 0.0
    %1171 = vmatpush1.xpose.msra.mxu0 0.0
    %1172 = vmatprep.subr.mxu0 0.0
    %1173 = vmatpush1.xpose.msra.mxu0 0.0
    %1174 = vmatprep.subr.mxu0 0.0
    %1175 = vmatpush1.xpose.msra.mxu0 0.0
    %1176 = vmatprep.subr.mxu0 0.0
    %1177 = vmatpush1.xpose.msra.mxu0 0.0
    %1178 = vmatprep.subr.mxu0 0.0
    %1179 = vmatpush1.xpose.msra.mxu0 0.0
    %1180 = vmatprep.subr.mxu0 0.0
    %1181 = vmatpush1.xpose.msra.mxu0 0.0
    %1182 = vmatprep.subr.mxu0 0.0
    %1183 = vmatpush1.xpose.msra.mxu0 0.0
    %1184 = vmatprep.subr.mxu0 0.0
    %1185 = vmatpush1.xpose.msra.mxu0 0.0
    %1186 = vmatprep.subr.mxu0 0.0
    %1187 = vmatpush1.xpose.msra.mxu0 0.0
    %1188 = vmatprep.subr.mxu0 0.0
    %1189 = vmatpush1.xpose.msra.mxu0 0.0
    %1190 = vmatprep.subr.mxu0 0.0
    %1191 = vmatpush1.xpose.msra.mxu0 0.0
    %1192 = vmatprep.mubr.f32.mxu0 0.0
    %1193 = vmatmul.mubr.f32.gmra.mrb[0].mxu0 %v1126
    %v1194 = vpop.f32.mrb[0].mxu0
    %v1195 = vadd.f32 0.0, %v1194
    %v1196 = vpop.f32.mrb[0].mxu0
    %1197 = vdwg.mxu0
    %1199 = vset.pattern.permute.xlu0 0
    %1200 = vperm.xlu0 %1199, %v1107
    %v1201 = vpop.permute.xlu0 %1200
    %1204 = vset.pattern.permute.xlu0 0
    %1205 = vperm.xlu0 %1204, %v1112
    %v1206 = vpop.permute.xlu0 %1205
    %v1208 = vlaneseq
    %v1209 = vshrl.u32 %v1208, 7
    %v1210 = vsub.s32 0, %v1209
    %v1211 = vrot.slane %v1195, %v1210
    %v1212 = vadd.f32 %v1201, %v1211
    %v1213 = vadd.f32 %v1206, %v1211
    %vm1214 = vcmp.gt.f32.partialorder %v1212, 0.0
    %vm1215 = vcmp.gt.f32.partialorder %v1213, 0.0
    %v1216 = vmul.f32 %v1212, 0.01
    %v1217 = vmul.f32 %v1213, 0.01
    %v1218 = vsel %vm1214, %v1212, %v1216
    %v1219 = vsel %vm1215, %v1213, %v1217
    %vm1220 = vcmp.gt.f32.partialorder %v515, 1e-05
    %vm1221 = vcmp.gt.f32.partialorder %v516, 1e-05
    %v1222 = vsel %vm1220, %v1218, -1e+13
    %v1223 = vsel %vm1221, %v1219, -1e+13
    %v1225 = vsel %vm377, %v1222, 0
    %v1228 = vsel %vm377, %v1223, 0
    %1230 = vmatprep.subr.mxu0 0.0
    %1231 = vmatpush1.msra.mxu0 %v1026
    %1232 = vmatprep.subr.mxu0 0.0
    %1233 = vmatpush1.msra.mxu0 %v1027
    %1234 = vmatprep.subr.mxu0 0.0
    %1235 = vmatpush1.msra.mxu0 0.0
    %1236 = vmatprep.subr.mxu0 0.0
    %1237 = vmatpush1.msra.mxu0 0.0
    %1238 = vmatprep.subr.mxu0 0.0
    %1239 = vmatpush1.msra.mxu0 0.0
    %1240 = vmatprep.subr.mxu0 0.0
    %1241 = vmatpush1.msra.mxu0 0.0
    %1242 = vmatprep.subr.mxu0 0.0
    %1243 = vmatpush1.msra.mxu0 0.0
    %1244 = vmatprep.subr.mxu0 0.0
    %1245 = vmatpush1.msra.mxu0 0.0
    %1246 = vmatprep.subr.mxu0 0.0
    %1247 = vmatpush1.msra.mxu0 0.0
    %1248 = vmatprep.subr.mxu0 0.0
    %1249 = vmatpush1.msra.mxu0 0.0
    %1250 = vmatprep.subr.mxu0 0.0
    %1251 = vmatpush1.msra.mxu0 0.0
    %1252 = vmatprep.subr.mxu0 0.0
    %1253 = vmatpush1.msra.mxu0 0.0
    %1254 = vmatprep.subr.mxu0 0.0
    %1255 = vmatpush1.msra.mxu0 0.0
    %1256 = vmatprep.subr.mxu0 0.0
    %1257 = vmatpush1.msra.mxu0 0.0
    %1258 = vmatprep.subr.mxu0 0.0
    %1259 = vmatpush1.msra.mxu0 0.0
    %1260 = vmatprep.subr.mxu0 0.0
    %1261 = vmatpush1.msra.mxu0 0.0
    %1262 = vmatprep.subr.mxu0 0.0
    %1263 = vmatpush1.msra.mxu0 0.0
    %1264 = vmatprep.subr.mxu0 0.0
    %1265 = vmatpush1.msra.mxu0 0.0
    %1266 = vmatprep.subr.mxu0 0.0
    %1267 = vmatpush1.msra.mxu0 0.0
    %1268 = vmatprep.subr.mxu0 0.0
    %1269 = vmatpush1.msra.mxu0 0.0
    %1270 = vmatprep.subr.mxu0 0.0
    %1271 = vmatpush1.msra.mxu0 0.0
    %1272 = vmatprep.subr.mxu0 0.0
    %1273 = vmatpush1.msra.mxu0 0.0
    %1274 = vmatprep.subr.mxu0 0.0
    %1275 = vmatpush1.msra.mxu0 0.0
    %1276 = vmatprep.subr.mxu0 0.0
    %1277 = vmatpush1.msra.mxu0 0.0
    %1278 = vmatprep.subr.mxu0 0.0
    %1279 = vmatpush1.msra.mxu0 0.0
    %1280 = vmatprep.subr.mxu0 0.0
    %1281 = vmatpush1.msra.mxu0 0.0
    %1282 = vmatprep.subr.mxu0 0.0
    %1283 = vmatpush1.msra.mxu0 0.0
    %1284 = vmatprep.subr.mxu0 0.0
    %1285 = vmatpush1.msra.mxu0 0.0
    %1286 = vmatprep.subr.mxu0 0.0
    %1287 = vmatpush1.msra.mxu0 0.0
    %1288 = vmatprep.subr.mxu0 0.0
    %1289 = vmatpush1.msra.mxu0 0.0
    %1290 = vmatprep.subr.mxu0 0.0
    %1291 = vmatpush1.msra.mxu0 0.0
    %1292 = vmatprep.subr.mxu0 0.0
    %1293 = vmatpush1.msra.mxu0 0.0
    %1294 = vmatprep.mubr.f32.mxu0 0.0
    %1295 = vmatmul.mubr.f32.gmra.mrb[0].mxu0 %v1225
    %v1296 = vpop.f32.mrb[0].mxu0
    %v1297 = vadd.f32 0.0, %v1296
    %v1298 = vpop.f32.mrb[0].mxu0
    %1299 = vmatprep.mubr.f32.mxu0 0.0
    %1300 = vmatmul.mubr.f32.gmra.mrb[0].mxu0 %v1228
    %v1301 = vpop.f32.mrb[0].mxu0
    %v1302 = vadd.f32 0.0, %v1301
    %v1303 = vpop.f32.mrb[0].mxu0
    %1304 = vdwg.mxu0
    %v1305 = vsel %vm377, %v1297, -inf
    %1306 = vmax.xlane.f32.xlu0 %v1305
    %v1307 = vpop.xlane.xlu0 %1306
    %v1308 = vsel %vm377, %v1302, -inf
    %1309 = vmax.xlane.f32.xlu0 %v1308
    %v1310 = vpop.xlane.xlu0 %1309
    %v1311 = vsub.f32 %v1297, %v1307
    %v1312 = vsub.f32 %v1302, %v1310
    %v1313 = vmul.f32 %v1311, 1.442695
    %v1314 = vpow.pop %v1313
    %v1315 = vmul.f32 %v1312, 1.442695
    %v1316 = vpow.pop %v1315
    %v1317 = vsel %vm377, %v1314, 0.0
    %1318 = vadd.xlane.f32.xlu0 %v1317
    %v1319 = vpop.xlane.xlu0 %1318
    %v1320 = vsel %vm377, %v1316, 0.0
    %1321 = vadd.xlane.f32.xlu0 %v1320
    %v1322 = vpop.xlane.xlu0 %1321
    %v1323 = vrcp.pop %v1319
    %v1324 = vmul.f32 %v1314, %v1323
    %v1325 = vrcp.pop %v1322
    %v1326 = vmul.f32 %v1316, %v1325
    %1327 = vxpose.xlu0.b32.start [1/16] %v1324, 128
    %1328 = vxpose.xlu0.b32.cont [2/16] %v1326, 128
    %1329 = vxpose.xlu0.b32.cont [3/16] 0.0, 128
    %1330 = vxpose.xlu0.b32.cont [4/16] 0.0, 128
    %1331 = vxpose.xlu0.b32.cont [5/16] 0.0, 128
    %1332 = vxpose.xlu0.b32.cont [6/16] 0.0, 128
    %1333 = vxpose.xlu0.b32.cont [7/16] 0.0, 128
    %1334 = vxpose.xlu0.b32.cont [8/16] 0.0, 128
    %1335 = vxpose.xlu0.b32.cont [9/16] 0.0, 128
    %1336 = vxpose.xlu0.b32.cont [10/16] 0.0, 128
    %1337 = vxpose.xlu0.b32.cont [11/16] 0.0, 128
    %1338 = vxpose.xlu0.b32.cont [12/16] 0.0, 128
    %1339 = vxpose.xlu0.b32.cont [13/16] 0.0, 128
    %1340 = vxpose.xlu0.b32.cont [14/16] 0.0, 128
    %1341 = vxpose.xlu0.b32.cont [15/16] 0.0, 128
    %1342 = vxpose.xlu0.b32.end [16/16] 0.0, 128
    %v1343 = vpop.trf.xlu0
    %v1344 = vpop.trf.xlu0
    %v1345 = vpop.trf.xlu0
    %v1346 = vpop.trf.xlu0
    %v1347 = vpop.trf.xlu0
    %v1348 = vpop.trf.xlu0
    %v1349 = vpop.trf.xlu0
    %v1350 = vpop.trf.xlu0
    %v1351 = vpop.trf.xlu0
    %v1352 = vpop.trf.xlu0
    %v1353 = vpop.trf.xlu0
    %v1354 = vpop.trf.xlu0
    %v1355 = vpop.trf.xlu0
    %v1356 = vpop.trf.xlu0
    %v1357 = vpop.trf.xlu0
    %v1358 = vpop.trf.xlu0
    %v1359 = vadd.f32 %v1324, %v1343
    %v1360 = vadd.f32 %v1326, %v1344
    %v1361 = vmul.f32 %v1359, 0.5
    %v1362 = vmul.f32 %v1360, 0.5
    %v1364 = vsel %vm377, %v1361, 0
    %v1367 = vsel %vm377, %v1362, 0
    %1369 = vmatprep.subr.mxu0 0.0
    %1370 = vmatpush1.msra.mxu0 %v1005
    %1371 = vmatprep.subr.mxu0 0.0
    %1372 = vmatpush1.msra.mxu0 %v1010
    %1373 = vmatprep.subr.mxu0 0.0
    %1374 = vmatpush1.msra.mxu0 0.0
    %1375 = vmatprep.subr.mxu0 0.0
    %1376 = vmatpush1.msra.mxu0 0.0
    %1377 = vmatprep.subr.mxu0 0.0
    %1378 = vmatpush1.msra.mxu0 0.0
    %1379 = vmatprep.subr.mxu0 0.0
    %1380 = vmatpush1.msra.mxu0 0.0
    %1381 = vmatprep.subr.mxu0 0.0
    %1382 = vmatpush1.msra.mxu0 0.0
    %1383 = vmatprep.subr.mxu0 0.0
    %1384 = vmatpush1.msra.mxu0 0.0
    %1385 = vmatprep.subr.mxu0 0.0
    %1386 = vmatpush1.msra.mxu0 0.0
    %1387 = vmatprep.subr.mxu0 0.0
    %1388 = vmatpush1.msra.mxu0 0.0
    %1389 = vmatprep.subr.mxu0 0.0
    %1390 = vmatpush1.msra.mxu0 0.0
    %1391 = vmatprep.subr.mxu0 0.0
    %1392 = vmatpush1.msra.mxu0 0.0
    %1393 = vmatprep.subr.mxu0 0.0
    %1394 = vmatpush1.msra.mxu0 0.0
    %1395 = vmatprep.subr.mxu0 0.0
    %1396 = vmatpush1.msra.mxu0 0.0
    %1397 = vmatprep.subr.mxu0 0.0
    %1398 = vmatpush1.msra.mxu0 0.0
    %1399 = vmatprep.subr.mxu0 0.0
    %1400 = vmatpush1.msra.mxu0 0.0
    %1401 = vmatprep.subr.mxu0 0.0
    %1402 = vmatpush1.msra.mxu0 0.0
    %1403 = vmatprep.subr.mxu0 0.0
    %1404 = vmatpush1.msra.mxu0 0.0
    %1405 = vmatprep.subr.mxu0 0.0
    %1406 = vmatpush1.msra.mxu0 0.0
    %1407 = vmatprep.subr.mxu0 0.0
    %1408 = vmatpush1.msra.mxu0 0.0
    %1409 = vmatprep.subr.mxu0 0.0
    %1410 = vmatpush1.msra.mxu0 0.0
    %1411 = vmatprep.subr.mxu0 0.0
    %1412 = vmatpush1.msra.mxu0 0.0
    %1413 = vmatprep.subr.mxu0 0.0
    %1414 = vmatpush1.msra.mxu0 0.0
    %1415 = vmatprep.subr.mxu0 0.0
    %1416 = vmatpush1.msra.mxu0 0.0
    %1417 = vmatprep.subr.mxu0 0.0
    %1418 = vmatpush1.msra.mxu0 0.0
    %1419 = vmatprep.subr.mxu0 0.0
    %1420 = vmatpush1.msra.mxu0 0.0
    %1421 = vmatprep.subr.mxu0 0.0
    %1422 = vmatpush1.msra.mxu0 0.0
    %1423 = vmatprep.subr.mxu0 0.0
    %1424 = vmatpush1.msra.mxu0 0.0
    %1425 = vmatprep.subr.mxu0 0.0
    %1426 = vmatpush1.msra.mxu0 0.0
    %1427 = vmatprep.subr.mxu0 0.0
    %1428 = vmatpush1.msra.mxu0 0.0
    %1429 = vmatprep.subr.mxu0 0.0
    %1430 = vmatpush1.msra.mxu0 0.0
    %1431 = vmatprep.subr.mxu0 0.0
    %1432 = vmatpush1.msra.mxu0 0.0
    %1433 = vmatprep.mubr.f32.mxu0 0.0
    %1434 = vmatmul.mubr.f32.gmra.mrb[0].mxu0 %v1364
    %v1435 = vpop.f32.mrb[0].mxu0
    %v1436 = vadd.f32 0.0, %v1435
    %v1437 = vpop.f32.mrb[0].mxu0
    %1438 = vmatprep.mubr.f32.mxu0 0.0
    %1439 = vmatmul.mubr.f32.gmra.mrb[0].mxu0 %v1367
    %v1440 = vpop.f32.mrb[0].mxu0
    %v1441 = vadd.f32 0.0, %v1440
    %v1442 = vpop.f32.mrb[0].mxu0
    %1443 = vdwg.mxu0
    %1444 = vst.msk [vmem:[#allocation2] sm:$0xff] %vm377, %v1436
    %1445 = vst.msk [vmem:[#allocation2 + $0x8] sm:$0xff] %vm377, %v1441
    %1446 = vmatprep.subr.mxu0 0.0
    %1447 = vmatpush1.xpose.msra.mxu0 %v1035
    %1448 = vmatprep.subr.mxu0 0.0
    %1449 = vmatpush1.xpose.msra.mxu0 %v1038
    %1450 = vmatprep.subr.mxu0 0.0
    %1451 = vmatpush1.xpose.msra.mxu0 0.0
    %1452 = vmatprep.subr.mxu0 0.0
    %1453 = vmatpush1.xpose.msra.mxu0 0.0
    %1454 = vmatprep.subr.mxu0 0.0
    %1455 = vmatpush1.xpose.msra.mxu0 0.0
    %1456 = vmatprep.subr.mxu0 0.0
    %1457 = vmatpush1.xpose.msra.mxu0 0.0
    %1458 = vmatprep.subr.mxu0 0.0
    %1459 = vmatpush1.xpose.msra.mxu0 0.0
    %1460 = vmatprep.subr.mxu0 0.0
    %1461 = vmatpush1.xpose.msra.mxu0 0.0
    %1462 = vmatprep.subr.mxu0 0.0
    %1463 = vmatpush1.xpose.msra.mxu0 0.0
    %1464 = vmatprep.subr.mxu0 0.0
    %1465 = vmatpush1.xpose.msra.mxu0 0.0
    %1466 = vmatprep.subr.mxu0 0.0
    %1467 = vmatpush1.xpose.msra.mxu0 0.0
    %1468 = vmatprep.subr.mxu0 0.0
    %1469 = vmatpush1.xpose.msra.mxu0 0.0
    %1470 = vmatprep.subr.mxu0 0.0
    %1471 = vmatpush1.xpose.msra.mxu0 0.0
    %1472 = vmatprep.subr.mxu0 0.0
    %1473 = vmatpush1.xpose.msra.mxu0 0.0
    %1474 = vmatprep.subr.mxu0 0.0
    %1475 = vmatpush1.xpose.msra.mxu0 0.0
    %1476 = vmatprep.subr.mxu0 0.0
    %1477 = vmatpush1.xpose.msra.mxu0 0.0
    %1478 = vmatprep.subr.mxu0 0.0
    %1479 = vmatpush1.xpose.msra.mxu0 0.0
    %1480 = vmatprep.subr.mxu0 0.0
    %1481 = vmatpush1.xpose.msra.mxu0 0.0
    %1482 = vmatprep.subr.mxu0 0.0
    %1483 = vmatpush1.xpose.msra.mxu0 0.0
    %1484 = vmatprep.subr.mxu0 0.0
    %1485 = vmatpush1.xpose.msra.mxu0 0.0
    %1486 = vmatprep.subr.mxu0 0.0
    %1487 = vmatpush1.xpose.msra.mxu0 0.0
    %1488 = vmatprep.subr.mxu0 0.0
    %1489 = vmatpush1.xpose.msra.mxu0 0.0
    %1490 = vmatprep.subr.mxu0 0.0
    %1491 = vmatpush1.xpose.msra.mxu0 0.0
    %1492 = vmatprep.subr.mxu0 0.0
    %1493 = vmatpush1.xpose.msra.mxu0 0.0
    %1494 = vmatprep.subr.mxu0 0.0
    %1495 = vmatpush1.xpose.msra.mxu0 0.0
    %1496 = vmatprep.subr.mxu0 0.0
    %1497 = vmatpush1.xpose.msra.mxu0 0.0
    %1498 = vmatprep.subr.mxu0 0.0
    %1499 = vmatpush1.xpose.msra.mxu0 0.0
    %1500 = vmatprep.subr.mxu0 0.0
    %1501 = vmatpush1.xpose.msra.mxu0 0.0
    %1502 = vmatprep.subr.mxu0 0.0
    %1503 = vmatpush1.xpose.msra.mxu0 0.0
    %1504 = vmatprep.subr.mxu0 0.0
    %1505 = vmatpush1.xpose.msra.mxu0 0.0
    %1506 = vmatprep.subr.mxu0 0.0
    %1507 = vmatpush1.xpose.msra.mxu0 0.0
    %1508 = vmatprep.subr.mxu0 0.0
    %1509 = vmatpush1.xpose.msra.mxu0 0.0
    %1510 = vmatprep.mubr.f32.mxu0 0.0
    %1511 = vmatmul.mubr.f32.gmra.mrb[0].mxu0 %v1126
    %v1512 = vpop.f32.mrb[0].mxu0
    %v1513 = vadd.f32 0.0, %v1512
    %v1514 = vpop.f32.mrb[0].mxu0
    %1515 = vdwg.mxu0
    %1517 = vset.pattern.permute.xlu0 0
    %1518 = vperm.xlu0 %1517, %v1117
    %v1519 = vpop.permute.xlu0 %1518
    %1522 = vset.pattern.permute.xlu0 0
    %1523 = vperm.xlu0 %1522, %v1122
    %v1524 = vpop.permute.xlu0 %1523
    %v1526 = vlaneseq
    %v1527 = vshrl.u32 %v1526, 7
    %v1528 = vsub.s32 0, %v1527
    %v1529 = vrot.slane %v1513, %v1528
    %v1530 = vadd.f32 %v1519, %v1529
    %v1531 = vadd.f32 %v1524, %v1529
    %vm1532 = vcmp.gt.f32.partialorder %v1530, 0.0
    %vm1533 = vcmp.gt.f32.partialorder %v1531, 0.0
    %v1534 = vmul.f32 %v1530, 0.01
    %v1535 = vmul.f32 %v1531, 0.01
    %v1536 = vsel %vm1532, %v1530, %v1534
    %v1537 = vsel %vm1533, %v1531, %v1535
    %vm1538 = vcmp.gt.f32.partialorder %v833, 1e-05
    %vm1539 = vcmp.gt.f32.partialorder %v834, 1e-05
    %v1540 = vsel %vm1538, %v1536, -1e+13
    %v1541 = vsel %vm1539, %v1537, -1e+13
    %v1543 = vsel %vm377, %v1540, 0
    %v1546 = vsel %vm377, %v1541, 0
    %1548 = vmatprep.subr.mxu0 0.0
    %1549 = vmatpush1.msra.mxu0 %v1026
    %1550 = vmatprep.subr.mxu0 0.0
    %1551 = vmatpush1.msra.mxu0 %v1027
    %1552 = vmatprep.subr.mxu0 0.0
    %1553 = vmatpush1.msra.mxu0 0.0
    %1554 = vmatprep.subr.mxu0 0.0
    %1555 = vmatpush1.msra.mxu0 0.0
    %1556 = vmatprep.subr.mxu0 0.0
    %1557 = vmatpush1.msra.mxu0 0.0
    %1558 = vmatprep.subr.mxu0 0.0
    %1559 = vmatpush1.msra.mxu0 0.0
    %1560 = vmatprep.subr.mxu0 0.0
    %1561 = vmatpush1.msra.mxu0 0.0
    %1562 = vmatprep.subr.mxu0 0.0
    %1563 = vmatpush1.msra.mxu0 0.0
    %1564 = vmatprep.subr.mxu0 0.0
    %1565 = vmatpush1.msra.mxu0 0.0
    %1566 = vmatprep.subr.mxu0 0.0
    %1567 = vmatpush1.msra.mxu0 0.0
    %1568 = vmatprep.subr.mxu0 0.0
    %1569 = vmatpush1.msra.mxu0 0.0
    %1570 = vmatprep.subr.mxu0 0.0
    %1571 = vmatpush1.msra.mxu0 0.0
    %1572 = vmatprep.subr.mxu0 0.0
    %1573 = vmatpush1.msra.mxu0 0.0
    %1574 = vmatprep.subr.mxu0 0.0
    %1575 = vmatpush1.msra.mxu0 0.0
    %1576 = vmatprep.subr.mxu0 0.0
    %1577 = vmatpush1.msra.mxu0 0.0
    %1578 = vmatprep.subr.mxu0 0.0
    %1579 = vmatpush1.msra.mxu0 0.0
    %1580 = vmatprep.subr.mxu0 0.0
    %1581 = vmatpush1.msra.mxu0 0.0
    %1582 = vmatprep.subr.mxu0 0.0
    %1583 = vmatpush1.msra.mxu0 0.0
    %1584 = vmatprep.subr.mxu0 0.0
    %1585 = vmatpush1.msra.mxu0 0.0
    %1586 = vmatprep.subr.mxu0 0.0
    %1587 = vmatpush1.msra.mxu0 0.0
    %1588 = vmatprep.subr.mxu0 0.0
    %1589 = vmatpush1.msra.mxu0 0.0
    %1590 = vmatprep.subr.mxu0 0.0
    %1591 = vmatpush1.msra.mxu0 0.0
    %1592 = vmatprep.subr.mxu0 0.0
    %1593 = vmatpush1.msra.mxu0 0.0
    %1594 = vmatprep.subr.mxu0 0.0
    %1595 = vmatpush1.msra.mxu0 0.0
    %1596 = vmatprep.subr.mxu0 0.0
    %1597 = vmatpush1.msra.mxu0 0.0
    %1598 = vmatprep.subr.mxu0 0.0
    %1599 = vmatpush1.msra.mxu0 0.0
    %1600 = vmatprep.subr.mxu0 0.0
    %1601 = vmatpush1.msra.mxu0 0.0
    %1602 = vmatprep.subr.mxu0 0.0
    %1603 = vmatpush1.msra.mxu0 0.0
    %1604 = vmatprep.subr.mxu0 0.0
    %1605 = vmatpush1.msra.mxu0 0.0
    %1606 = vmatprep.subr.mxu0 0.0
    %1607 = vmatpush1.msra.mxu0 0.0
    %1608 = vmatprep.subr.mxu0 0.0
    %1609 = vmatpush1.msra.mxu0 0.0
    %1610 = vmatprep.subr.mxu0 0.0
    %1611 = vmatpush1.msra.mxu0 0.0
    %1612 = vmatprep.mubr.f32.mxu0 0.0
    %1613 = vmatmul.mubr.f32.gmra.mrb[0].mxu0 %v1543
    %v1614 = vpop.f32.mrb[0].mxu0
    %v1615 = vadd.f32 0.0, %v1614
    %v1616 = vpop.f32.mrb[0].mxu0
    %1617 = vmatprep.mubr.f32.mxu0 0.0
    %1618 = vmatmul.mubr.f32.gmra.mrb[0].mxu0 %v1546
    %v1619 = vpop.f32.mrb[0].mxu0
    %v1620 = vadd.f32 0.0, %v1619
    %v1621 = vpop.f32.mrb[0].mxu0
    %1622 = vdwg.mxu0
    %v1623 = vsel %vm377, %v1615, -inf
    %1624 = vmax.xlane.f32.xlu0 %v1623
    %v1625 = vpop.xlane.xlu0 %1624
    %v1626 = vsel %vm377, %v1620, -inf
    %1627 = vmax.xlane.f32.xlu0 %v1626
    %v1628 = vpop.xlane.xlu0 %1627
    %v1629 = vsub.f32 %v1615, %v1625
    %v1630 = vsub.f32 %v1620, %v1628
    %v1631 = vmul.f32 %v1629, 1.442695
    %v1632 = vpow.pop %v1631
    %v1633 = vmul.f32 %v1630, 1.442695
    %v1634 = vpow.pop %v1633
    %v1635 = vsel %vm377, %v1632, 0.0
    %1636 = vadd.xlane.f32.xlu0 %v1635
    %v1637 = vpop.xlane.xlu0 %1636
    %v1638 = vsel %vm377, %v1634, 0.0
    %1639 = vadd.xlane.f32.xlu0 %v1638
    %v1640 = vpop.xlane.xlu0 %1639
    %v1641 = vrcp.pop %v1637
    %v1642 = vmul.f32 %v1632, %v1641
    %v1643 = vrcp.pop %v1640
    %v1644 = vmul.f32 %v1634, %v1643
    %1645 = vxpose.xlu0.b32.start [1/16] %v1642, 128
    %1646 = vxpose.xlu0.b32.cont [2/16] %v1644, 128
    %1647 = vxpose.xlu0.b32.cont [3/16] 0.0, 128
    %1648 = vxpose.xlu0.b32.cont [4/16] 0.0, 128
    %1649 = vxpose.xlu0.b32.cont [5/16] 0.0, 128
    %1650 = vxpose.xlu0.b32.cont [6/16] 0.0, 128
    %1651 = vxpose.xlu0.b32.cont [7/16] 0.0, 128
    %1652 = vxpose.xlu0.b32.cont [8/16] 0.0, 128
    %1653 = vxpose.xlu0.b32.cont [9/16] 0.0, 128
    %1654 = vxpose.xlu0.b32.cont [10/16] 0.0, 128
    %1655 = vxpose.xlu0.b32.cont [11/16] 0.0, 128
    %1656 = vxpose.xlu0.b32.cont [12/16] 0.0, 128
    %1657 = vxpose.xlu0.b32.cont [13/16] 0.0, 128
    %1658 = vxpose.xlu0.b32.cont [14/16] 0.0, 128
    %1659 = vxpose.xlu0.b32.cont [15/16] 0.0, 128
    %1660 = vxpose.xlu0.b32.end [16/16] 0.0, 128
    %v1661 = vpop.trf.xlu0
    %v1662 = vpop.trf.xlu0
    %v1663 = vpop.trf.xlu0
    %v1664 = vpop.trf.xlu0
    %v1665 = vpop.trf.xlu0
    %v1666 = vpop.trf.xlu0
    %v1667 = vpop.trf.xlu0
    %v1668 = vpop.trf.xlu0
    %v1669 = vpop.trf.xlu0
    %v1670 = vpop.trf.xlu0
    %v1671 = vpop.trf.xlu0
    %v1672 = vpop.trf.xlu0
    %v1673 = vpop.trf.xlu0
    %v1674 = vpop.trf.xlu0
    %v1675 = vpop.trf.xlu0
    %v1676 = vpop.trf.xlu0
    %v1677 = vadd.f32 %v1642, %v1661
    %v1678 = vadd.f32 %v1644, %v1662
    %v1679 = vmul.f32 %v1677, 0.5
    %v1680 = vmul.f32 %v1678, 0.5
    %v1682 = vsel %vm377, %v1679, 0
    %v1685 = vsel %vm377, %v1680, 0
    %1687 = vmatprep.subr.mxu0 0.0
    %1688 = vmatpush1.msra.mxu0 %v1015
    %1689 = vmatprep.subr.mxu0 0.0
    %1690 = vmatpush1.msra.mxu0 %v1020
    %1691 = vmatprep.subr.mxu0 0.0
    %1692 = vmatpush1.msra.mxu0 0.0
    %1693 = vmatprep.subr.mxu0 0.0
    %1694 = vmatpush1.msra.mxu0 0.0
    %1695 = vmatprep.subr.mxu0 0.0
    %1696 = vmatpush1.msra.mxu0 0.0
    %1697 = vmatprep.subr.mxu0 0.0
    %1698 = vmatpush1.msra.mxu0 0.0
    %1699 = vmatprep.subr.mxu0 0.0
    %1700 = vmatpush1.msra.mxu0 0.0
    %1701 = vmatprep.subr.mxu0 0.0
    %1702 = vmatpush1.msra.mxu0 0.0
    %1703 = vmatprep.subr.mxu0 0.0
    %1704 = vmatpush1.msra.mxu0 0.0
    %1705 = vmatprep.subr.mxu0 0.0
    %1706 = vmatpush1.msra.mxu0 0.0
    %1707 = vmatprep.subr.mxu0 0.0
    %1708 = vmatpush1.msra.mxu0 0.0
    %1709 = vmatprep.subr.mxu0 0.0
    %1710 = vmatpush1.msra.mxu0 0.0
    %1711 = vmatprep.subr.mxu0 0.0
    %1712 = vmatpush1.msra.mxu0 0.0
    %1713 = vmatprep.subr.mxu0 0.0
    %1714 = vmatpush1.msra.mxu0 0.0
    %1715 = vmatprep.subr.mxu0 0.0
    %1716 = vmatpush1.msra.mxu0 0.0
    %1717 = vmatprep.subr.mxu0 0.0
    %1718 = vmatpush1.msra.mxu0 0.0
    %1719 = vmatprep.subr.mxu0 0.0
    %1720 = vmatpush1.msra.mxu0 0.0
    %1721 = vmatprep.subr.mxu0 0.0
    %1722 = vmatpush1.msra.mxu0 0.0
    %1723 = vmatprep.subr.mxu0 0.0
    %1724 = vmatpush1.msra.mxu0 0.0
    %1725 = vmatprep.subr.mxu0 0.0
    %1726 = vmatpush1.msra.mxu0 0.0
    %1727 = vmatprep.subr.mxu0 0.0
    %1728 = vmatpush1.msra.mxu0 0.0
    %1729 = vmatprep.subr.mxu0 0.0
    %1730 = vmatpush1.msra.mxu0 0.0
    %1731 = vmatprep.subr.mxu0 0.0
    %1732 = vmatpush1.msra.mxu0 0.0
    %1733 = vmatprep.subr.mxu0 0.0
    %1734 = vmatpush1.msra.mxu0 0.0
    %1735 = vmatprep.subr.mxu0 0.0
    %1736 = vmatpush1.msra.mxu0 0.0
    %1737 = vmatprep.subr.mxu0 0.0
    %1738 = vmatpush1.msra.mxu0 0.0
    %1739 = vmatprep.subr.mxu0 0.0
    %1740 = vmatpush1.msra.mxu0 0.0
    %1741 = vmatprep.subr.mxu0 0.0
    %1742 = vmatpush1.msra.mxu0 0.0
    %1743 = vmatprep.subr.mxu0 0.0
    %1744 = vmatpush1.msra.mxu0 0.0
    %1745 = vmatprep.subr.mxu0 0.0
    %1746 = vmatpush1.msra.mxu0 0.0
    %1747 = vmatprep.subr.mxu0 0.0
    %1748 = vmatpush1.msra.mxu0 0.0
    %1749 = vmatprep.subr.mxu0 0.0
    %1750 = vmatpush1.msra.mxu0 0.0
    %1751 = vmatprep.mubr.f32.mxu0 0.0
    %1752 = vmatmul.mubr.f32.gmra.mrb[0].mxu0 %v1682
    %v1753 = vpop.f32.mrb[0].mxu0
    %v1754 = vadd.f32 0.0, %v1753
    %v1755 = vpop.f32.mrb[0].mxu0
    %1756 = vmatprep.mubr.f32.mxu0 0.0
    %1757 = vmatmul.mubr.f32.gmra.mrb[0].mxu0 %v1685
    %v1758 = vpop.f32.mrb[0].mxu0
    %v1759 = vadd.f32 0.0, %v1758
    %v1760 = vpop.f32.mrb[0].mxu0
    %1761 = vdwg.mxu0
    %1762 = vst.msk [vmem:[#allocation2 + $0x10] sm:$0xff] %vm377, %v1754
    %1763 = vst.msk [vmem:[#allocation2 + $0x18] sm:$0xff] %vm377, %v1759
    %v1764 = vld [vmem:[#allocation2] sm:$0xff]
    %v1765 = vld [vmem:[#allocation2 + $0x8] sm:$0xff]
    %v1766 = vld [vmem:[#allocation2 + $0x10] sm:$0xff]
    %v1767 = vld [vmem:[#allocation2 + $0x18] sm:$0xff]
    %v1768 = vld [vmem:[#allocation8 + $0x40] sm:$0xff]
    %v1769 = vld [vmem:[#allocation8 + $0x48] sm:$0xff]
    %v1771 = vsel %vm377, %v1764, 0
    %v1774 = vsel %vm377, %v1765, 0
    %v1777 = vsel %vm377, %v1766, 0
    %v1780 = vsel %vm377, %v1767, 0
    %1782 = vmatprep.subr.mxu0 0.0
    %1783 = vmatpush1.msra.mxu0 %v1768
    %1784 = vmatprep.subr.mxu0 0.0
    %1785 = vmatpush1.msra.mxu0 %v1769
    %1786 = vmatprep.subr.mxu0 0.0
    %1787 = vmatpush1.msra.mxu0 0.0
    %1788 = vmatprep.subr.mxu0 0.0
    %1789 = vmatpush1.msra.mxu0 0.0
    %1790 = vmatprep.subr.mxu0 0.0
    %1791 = vmatpush1.msra.mxu0 0.0
    %1792 = vmatprep.subr.mxu0 0.0
    %1793 = vmatpush1.msra.mxu0 0.0
    %1794 = vmatprep.subr.mxu0 0.0
    %1795 = vmatpush1.msra.mxu0 0.0
    %1796 = vmatprep.subr.mxu0 0.0
    %1797 = vmatpush1.msra.mxu0 0.0
    %1798 = vmatprep.subr.mxu0 0.0
    %1799 = vmatpush1.msra.mxu0 0.0
    %1800 = vmatprep.subr.mxu0 0.0
    %1801 = vmatpush1.msra.mxu0 0.0
    %1802 = vmatprep.subr.mxu0 0.0
    %1803 = vmatpush1.msra.mxu0 0.0
    %1804 = vmatprep.subr.mxu0 0.0
    %1805 = vmatpush1.msra.mxu0 0.0
    %1806 = vmatprep.subr.mxu0 0.0
    %1807 = vmatpush1.msra.mxu0 0.0
    %1808 = vmatprep.subr.mxu0 0.0
    %1809 = vmatpush1.msra.mxu0 0.0
    %1810 = vmatprep.subr.mxu0 0.0
    %1811 = vmatpush1.msra.mxu0 0.0
    %1812 = vmatprep.subr.mxu0 0.0
    %1813 = vmatpush1.msra.mxu0 0.0
    %1814 = vmatprep.subr.mxu0 0.0
    %1815 = vmatpush1.msra.mxu0 0.0
    %1816 = vmatprep.subr.mxu0 0.0
    %1817 = vmatpush1.msra.mxu0 0.0
    %1818 = vmatprep.subr.mxu0 0.0
    %1819 = vmatpush1.msra.mxu0 0.0
    %1820 = vmatprep.subr.mxu0 0.0
    %1821 = vmatpush1.msra.mxu0 0.0
    %1822 = vmatprep.subr.mxu0 0.0
    %1823 = vmatpush1.msra.mxu0 0.0
    %1824 = vmatprep.subr.mxu0 0.0
    %1825 = vmatpush1.msra.mxu0 0.0
    %1826 = vmatprep.subr.mxu0 0.0
    %1827 = vmatpush1.msra.mxu0 0.0
    %1828 = vmatprep.subr.mxu0 0.0
    %1829 = vmatpush1.msra.mxu0 0.0
    %1830 = vmatprep.subr.mxu0 0.0
    %1831 = vmatpush1.msra.mxu0 0.0
    %1832 = vmatprep.subr.mxu0 0.0
    %1833 = vmatpush1.msra.mxu0 0.0
    %1834 = vmatprep.subr.mxu0 0.0
    %1835 = vmatpush1.msra.mxu0 0.0
    %1836 = vmatprep.subr.mxu0 0.0
    %1837 = vmatpush1.msra.mxu0 0.0
    %1838 = vmatprep.subr.mxu0 0.0
    %1839 = vmatpush1.msra.mxu0 0.0
    %1840 = vmatprep.subr.mxu0 0.0
    %1841 = vmatpush1.msra.mxu0 0.0
    %1842 = vmatprep.subr.mxu0 0.0
    %1843 = vmatpush1.msra.mxu0 0.0
    %1844 = vmatprep.subr.mxu0 0.0
    %1845 = vmatpush1.msra.mxu0 0.0
    %1846 = vmatprep.mubr.f32.mxu0 0.0
    %1847 = vmatmul.mubr.f32.gmra.mrb[0].mxu0 %v1771
    %v1848 = vpop.f32.mrb[0].mxu0
    %v1849 = vadd.f32 0.0, %v1848
    %v1850 = vpop.f32.mrb[0].mxu0
    %1851 = vmatprep.mubr.f32.mxu0 0.0
    %1852 = vmatmul.mubr.f32.gmra.mrb[0].mxu0 %v1774
    %v1853 = vpop.f32.mrb[0].mxu0
    %v1854 = vadd.f32 0.0, %v1853
    %v1855 = vpop.f32.mrb[0].mxu0
    %1856 = vmatprep.mubr.f32.mxu0 0.0
    %1857 = vmatmul.mubr.f32.gmra.mrb[0].mxu0 %v1777
    %v1858 = vpop.f32.mrb[0].mxu0
    %v1859 = vadd.f32 0.0, %v1858
    %v1860 = vpop.f32.mrb[0].mxu0
    %1861 = vmatprep.mubr.f32.mxu0 0.0
    %1862 = vmatmul.mubr.f32.gmra.mrb[0].mxu0 %v1780
    %v1863 = vpop.f32.mrb[0].mxu0
    %v1864 = vadd.f32 0.0, %v1863
    %v1865 = vpop.f32.mrb[0].mxu0
    %1866 = vdwg.mxu0
    %v1867 = vld [vmem:[#allocation8 + $0x80] sm:$0xff]
    %v1868 = vld [vmem:[#allocation8 + $0x98] sm:$0x1]
    %v1869 = vld [vmem:[#allocation8 + $0xc0] sm:$0xff]
    %v1870 = vld [vmem:[#allocation8 + $0xc8] sm:$0xff]
    %vm1871 = vcmask 64512
    %v1873 = vsel %vm1871, %v1849, 0
    %v1876 = vsel %vm1871, %v1854, 0
    %v1879 = vsel %vm1871, %v1859, 0
    %v1882 = vsel %vm1871, %v1864, 0
    %1884 = vmatprep.subr.mxu0 0.0
    %1885 = vmatpush1.msra.mxu0 %v1867
    %1886 = vmatprep.subr.mxu0 0.0
    %1887 = vmatpush1.msra.mxu0 0.0
    %1888 = vmatprep.subr.mxu0 0.0
    %1889 = vmatpush1.msra.mxu0 0.0
    %1890 = vmatprep.subr.mxu0 0.0
    %1891 = vmatpush1.msra.mxu0 0.0
    %1892 = vmatprep.subr.mxu0 0.0
    %1893 = vmatpush1.msra.mxu0 0.0
    %1894 = vmatprep.subr.mxu0 0.0
    %1895 = vmatpush1.msra.mxu0 0.0
    %1896 = vmatprep.subr.mxu0 0.0
    %1897 = vmatpush1.msra.mxu0 0.0
    %1898 = vmatprep.subr.mxu0 0.0
    %1899 = vmatpush1.msra.mxu0 0.0
    %1900 = vmatprep.subr.mxu0 0.0
    %1901 = vmatpush1.msra.mxu0 0.0
    %1902 = vmatprep.subr.mxu0 0.0
    %1903 = vmatpush1.msra.mxu0 0.0
    %1904 = vmatprep.subr.mxu0 0.0
    %1905 = vmatpush1.msra.mxu0 0.0
    %1906 = vmatprep.subr.mxu0 0.0
    %1907 = vmatpush1.msra.mxu0 0.0
    %1908 = vmatprep.subr.mxu0 0.0
    %1909 = vmatpush1.msra.mxu0 0.0
    %1910 = vmatprep.subr.mxu0 0.0
    %1911 = vmatpush1.msra.mxu0 0.0
    %1912 = vmatprep.subr.mxu0 0.0
    %1913 = vmatpush1.msra.mxu0 0.0
    %1914 = vmatprep.subr.mxu0 0.0
    %1915 = vmatpush1.msra.mxu0 0.0
    %1916 = vmatprep.subr.mxu0 0.0
    %1917 = vmatpush1.msra.mxu0 0.0
    %1918 = vmatprep.subr.mxu0 0.0
    %1919 = vmatpush1.msra.mxu0 0.0
    %1920 = vmatprep.subr.mxu0 0.0
    %1921 = vmatpush1.msra.mxu0 0.0
    %1922 = vmatprep.subr.mxu0 0.0
    %1923 = vmatpush1.msra.mxu0 0.0
    %1924 = vmatprep.subr.mxu0 0.0
    %1925 = vmatpush1.msra.mxu0 0.0
    %1926 = vmatprep.subr.mxu0 0.0
    %1927 = vmatpush1.msra.mxu0 0.0
    %1928 = vmatprep.subr.mxu0 0.0
    %1929 = vmatpush1.msra.mxu0 0.0
    %1930 = vmatprep.subr.mxu0 0.0
    %1931 = vmatpush1.msra.mxu0 0.0
    %1932 = vmatprep.subr.mxu0 0.0
    %1933 = vmatpush1.msra.mxu0 0.0
    %1934 = vmatprep.subr.mxu0 0.0
    %1935 = vmatpush1.msra.mxu0 0.0
    %1936 = vmatprep.subr.mxu0 0.0
    %1937 = vmatpush1.msra.mxu0 0.0
    %1938 = vmatprep.subr.mxu0 0.0
    %1939 = vmatpush1.msra.mxu0 0.0
    %1940 = vmatprep.subr.mxu0 0.0
    %1941 = vmatpush1.msra.mxu0 0.0
    %1942 = vmatprep.subr.mxu0 0.0
    %1943 = vmatpush1.msra.mxu0 0.0
    %1944 = vmatprep.subr.mxu0 0.0
    %1945 = vmatpush1.msra.mxu0 0.0
    %1946 = vmatprep.subr.mxu0 0.0
    %1947 = vmatpush1.msra.mxu0 0.0
    %1948 = vmatprep.mubr.f32.mxu0 0.0
    %1949 = vmatmul.mubr.f32.gmra.mrb[0].mxu0 %v1873
    %v1950 = vpop.f32.mrb[0].mxu0
    %v1951 = vadd.f32 0.0, %v1950
    %v1952 = vpop.f32.mrb[0].mxu0
    %1953 = vmatprep.mubr.f32.mxu0 0.0
    %1954 = vmatmul.mubr.f32.gmra.mrb[0].mxu0 %v1876
    %v1955 = vpop.f32.mrb[0].mxu0
    %v1956 = vadd.f32 0.0, %v1955
    %v1957 = vpop.f32.mrb[0].mxu0
    %1958 = vmatprep.mubr.f32.mxu0 0.0
    %1959 = vmatmul.mubr.f32.gmra.mrb[0].mxu0 %v1879
    %v1960 = vpop.f32.mrb[0].mxu0
    %v1961 = vadd.f32 0.0, %v1960
    %v1962 = vpop.f32.mrb[0].mxu0
    %1963 = vmatprep.mubr.f32.mxu0 0.0
    %1964 = vmatmul.mubr.f32.gmra.mrb[0].mxu0 %v1882
    %v1965 = vpop.f32.mrb[0].mxu0
    %v1966 = vadd.f32 0.0, %v1965
    %v1967 = vpop.f32.mrb[0].mxu0
    %1968 = vdwg.mxu0
    %v1970 = vsel %vm1871, %v1868, 0
    %1972 = vmatprep.subr.mxu0 0.0
    %1973 = vmatpush1.xpose.msra.mxu0 %v1873
    %1974 = vmatprep.subr.mxu0 0.0
    %1975 = vmatpush1.xpose.msra.mxu0 %v1876
    %1976 = vmatprep.subr.mxu0 0.0
    %1977 = vmatpush1.xpose.msra.mxu0 0.0
    %1978 = vmatprep.subr.mxu0 0.0
    %1979 = vmatpush1.xpose.msra.mxu0 0.0
    %1980 = vmatprep.subr.mxu0 0.0
    %1981 = vmatpush1.xpose.msra.mxu0 0.0
    %1982 = vmatprep.subr.mxu0 0.0
    %1983 = vmatpush1.xpose.msra.mxu0 0.0
    %1984 = vmatprep.subr.mxu0 0.0
    %1985 = vmatpush1.xpose.msra.mxu0 0.0
    %1986 = vmatprep.subr.mxu0 0.0
    %1987 = vmatpush1.xpose.msra.mxu0 0.0
    %1988 = vmatprep.subr.mxu0 0.0
    %1989 = vmatpush1.xpose.msra.mxu0 0.0
    %1990 = vmatprep.subr.mxu0 0.0
    %1991 = vmatpush1.xpose.msra.mxu0 0.0
    %1992 = vmatprep.subr.mxu0 0.0
    %1993 = vmatpush1.xpose.msra.mxu0 0.0
    %1994 = vmatprep.subr.mxu0 0.0
    %1995 = vmatpush1.xpose.msra.mxu0 0.0
    %1996 = vmatprep.subr.mxu0 0.0
    %1997 = vmatpush1.xpose.msra.mxu0 0.0
    %1998 = vmatprep.subr.mxu0 0.0
    %1999 = vmatpush1.xpose.msra.mxu0 0.0
    %2000 = vmatprep.subr.mxu0 0.0
    %2001 = vmatpush1.xpose.msra.mxu0 0.0
    %2002 = vmatprep.subr.mxu0 0.0
    %2003 = vmatpush1.xpose.msra.mxu0 0.0
    %2004 = vmatprep.subr.mxu0 0.0
    %2005 = vmatpush1.xpose.msra.mxu0 0.0
    %2006 = vmatprep.subr.mxu0 0.0
    %2007 = vmatpush1.xpose.msra.mxu0 0.0
    %2008 = vmatprep.subr.mxu0 0.0
    %2009 = vmatpush1.xpose.msra.mxu0 0.0
    %2010 = vmatprep.subr.mxu0 0.0
    %2011 = vmatpush1.xpose.msra.mxu0 0.0
    %2012 = vmatprep.subr.mxu0 0.0
    %2013 = vmatpush1.xpose.msra.mxu0 0.0
    %2014 = vmatprep.subr.mxu0 0.0
    %2015 = vmatpush1.xpose.msra.mxu0 0.0
    %2016 = vmatprep.subr.mxu0 0.0
    %2017 = vmatpush1.xpose.msra.mxu0 0.0
    %2018 = vmatprep.subr.mxu0 0.0
    %2019 = vmatpush1.xpose.msra.mxu0 0.0
    %2020 = vmatprep.subr.mxu0 0.0
    %2021 = vmatpush1.xpose.msra.mxu0 0.0
    %2022 = vmatprep.subr.mxu0 0.0
    %2023 = vmatpush1.xpose.msra.mxu0 0.0
    %2024 = vmatprep.subr.mxu0 0.0
    %2025 = vmatpush1.xpose.msra.mxu0 0.0
    %2026 = vmatprep.subr.mxu0 0.0
    %2027 = vmatpush1.xpose.msra.mxu0 0.0
    %2028 = vmatprep.subr.mxu0 0.0
    %2029 = vmatpush1.xpose.msra.mxu0 0.0
    %2030 = vmatprep.subr.mxu0 0.0
    %2031 = vmatpush1.xpose.msra.mxu0 0.0
    %2032 = vmatprep.subr.mxu0 0.0
    %2033 = vmatpush1.xpose.msra.mxu0 0.0
    %2034 = vmatprep.subr.mxu0 0.0
    %2035 = vmatpush1.xpose.msra.mxu0 0.0
    %2036 = vmatprep.mubr.f32.mxu0 0.0
    %2037 = vmatmul.mubr.f32.gmra.mrb[0].mxu0 %v1970
    %v2038 = vpop.f32.mrb[0].mxu0
    %v2039 = vadd.f32 0.0, %v2038
    %v2040 = vpop.f32.mrb[0].mxu0
    %2041 = vdwg.mxu0
    %2043 = vset.pattern.permute.xlu0 0
    %2044 = vperm.xlu0 %2043, %v1951
    %v2045 = vpop.permute.xlu0 %2044
    %2048 = vset.pattern.permute.xlu0 0
    %2049 = vperm.xlu0 %2048, %v1956
    %v2050 = vpop.permute.xlu0 %2049
    %v2052 = vlaneseq
    %v2053 = vshrl.u32 %v2052, 7
    %v2054 = vsub.s32 0, %v2053
    %v2055 = vrot.slane %v2039, %v2054
    %v2056 = vadd.f32 %v2045, %v2055
    %v2057 = vadd.f32 %v2050, %v2055
    %vm2058 = vcmp.gt.f32.partialorder %v2056, 0.0
    %vm2059 = vcmp.gt.f32.partialorder %v2057, 0.0
    %v2060 = vmul.f32 %v2056, 0.01
    %v2061 = vmul.f32 %v2057, 0.01
    %v2062 = vsel %vm2058, %v2056, %v2060
    %v2063 = vsel %vm2059, %v2057, %v2061
    %vm2064 = vcmp.gt.f32.partialorder %v1361, 1e-05
    %vm2065 = vcmp.gt.f32.partialorder %v1362, 1e-05
    %v2066 = vsel %vm2064, %v2062, -1e+13
    %v2067 = vsel %vm2065, %v2063, -1e+13
    %v2069 = vsel %vm377, %v2066, 0
    %v2072 = vsel %vm377, %v2067, 0
    %2074 = vmatprep.subr.mxu0 0.0
    %2075 = vmatpush1.msra.mxu0 %v1869
    %2076 = vmatprep.subr.mxu0 0.0
    %2077 = vmatpush1.msra.mxu0 %v1870
    %2078 = vmatprep.subr.mxu0 0.0
    %2079 = vmatpush1.msra.mxu0 0.0
    %2080 = vmatprep.subr.mxu0 0.0
    %2081 = vmatpush1.msra.mxu0 0.0
    %2082 = vmatprep.subr.mxu0 0.0
    %2083 = vmatpush1.msra.mxu0 0.0
    %2084 = vmatprep.subr.mxu0 0.0
    %2085 = vmatpush1.msra.mxu0 0.0
    %2086 = vmatprep.subr.mxu0 0.0
    %2087 = vmatpush1.msra.mxu0 0.0
    %2088 = vmatprep.subr.mxu0 0.0
    %2089 = vmatpush1.msra.mxu0 0.0
    %2090 = vmatprep.subr.mxu0 0.0
    %2091 = vmatpush1.msra.mxu0 0.0
    %2092 = vmatprep.subr.mxu0 0.0
    %2093 = vmatpush1.msra.mxu0 0.0
    %2094 = vmatprep.subr.mxu0 0.0
    %2095 = vmatpush1.msra.mxu0 0.0
    %2096 = vmatprep.subr.mxu0 0.0
    %2097 = vmatpush1.msra.mxu0 0.0
    %2098 = vmatprep.subr.mxu0 0.0
    %2099 = vmatpush1.msra.mxu0 0.0
    %2100 = vmatprep.subr.mxu0 0.0
    %2101 = vmatpush1.msra.mxu0 0.0
    %2102 = vmatprep.subr.mxu0 0.0
    %2103 = vmatpush1.msra.mxu0 0.0
    %2104 = vmatprep.subr.mxu0 0.0
    %2105 = vmatpush1.msra.mxu0 0.0
    %2106 = vmatprep.subr.mxu0 0.0
    %2107 = vmatpush1.msra.mxu0 0.0
    %2108 = vmatprep.subr.mxu0 0.0
    %2109 = vmatpush1.msra.mxu0 0.0
    %2110 = vmatprep.subr.mxu0 0.0
    %2111 = vmatpush1.msra.mxu0 0.0
    %2112 = vmatprep.subr.mxu0 0.0
    %2113 = vmatpush1.msra.mxu0 0.0
    %2114 = vmatprep.subr.mxu0 0.0
    %2115 = vmatpush1.msra.mxu0 0.0
    %2116 = vmatprep.subr.mxu0 0.0
    %2117 = vmatpush1.msra.mxu0 0.0
    %2118 = vmatprep.subr.mxu0 0.0
    %2119 = vmatpush1.msra.mxu0 0.0
    %2120 = vmatprep.subr.mxu0 0.0
    %2121 = vmatpush1.msra.mxu0 0.0
    %2122 = vmatprep.subr.mxu0 0.0
    %2123 = vmatpush1.msra.mxu0 0.0
    %2124 = vmatprep.subr.mxu0 0.0
    %2125 = vmatpush1.msra.mxu0 0.0
    %2126 = vmatprep.subr.mxu0 0.0
    %2127 = vmatpush1.msra.mxu0 0.0
    %2128 = vmatprep.subr.mxu0 0.0
    %2129 = vmatpush1.msra.mxu0 0.0
    %2130 = vmatprep.subr.mxu0 0.0
    %2131 = vmatpush1.msra.mxu0 0.0
    %2132 = vmatprep.subr.mxu0 0.0
    %2133 = vmatpush1.msra.mxu0 0.0
    %2134 = vmatprep.subr.mxu0 0.0
    %2135 = vmatpush1.msra.mxu0 0.0
    %2136 = vmatprep.subr.mxu0 0.0
    %2137 = vmatpush1.msra.mxu0 0.0
    %2138 = vmatprep.mubr.f32.mxu0 0.0
    %2139 = vmatmul.mubr.f32.gmra.mrb[0].mxu0 %v2069
    %v2140 = vpop.f32.mrb[0].mxu0
    %v2141 = vadd.f32 0.0, %v2140
    %v2142 = vpop.f32.mrb[0].mxu0
    %2143 = vmatprep.mubr.f32.mxu0 0.0
    %2144 = vmatmul.mubr.f32.gmra.mrb[0].mxu0 %v2072
    %v2145 = vpop.f32.mrb[0].mxu0
    %v2146 = vadd.f32 0.0, %v2145
    %v2147 = vpop.f32.mrb[0].mxu0
    %2148 = vdwg.mxu0
    %v2149 = vsel %vm377, %v2141, -inf
    %2150 = vmax.xlane.f32.xlu0 %v2149
    %v2151 = vpop.xlane.xlu0 %2150
    %v2152 = vsel %vm377, %v2146, -inf
    %2153 = vmax.xlane.f32.xlu0 %v2152
    %v2154 = vpop.xlane.xlu0 %2153
    %v2155 = vsub.f32 %v2141, %v2151
    %v2156 = vsub.f32 %v2146, %v2154
    %v2157 = vmul.f32 %v2155, 1.442695
    %v2158 = vpow.pop %v2157
    %v2159 = vmul.f32 %v2156, 1.442695
    %v2160 = vpow.pop %v2159
    %v2161 = vsel %vm377, %v2158, 0.0
    %2162 = vadd.xlane.f32.xlu0 %v2161
    %v2163 = vpop.xlane.xlu0 %2162
    %v2164 = vsel %vm377, %v2160, 0.0
    %2165 = vadd.xlane.f32.xlu0 %v2164
    %v2166 = vpop.xlane.xlu0 %2165
    %v2167 = vrcp.pop %v2163
    %v2168 = vmul.f32 %v2158, %v2167
    %v2169 = vrcp.pop %v2166
    %v2170 = vmul.f32 %v2160, %v2169
    %2171 = vxpose.xlu0.b32.start [1/16] %v2168, 128
    %2172 = vxpose.xlu0.b32.cont [2/16] %v2170, 128
    %2173 = vxpose.xlu0.b32.cont [3/16] 0.0, 128
    %2174 = vxpose.xlu0.b32.cont [4/16] 0.0, 128
    %2175 = vxpose.xlu0.b32.cont [5/16] 0.0, 128
    %2176 = vxpose.xlu0.b32.cont [6/16] 0.0, 128
    %2177 = vxpose.xlu0.b32.cont [7/16] 0.0, 128
    %2178 = vxpose.xlu0.b32.cont [8/16] 0.0, 128
    %2179 = vxpose.xlu0.b32.cont [9/16] 0.0, 128
    %2180 = vxpose.xlu0.b32.cont [10/16] 0.0, 128
    %2181 = vxpose.xlu0.b32.cont [11/16] 0.0, 128
    %2182 = vxpose.xlu0.b32.cont [12/16] 0.0, 128
    %2183 = vxpose.xlu0.b32.cont [13/16] 0.0, 128
    %2184 = vxpose.xlu0.b32.cont [14/16] 0.0, 128
    %2185 = vxpose.xlu0.b32.cont [15/16] 0.0, 128
    %2186 = vxpose.xlu0.b32.end [16/16] 0.0, 128
    %v2187 = vpop.trf.xlu0
    %v2188 = vpop.trf.xlu0
    %v2189 = vpop.trf.xlu0
    %v2190 = vpop.trf.xlu0
    %v2191 = vpop.trf.xlu0
    %v2192 = vpop.trf.xlu0
    %v2193 = vpop.trf.xlu0
    %v2194 = vpop.trf.xlu0
    %v2195 = vpop.trf.xlu0
    %v2196 = vpop.trf.xlu0
    %v2197 = vpop.trf.xlu0
    %v2198 = vpop.trf.xlu0
    %v2199 = vpop.trf.xlu0
    %v2200 = vpop.trf.xlu0
    %v2201 = vpop.trf.xlu0
    %v2202 = vpop.trf.xlu0
    %v2203 = vadd.f32 %v2168, %v2187
    %v2204 = vadd.f32 %v2170, %v2188
    %v2205 = vmul.f32 %v2203, 0.5
    %v2206 = vmul.f32 %v2204, 0.5
    %v2208 = vsel %vm377, %v2205, 0
    %v2211 = vsel %vm377, %v2206, 0
    %2213 = vmatprep.subr.mxu0 0.0
    %2214 = vmatpush1.msra.mxu0 %v1849
    %2215 = vmatprep.subr.mxu0 0.0
    %2216 = vmatpush1.msra.mxu0 %v1854
    %2217 = vmatprep.subr.mxu0 0.0
    %2218 = vmatpush1.msra.mxu0 0.0
    %2219 = vmatprep.subr.mxu0 0.0
    %2220 = vmatpush1.msra.mxu0 0.0
    %2221 = vmatprep.subr.mxu0 0.0
    %2222 = vmatpush1.msra.mxu0 0.0
    %2223 = vmatprep.subr.mxu0 0.0
    %2224 = vmatpush1.msra.mxu0 0.0
    %2225 = vmatprep.subr.mxu0 0.0
    %2226 = vmatpush1.msra.mxu0 0.0
    %2227 = vmatprep.subr.mxu0 0.0
    %2228 = vmatpush1.msra.mxu0 0.0
    %2229 = vmatprep.subr.mxu0 0.0
    %2230 = vmatpush1.msra.mxu0 0.0
    %2231 = vmatprep.subr.mxu0 0.0
    %2232 = vmatpush1.msra.mxu0 0.0
    %2233 = vmatprep.subr.mxu0 0.0
    %2234 = vmatpush1.msra.mxu0 0.0
    %2235 = vmatprep.subr.mxu0 0.0
    %2236 = vmatpush1.msra.mxu0 0.0
    %2237 = vmatprep.subr.mxu0 0.0
    %2238 = vmatpush1.msra.mxu0 0.0
    %2239 = vmatprep.subr.mxu0 0.0
    %2240 = vmatpush1.msra.mxu0 0.0
    %2241 = vmatprep.subr.mxu0 0.0
    %2242 = vmatpush1.msra.mxu0 0.0
    %2243 = vmatprep.subr.mxu0 0.0
    %2244 = vmatpush1.msra.mxu0 0.0
    %2245 = vmatprep.subr.mxu0 0.0
    %2246 = vmatpush1.msra.mxu0 0.0
    %2247 = vmatprep.subr.mxu0 0.0
    %2248 = vmatpush1.msra.mxu0 0.0
    %2249 = vmatprep.subr.mxu0 0.0
    %2250 = vmatpush1.msra.mxu0 0.0
    %2251 = vmatprep.subr.mxu0 0.0
    %2252 = vmatpush1.msra.mxu0 0.0
    %2253 = vmatprep.subr.mxu0 0.0
    %2254 = vmatpush1.msra.mxu0 0.0
    %2255 = vmatprep.subr.mxu0 0.0
    %2256 = vmatpush1.msra.mxu0 0.0
    %2257 = vmatprep.subr.mxu0 0.0
    %2258 = vmatpush1.msra.mxu0 0.0
    %2259 = vmatprep.subr.mxu0 0.0
    %2260 = vmatpush1.msra.mxu0 0.0
    %2261 = vmatprep.subr.mxu0 0.0
    %2262 = vmatpush1.msra.mxu0 0.0
    %2263 = vmatprep.subr.mxu0 0.0
    %2264 = vmatpush1.msra.mxu0 0.0
    %2265 = vmatprep.subr.mxu0 0.0
    %2266 = vmatpush1.msra.mxu0 0.0
    %2267 = vmatprep.subr.mxu0 0.0
    %2268 = vmatpush1.msra.mxu0 0.0
    %2269 = vmatprep.subr.mxu0 0.0
    %2270 = vmatpush1.msra.mxu0 0.0
    %2271 = vmatprep.subr.mxu0 0.0
    %2272 = vmatpush1.msra.mxu0 0.0
    %2273 = vmatprep.subr.mxu0 0.0
    %2274 = vmatpush1.msra.mxu0 0.0
    %2275 = vmatprep.subr.mxu0 0.0
    %2276 = vmatpush1.msra.mxu0 0.0
    %2277 = vmatprep.mubr.f32.mxu0 0.0
    %2278 = vmatmul.mubr.f32.gmra.mrb[0].mxu0 %v2208
    %v2279 = vpop.f32.mrb[0].mxu0
    %v2280 = vadd.f32 0.0, %v2279
    %v2281 = vpop.f32.mrb[0].mxu0
    %2282 = vmatprep.mubr.f32.mxu0 0.0
    %2283 = vmatmul.mubr.f32.gmra.mrb[0].mxu0 %v2211
    %v2284 = vpop.f32.mrb[0].mxu0
    %v2285 = vadd.f32 0.0, %v2284
    %v2286 = vpop.f32.mrb[0].mxu0
    %2287 = vdwg.mxu0
    %2288 = vst.msk [vmem:[#allocation2] sm:$0xff] %vm1871, %v2280
    %2289 = vst.msk [vmem:[#allocation2 + $0x8] sm:$0xff] %vm1871, %v2285
    %2290 = vmatprep.subr.mxu0 0.0
    %2291 = vmatpush1.xpose.msra.mxu0 %v1879
    %2292 = vmatprep.subr.mxu0 0.0
    %2293 = vmatpush1.xpose.msra.mxu0 %v1882
    %2294 = vmatprep.subr.mxu0 0.0
    %2295 = vmatpush1.xpose.msra.mxu0 0.0
    %2296 = vmatprep.subr.mxu0 0.0
    %2297 = vmatpush1.xpose.msra.mxu0 0.0
    %2298 = vmatprep.subr.mxu0 0.0
    %2299 = vmatpush1.xpose.msra.mxu0 0.0
    %2300 = vmatprep.subr.mxu0 0.0
    %2301 = vmatpush1.xpose.msra.mxu0 0.0
    %2302 = vmatprep.subr.mxu0 0.0
    %2303 = vmatpush1.xpose.msra.mxu0 0.0
    %2304 = vmatprep.subr.mxu0 0.0
    %2305 = vmatpush1.xpose.msra.mxu0 0.0
    %2306 = vmatprep.subr.mxu0 0.0
    %2307 = vmatpush1.xpose.msra.mxu0 0.0
    %2308 = vmatprep.subr.mxu0 0.0
    %2309 = vmatpush1.xpose.msra.mxu0 0.0
    %2310 = vmatprep.subr.mxu0 0.0
    %2311 = vmatpush1.xpose.msra.mxu0 0.0
    %2312 = vmatprep.subr.mxu0 0.0
    %2313 = vmatpush1.xpose.msra.mxu0 0.0
    %2314 = vmatprep.subr.mxu0 0.0
    %2315 = vmatpush1.xpose.msra.mxu0 0.0
    %2316 = vmatprep.subr.mxu0 0.0
    %2317 = vmatpush1.xpose.msra.mxu0 0.0
    %2318 = vmatprep.subr.mxu0 0.0
    %2319 = vmatpush1.xpose.msra.mxu0 0.0
    %2320 = vmatprep.subr.mxu0 0.0
    %2321 = vmatpush1.xpose.msra.mxu0 0.0
    %2322 = vmatprep.subr.mxu0 0.0
    %2323 = vmatpush1.xpose.msra.mxu0 0.0
    %2324 = vmatprep.subr.mxu0 0.0
    %2325 = vmatpush1.xpose.msra.mxu0 0.0
    %2326 = vmatprep.subr.mxu0 0.0
    %2327 = vmatpush1.xpose.msra.mxu0 0.0
    %2328 = vmatprep.subr.mxu0 0.0
    %2329 = vmatpush1.xpose.msra.mxu0 0.0
    %2330 = vmatprep.subr.mxu0 0.0
    %2331 = vmatpush1.xpose.msra.mxu0 0.0
    %2332 = vmatprep.subr.mxu0 0.0
    %2333 = vmatpush1.xpose.msra.mxu0 0.0
    %2334 = vmatprep.subr.mxu0 0.0
    %2335 = vmatpush1.xpose.msra.mxu0 0.0
    %2336 = vmatprep.subr.mxu0 0.0
    %2337 = vmatpush1.xpose.msra.mxu0 0.0
    %2338 = vmatprep.subr.mxu0 0.0
    %2339 = vmatpush1.xpose.msra.mxu0 0.0
    %2340 = vmatprep.subr.mxu0 0.0
    %2341 = vmatpush1.xpose.msra.mxu0 0.0
    %2342 = vmatprep.subr.mxu0 0.0
    %2343 = vmatpush1.xpose.msra.mxu0 0.0
    %2344 = vmatprep.subr.mxu0 0.0
    %2345 = vmatpush1.xpose.msra.mxu0 0.0
    %2346 = vmatprep.subr.mxu0 0.0
    %2347 = vmatpush1.xpose.msra.mxu0 0.0
    %2348 = vmatprep.subr.mxu0 0.0
    %2349 = vmatpush1.xpose.msra.mxu0 0.0
    %2350 = vmatprep.subr.mxu0 0.0
    %2351 = vmatpush1.xpose.msra.mxu0 0.0
    %2352 = vmatprep.subr.mxu0 0.0
    %2353 = vmatpush1.xpose.msra.mxu0 0.0
    %2354 = vmatprep.mubr.f32.mxu0 0.0
    %2355 = vmatmul.mubr.f32.gmra.mrb[0].mxu0 %v1970
    %v2356 = vpop.f32.mrb[0].mxu0
    %v2357 = vadd.f32 0.0, %v2356
    %v2358 = vpop.f32.mrb[0].mxu0
    %2359 = vdwg.mxu0
    %2361 = vset.pattern.permute.xlu0 0
    %2362 = vperm.xlu0 %2361, %v1961
    %v2363 = vpop.permute.xlu0 %2362
    %2366 = vset.pattern.permute.xlu0 0
    %2367 = vperm.xlu0 %2366, %v1966
    %v2368 = vpop.permute.xlu0 %2367
    %v2370 = vlaneseq
    %v2371 = vshrl.u32 %v2370, 7
    %v2372 = vsub.s32 0, %v2371
    %v2373 = vrot.slane %v2357, %v2372
    %v2374 = vadd.f32 %v2363, %v2373
    %v2375 = vadd.f32 %v2368, %v2373
    %vm2376 = vcmp.gt.f32.partialorder %v2374, 0.0
    %vm2377 = vcmp.gt.f32.partialorder %v2375, 0.0
    %v2378 = vmul.f32 %v2374, 0.01
    %v2379 = vmul.f32 %v2375, 0.01
    %v2380 = vsel %vm2376, %v2374, %v2378
    %v2381 = vsel %vm2377, %v2375, %v2379
    %vm2382 = vcmp.gt.f32.partialorder %v1679, 1e-05
    %vm2383 = vcmp.gt.f32.partialorder %v1680, 1e-05
    %v2384 = vsel %vm2382, %v2380, -1e+13
    %v2385 = vsel %vm2383, %v2381, -1e+13
    %v2387 = vsel %vm377, %v2384, 0
    %v2390 = vsel %vm377, %v2385, 0
    %2392 = vmatprep.subr.mxu0 0.0
    %2393 = vmatpush1.msra.mxu0 %v1869
    %2394 = vmatprep.subr.mxu0 0.0
    %2395 = vmatpush1.msra.mxu0 %v1870
    %2396 = vmatprep.subr.mxu0 0.0
    %2397 = vmatpush1.msra.mxu0 0.0
    %2398 = vmatprep.subr.mxu0 0.0
    %2399 = vmatpush1.msra.mxu0 0.0
    %2400 = vmatprep.subr.mxu0 0.0
    %2401 = vmatpush1.msra.mxu0 0.0
    %2402 = vmatprep.subr.mxu0 0.0
    %2403 = vmatpush1.msra.mxu0 0.0
    %2404 = vmatprep.subr.mxu0 0.0
    %2405 = vmatpush1.msra.mxu0 0.0
    %2406 = vmatprep.subr.mxu0 0.0
    %2407 = vmatpush1.msra.mxu0 0.0
    %2408 = vmatprep.subr.mxu0 0.0
    %2409 = vmatpush1.msra.mxu0 0.0
    %2410 = vmatprep.subr.mxu0 0.0
    %2411 = vmatpush1.msra.mxu0 0.0
    %2412 = vmatprep.subr.mxu0 0.0
    %2413 = vmatpush1.msra.mxu0 0.0
    %2414 = vmatprep.subr.mxu0 0.0
    %2415 = vmatpush1.msra.mxu0 0.0
    %2416 = vmatprep.subr.mxu0 0.0
    %2417 = vmatpush1.msra.mxu0 0.0
    %2418 = vmatprep.subr.mxu0 0.0
    %2419 = vmatpush1.msra.mxu0 0.0
    %2420 = vmatprep.subr.mxu0 0.0
    %2421 = vmatpush1.msra.mxu0 0.0
    %2422 = vmatprep.subr.mxu0 0.0
    %2423 = vmatpush1.msra.mxu0 0.0
    %2424 = vmatprep.subr.mxu0 0.0
    %2425 = vmatpush1.msra.mxu0 0.0
    %2426 = vmatprep.subr.mxu0 0.0
    %2427 = vmatpush1.msra.mxu0 0.0
    %2428 = vmatprep.subr.mxu0 0.0
    %2429 = vmatpush1.msra.mxu0 0.0
    %2430 = vmatprep.subr.mxu0 0.0
    %2431 = vmatpush1.msra.mxu0 0.0
    %2432 = vmatprep.subr.mxu0 0.0
    %2433 = vmatpush1.msra.mxu0 0.0
    %2434 = vmatprep.subr.mxu0 0.0
    %2435 = vmatpush1.msra.mxu0 0.0
    %2436 = vmatprep.subr.mxu0 0.0
    %2437 = vmatpush1.msra.mxu0 0.0
    %2438 = vmatprep.subr.mxu0 0.0
    %2439 = vmatpush1.msra.mxu0 0.0
    %2440 = vmatprep.subr.mxu0 0.0
    %2441 = vmatpush1.msra.mxu0 0.0
    %2442 = vmatprep.subr.mxu0 0.0
    %2443 = vmatpush1.msra.mxu0 0.0
    %2444 = vmatprep.subr.mxu0 0.0
    %2445 = vmatpush1.msra.mxu0 0.0
    %2446 = vmatprep.subr.mxu0 0.0
    %2447 = vmatpush1.msra.mxu0 0.0
    %2448 = vmatprep.subr.mxu0 0.0
    %2449 = vmatpush1.msra.mxu0 0.0
    %2450 = vmatprep.subr.mxu0 0.0
    %2451 = vmatpush1.msra.mxu0 0.0
    %2452 = vmatprep.subr.mxu0 0.0
    %2453 = vmatpush1.msra.mxu0 0.0
    %2454 = vmatprep.subr.mxu0 0.0
    %2455 = vmatpush1.msra.mxu0 0.0
    %2456 = vmatprep.mubr.f32.mxu0 0.0
    %2457 = vmatmul.mubr.f32.gmra.mrb[0].mxu0 %v2387
    %v2458 = vpop.f32.mrb[0].mxu0
    %v2459 = vadd.f32 0.0, %v2458
    %v2460 = vpop.f32.mrb[0].mxu0
    %2461 = vmatprep.mubr.f32.mxu0 0.0
    %2462 = vmatmul.mubr.f32.gmra.mrb[0].mxu0 %v2390
    %v2463 = vpop.f32.mrb[0].mxu0
    %v2464 = vadd.f32 0.0, %v2463
    %v2465 = vpop.f32.mrb[0].mxu0
    %2466 = vdwg.mxu0
    %v2467 = vsel %vm377, %v2459, -inf
    %2468 = vmax.xlane.f32.xlu0 %v2467
    %v2469 = vpop.xlane.xlu0 %2468
    %v2470 = vsel %vm377, %v2464, -inf
    %2471 = vmax.xlane.f32.xlu0 %v2470
    %v2472 = vpop.xlane.xlu0 %2471
    %v2473 = vsub.f32 %v2459, %v2469
    %v2474 = vsub.f32 %v2464, %v2472
    %v2475 = vmul.f32 %v2473, 1.442695
    %v2476 = vpow.pop %v2475
    %v2477 = vmul.f32 %v2474, 1.442695
    %v2478 = vpow.pop %v2477
    %v2479 = vsel %vm377, %v2476, 0.0
    %2480 = vadd.xlane.f32.xlu0 %v2479
    %v2481 = vpop.xlane.xlu0 %2480
    %v2482 = vsel %vm377, %v2478, 0.0
    %2483 = vadd.xlane.f32.xlu0 %v2482
    %v2484 = vpop.xlane.xlu0 %2483
    %v2485 = vrcp.pop %v2481
    %v2486 = vmul.f32 %v2476, %v2485
    %v2487 = vrcp.pop %v2484
    %v2488 = vmul.f32 %v2478, %v2487
    %2489 = vxpose.xlu0.b32.start [1/16] %v2486, 128
    %2490 = vxpose.xlu0.b32.cont [2/16] %v2488, 128
    %2491 = vxpose.xlu0.b32.cont [3/16] 0.0, 128
    %2492 = vxpose.xlu0.b32.cont [4/16] 0.0, 128
    %2493 = vxpose.xlu0.b32.cont [5/16] 0.0, 128
    %2494 = vxpose.xlu0.b32.cont [6/16] 0.0, 128
    %2495 = vxpose.xlu0.b32.cont [7/16] 0.0, 128
    %2496 = vxpose.xlu0.b32.cont [8/16] 0.0, 128
    %2497 = vxpose.xlu0.b32.cont [9/16] 0.0, 128
    %2498 = vxpose.xlu0.b32.cont [10/16] 0.0, 128
    %2499 = vxpose.xlu0.b32.cont [11/16] 0.0, 128
    %2500 = vxpose.xlu0.b32.cont [12/16] 0.0, 128
    %2501 = vxpose.xlu0.b32.cont [13/16] 0.0, 128
    %2502 = vxpose.xlu0.b32.cont [14/16] 0.0, 128
    %2503 = vxpose.xlu0.b32.cont [15/16] 0.0, 128
    %2504 = vxpose.xlu0.b32.end [16/16] 0.0, 128
    %v2505 = vpop.trf.xlu0
    %v2506 = vpop.trf.xlu0
    %v2507 = vpop.trf.xlu0
    %v2508 = vpop.trf.xlu0
    %v2509 = vpop.trf.xlu0
    %v2510 = vpop.trf.xlu0
    %v2511 = vpop.trf.xlu0
    %v2512 = vpop.trf.xlu0
    %v2513 = vpop.trf.xlu0
    %v2514 = vpop.trf.xlu0
    %v2515 = vpop.trf.xlu0
    %v2516 = vpop.trf.xlu0
    %v2517 = vpop.trf.xlu0
    %v2518 = vpop.trf.xlu0
    %v2519 = vpop.trf.xlu0
    %v2520 = vpop.trf.xlu0
    %v2521 = vadd.f32 %v2486, %v2505
    %v2522 = vadd.f32 %v2488, %v2506
    %v2523 = vmul.f32 %v2521, 0.5
    %v2524 = vmul.f32 %v2522, 0.5
    %v2526 = vsel %vm377, %v2523, 0
    %v2529 = vsel %vm377, %v2524, 0
    %2531 = vmatprep.subr.mxu0 0.0
    %2532 = vmatpush1.msra.mxu0 %v1859
    %2533 = vmatprep.subr.mxu0 0.0
    %2534 = vmatpush1.msra.mxu0 %v1864
    %2535 = vmatprep.subr.mxu0 0.0
    %2536 = vmatpush1.msra.mxu0 0.0
    %2537 = vmatprep.subr.mxu0 0.0
    %2538 = vmatpush1.msra.mxu0 0.0
    %2539 = vmatprep.subr.mxu0 0.0
    %2540 = vmatpush1.msra.mxu0 0.0
    %2541 = vmatprep.subr.mxu0 0.0
    %2542 = vmatpush1.msra.mxu0 0.0
    %2543 = vmatprep.subr.mxu0 0.0
    %2544 = vmatpush1.msra.mxu0 0.0
    %2545 = vmatprep.subr.mxu0 0.0
    %2546 = vmatpush1.msra.mxu0 0.0
    %2547 = vmatprep.subr.mxu0 0.0
    %2548 = vmatpush1.msra.mxu0 0.0
    %2549 = vmatprep.subr.mxu0 0.0
    %2550 = vmatpush1.msra.mxu0 0.0
    %2551 = vmatprep.subr.mxu0 0.0
    %2552 = vmatpush1.msra.mxu0 0.0
    %2553 = vmatprep.subr.mxu0 0.0
    %2554 = vmatpush1.msra.mxu0 0.0
    %2555 = vmatprep.subr.mxu0 0.0
    %2556 = vmatpush1.msra.mxu0 0.0
    %2557 = vmatprep.subr.mxu0 0.0
    %2558 = vmatpush1.msra.mxu0 0.0
    %2559 = vmatprep.subr.mxu0 0.0
    %2560 = vmatpush1.msra.mxu0 0.0
    %2561 = vmatprep.subr.mxu0 0.0
    %2562 = vmatpush1.msra.mxu0 0.0
    %2563 = vmatprep.subr.mxu0 0.0
    %2564 = vmatpush1.msra.mxu0 0.0
    %2565 = vmatprep.subr.mxu0 0.0
    %2566 = vmatpush1.msra.mxu0 0.0
    %2567 = vmatprep.subr.mxu0 0.0
    %2568 = vmatpush1.msra.mxu0 0.0
    %2569 = vmatprep.subr.mxu0 0.0
    %2570 = vmatpush1.msra.mxu0 0.0
    %2571 = vmatprep.subr.mxu0 0.0
    %2572 = vmatpush1.msra.mxu0 0.0
    %2573 = vmatprep.subr.mxu0 0.0
    %2574 = vmatpush1.msra.mxu0 0.0
    %2575 = vmatprep.subr.mxu0 0.0
    %2576 = vmatpush1.msra.mxu0 0.0
    %2577 = vmatprep.subr.mxu0 0.0
    %2578 = vmatpush1.msra.mxu0 0.0
    %2579 = vmatprep.subr.mxu0 0.0
    %2580 = vmatpush1.msra.mxu0 0.0
    %2581 = vmatprep.subr.mxu0 0.0
    %2582 = vmatpush1.msra.mxu0 0.0
    %2583 = vmatprep.subr.mxu0 0.0
    %2584 = vmatpush1.msra.mxu0 0.0
    %2585 = vmatprep.subr.mxu0 0.0
    %2586 = vmatpush1.msra.mxu0 0.0
    %2587 = vmatprep.subr.mxu0 0.0
    %2588 = vmatpush1.msra.mxu0 0.0
    %2589 = vmatprep.subr.mxu0 0.0
    %2590 = vmatpush1.msra.mxu0 0.0
    %2591 = vmatprep.subr.mxu0 0.0
    %2592 = vmatpush1.msra.mxu0 0.0
    %2593 = vmatprep.subr.mxu0 0.0
    %2594 = vmatpush1.msra.mxu0 0.0
    %2595 = vmatprep.mubr.f32.mxu0 0.0
    %2596 = vmatmul.mubr.f32.gmra.mrb[0].mxu0 %v2526
    %v2597 = vpop.f32.mrb[0].mxu0
    %v2598 = vadd.f32 0.0, %v2597
    %v2599 = vpop.f32.mrb[0].mxu0
    %2600 = vmatprep.mubr.f32.mxu0 0.0
    %2601 = vmatmul.mubr.f32.gmra.mrb[0].mxu0 %v2529
    %v2602 = vpop.f32.mrb[0].mxu0
    %v2603 = vadd.f32 0.0, %v2602
    %v2604 = vpop.f32.mrb[0].mxu0
    %2605 = vdwg.mxu0
    %2606 = vst.msk [vmem:[#allocation2 + $0x10] sm:$0xff] %vm1871, %v2598
    %2607 = vst.msk [vmem:[#allocation2 + $0x18] sm:$0xff] %vm1871, %v2603
    %v2608 = vld [vmem:[#allocation8 + $0xd0] sm:$0x1]
    %v2609 = vld [vmem:[#allocation8 + $0xd8] sm:$0x1]
    %v2610 = vld [vmem:[#allocation8 + $0xe0] sm:$0x1]
    %v2611 = vld [vmem:[#allocation2] sm:$0xff]
    %v2612 = vld [vmem:[#allocation2 + $0x8] sm:$0xff]
    %v2614 = vsel %vm1871, %v2608, 0
    %v2617 = vsel %vm1871, %v2611, 0
    %v2620 = vsel %vm1871, %v2612, 0
    %2622 = vmatprep.subr.mxu0 0.0
    %2623 = vmatpush1.xpose.msra.mxu0 %v2617
    %2624 = vmatprep.subr.mxu0 0.0
    %2625 = vmatpush1.xpose.msra.mxu0 %v2620
    %2626 = vmatprep.subr.mxu0 0.0
    %2627 = vmatpush1.xpose.msra.mxu0 0.0
    %2628 = vmatprep.subr.mxu0 0.0
    %2629 = vmatpush1.xpose.msra.mxu0 0.0
    %2630 = vmatprep.subr.mxu0 0.0
    %2631 = vmatpush1.xpose.msra.mxu0 0.0
    %2632 = vmatprep.subr.mxu0 0.0
    %2633 = vmatpush1.xpose.msra.mxu0 0.0
    %2634 = vmatprep.subr.mxu0 0.0
    %2635 = vmatpush1.xpose.msra.mxu0 0.0
    %2636 = vmatprep.subr.mxu0 0.0
    %2637 = vmatpush1.xpose.msra.mxu0 0.0
    %2638 = vmatprep.subr.mxu0 0.0
    %2639 = vmatpush1.xpose.msra.mxu0 0.0
    %2640 = vmatprep.subr.mxu0 0.0
    %2641 = vmatpush1.xpose.msra.mxu0 0.0
    %2642 = vmatprep.subr.mxu0 0.0
    %2643 = vmatpush1.xpose.msra.mxu0 0.0
    %2644 = vmatprep.subr.mxu0 0.0
    %2645 = vmatpush1.xpose.msra.mxu0 0.0
    %2646 = vmatprep.subr.mxu0 0.0
    %2647 = vmatpush1.xpose.msra.mxu0 0.0
    %2648 = vmatprep.subr.mxu0 0.0
    %2649 = vmatpush1.xpose.msra.mxu0 0.0
    %2650 = vmatprep.subr.mxu0 0.0
    %2651 = vmatpush1.xpose.msra.mxu0 0.0
    %2652 = vmatprep.subr.mxu0 0.0
    %2653 = vmatpush1.xpose.msra.mxu0 0.0
    %2654 = vmatprep.subr.mxu0 0.0
    %2655 = vmatpush1.xpose.msra.mxu0 0.0
    %2656 = vmatprep.subr.mxu0 0.0
    %2657 = vmatpush1.xpose.msra.mxu0 0.0
    %2658 = vmatprep.subr.mxu0 0.0
    %2659 = vmatpush1.xpose.msra.mxu0 0.0
    %2660 = vmatprep.subr.mxu0 0.0
    %2661 = vmatpush1.xpose.msra.mxu0 0.0
    %2662 = vmatprep.subr.mxu0 0.0
    %2663 = vmatpush1.xpose.msra.mxu0 0.0
    %2664 = vmatprep.subr.mxu0 0.0
    %2665 = vmatpush1.xpose.msra.mxu0 0.0
    %2666 = vmatprep.subr.mxu0 0.0
    %2667 = vmatpush1.xpose.msra.mxu0 0.0
    %2668 = vmatprep.subr.mxu0 0.0
    %2669 = vmatpush1.xpose.msra.mxu0 0.0
    %2670 = vmatprep.subr.mxu0 0.0
    %2671 = vmatpush1.xpose.msra.mxu0 0.0
    %2672 = vmatprep.subr.mxu0 0.0
    %2673 = vmatpush1.xpose.msra.mxu0 0.0
    %2674 = vmatprep.subr.mxu0 0.0
    %2675 = vmatpush1.xpose.msra.mxu0 0.0
    %2676 = vmatprep.subr.mxu0 0.0
    %2677 = vmatpush1.xpose.msra.mxu0 0.0
    %2678 = vmatprep.subr.mxu0 0.0
    %2679 = vmatpush1.xpose.msra.mxu0 0.0
    %2680 = vmatprep.subr.mxu0 0.0
    %2681 = vmatpush1.xpose.msra.mxu0 0.0
    %2682 = vmatprep.subr.mxu0 0.0
    %2683 = vmatpush1.xpose.msra.mxu0 0.0
    %2684 = vmatprep.subr.mxu0 0.0
    %2685 = vmatpush1.xpose.msra.mxu0 0.0
    %2686 = vmatprep.mubr.f32.mxu0 0.0
    %2687 = vmatmul.mubr.f32.gmra.mrb[0].mxu0 %v2614
    %v2688 = vpop.f32.mrb[0].mxu0
    %v2689 = vadd.f32 0.0, %v2688
    %v2690 = vpop.f32.mrb[0].mxu0
    %2691 = vdwg.mxu0
    %v2693 = vsel %vm377, %v2689, 0
    %2695 = vmatprep.subr.mxu0 0.0
    %2696 = vmatpush1.msra.mxu0 %v2205
    %2697 = vmatprep.subr.mxu0 0.0
    %2698 = vmatpush1.msra.mxu0 %v2206
    %2699 = vmatprep.subr.mxu0 0.0
    %2700 = vmatpush1.msra.mxu0 0.0
    %2701 = vmatprep.subr.mxu0 0.0
    %2702 = vmatpush1.msra.mxu0 0.0
    %2703 = vmatprep.subr.mxu0 0.0
    %2704 = vmatpush1.msra.mxu0 0.0
    %2705 = vmatprep.subr.mxu0 0.0
    %2706 = vmatpush1.msra.mxu0 0.0
    %2707 = vmatprep.subr.mxu0 0.0
    %2708 = vmatpush1.msra.mxu0 0.0
    %2709 = vmatprep.subr.mxu0 0.0
    %2710 = vmatpush1.msra.mxu0 0.0
    %2711 = vmatprep.subr.mxu0 0.0
    %2712 = vmatpush1.msra.mxu0 0.0
    %2713 = vmatprep.subr.mxu0 0.0
    %2714 = vmatpush1.msra.mxu0 0.0
    %2715 = vmatprep.subr.mxu0 0.0
    %2716 = vmatpush1.msra.mxu0 0.0
    %2717 = vmatprep.subr.mxu0 0.0
    %2718 = vmatpush1.msra.mxu0 0.0
    %2719 = vmatprep.subr.mxu0 0.0
    %2720 = vmatpush1.msra.mxu0 0.0
    %2721 = vmatprep.subr.mxu0 0.0
    %2722 = vmatpush1.msra.mxu0 0.0
    %2723 = vmatprep.subr.mxu0 0.0
    %2724 = vmatpush1.msra.mxu0 0.0
    %2725 = vmatprep.subr.mxu0 0.0
    %2726 = vmatpush1.msra.mxu0 0.0
    %2727 = vmatprep.subr.mxu0 0.0
    %2728 = vmatpush1.msra.mxu0 0.0
    %2729 = vmatprep.subr.mxu0 0.0
    %2730 = vmatpush1.msra.mxu0 0.0
    %2731 = vmatprep.subr.mxu0 0.0
    %2732 = vmatpush1.msra.mxu0 0.0
    %2733 = vmatprep.subr.mxu0 0.0
    %2734 = vmatpush1.msra.mxu0 0.0
    %2735 = vmatprep.subr.mxu0 0.0
    %2736 = vmatpush1.msra.mxu0 0.0
    %2737 = vmatprep.subr.mxu0 0.0
    %2738 = vmatpush1.msra.mxu0 0.0
    %2739 = vmatprep.subr.mxu0 0.0
    %2740 = vmatpush1.msra.mxu0 0.0
    %2741 = vmatprep.subr.mxu0 0.0
    %2742 = vmatpush1.msra.mxu0 0.0
    %2743 = vmatprep.subr.mxu0 0.0
    %2744 = vmatpush1.msra.mxu0 0.0
    %2745 = vmatprep.subr.mxu0 0.0
    %2746 = vmatpush1.msra.mxu0 0.0
    %2747 = vmatprep.subr.mxu0 0.0
    %2748 = vmatpush1.msra.mxu0 0.0
    %2749 = vmatprep.subr.mxu0 0.0
    %2750 = vmatpush1.msra.mxu0 0.0
    %2751 = vmatprep.subr.mxu0 0.0
    %2752 = vmatpush1.msra.mxu0 0.0
    %2753 = vmatprep.subr.mxu0 0.0
    %2754 = vmatpush1.msra.mxu0 0.0
    %2755 = vmatprep.subr.mxu0 0.0
    %2756 = vmatpush1.msra.mxu0 0.0
    %2757 = vmatprep.subr.mxu0 0.0
    %2758 = vmatpush1.msra.mxu0 0.0
    %2759 = vmatprep.mubr.f32.mxu0 0.0
    %2760 = vmatmul.mubr.f32.gmra.mrb[0].mxu0 %v2693
    %v2761 = vpop.f32.mrb[0].mxu0
    %v2762 = vadd.f32 0.0, %v2761
    %v2763 = vpop.f32.mrb[0].mxu0
    %2764 = vdwg.mxu0
    %v2765 = vmul.f32 %v2762, %v2609
    %v2766 = vadd.f32 %v2765, %v2610
    %vm2767 = vcmp.gt.f32.partialorder %v2766, 0.0
    %v2768 = vmul.f32 %v2766, 0.01
    %v2769 = vsel %vm2767, %v2766, %v2768
    %vm2770 = vcmask 122880
    %2771 = vst.msk [vmem:[#allocation9] sm:$0x1] %vm2770, %v2769
    %2772 = vst.msk [vmem:[#allocation10] sm:$0xff] %vm377, %v2205
    %2773 = vst.msk [vmem:[#allocation10 + $0x8] sm:$0xff] %vm377, %v2206
    %v2774 = vld [vmem:[#allocation2 + $0x10] sm:$0xff]
    %v2775 = vld [vmem:[#allocation2 + $0x18] sm:$0xff]
    %v2777 = vsel %vm1871, %v2774, 0
    %v2780 = vsel %vm1871, %v2775, 0
    %2782 = vmatprep.subr.mxu0 0.0
    %2783 = vmatpush1.xpose.msra.mxu0 %v2777
    %2784 = vmatprep.subr.mxu0 0.0
    %2785 = vmatpush1.xpose.msra.mxu0 %v2780
    %2786 = vmatprep.subr.mxu0 0.0
    %2787 = vmatpush1.xpose.msra.mxu0 0.0
    %2788 = vmatprep.subr.mxu0 0.0
    %2789 = vmatpush1.xpose.msra.mxu0 0.0
    %2790 = vmatprep.subr.mxu0 0.0
    %2791 = vmatpush1.xpose.msra.mxu0 0.0
    %2792 = vmatprep.subr.mxu0 0.0
    %2793 = vmatpush1.xpose.msra.mxu0 0.0
    %2794 = vmatprep.subr.mxu0 0.0
    %2795 = vmatpush1.xpose.msra.mxu0 0.0
    %2796 = vmatprep.subr.mxu0 0.0
    %2797 = vmatpush1.xpose.msra.mxu0 0.0
    %2798 = vmatprep.subr.mxu0 0.0
    %2799 = vmatpush1.xpose.msra.mxu0 0.0
    %2800 = vmatprep.subr.mxu0 0.0
    %2801 = vmatpush1.xpose.msra.mxu0 0.0
    %2802 = vmatprep.subr.mxu0 0.0
    %2803 = vmatpush1.xpose.msra.mxu0 0.0
    %2804 = vmatprep.subr.mxu0 0.0
    %2805 = vmatpush1.xpose.msra.mxu0 0.0
    %2806 = vmatprep.subr.mxu0 0.0
    %2807 = vmatpush1.xpose.msra.mxu0 0.0
    %2808 = vmatprep.subr.mxu0 0.0
    %2809 = vmatpush1.xpose.msra.mxu0 0.0
    %2810 = vmatprep.subr.mxu0 0.0
    %2811 = vmatpush1.xpose.msra.mxu0 0.0
    %2812 = vmatprep.subr.mxu0 0.0
    %2813 = vmatpush1.xpose.msra.mxu0 0.0
    %2814 = vmatprep.subr.mxu0 0.0
    %2815 = vmatpush1.xpose.msra.mxu0 0.0
    %2816 = vmatprep.subr.mxu0 0.0
    %2817 = vmatpush1.xpose.msra.mxu0 0.0
    %2818 = vmatprep.subr.mxu0 0.0
    %2819 = vmatpush1.xpose.msra.mxu0 0.0
    %2820 = vmatprep.subr.mxu0 0.0
    %2821 = vmatpush1.xpose.msra.mxu0 0.0
    %2822 = vmatprep.subr.mxu0 0.0
    %2823 = vmatpush1.xpose.msra.mxu0 0.0
    %2824 = vmatprep.subr.mxu0 0.0
    %2825 = vmatpush1.xpose.msra.mxu0 0.0
    %2826 = vmatprep.subr.mxu0 0.0
    %2827 = vmatpush1.xpose.msra.mxu0 0.0
    %2828 = vmatprep.subr.mxu0 0.0
    %2829 = vmatpush1.xpose.msra.mxu0 0.0
    %2830 = vmatprep.subr.mxu0 0.0
    %2831 = vmatpush1.xpose.msra.mxu0 0.0
    %2832 = vmatprep.subr.mxu0 0.0
    %2833 = vmatpush1.xpose.msra.mxu0 0.0
    %2834 = vmatprep.subr.mxu0 0.0
    %2835 = vmatpush1.xpose.msra.mxu0 0.0
    %2836 = vmatprep.subr.mxu0 0.0
    %2837 = vmatpush1.xpose.msra.mxu0 0.0
    %2838 = vmatprep.subr.mxu0 0.0
    %2839 = vmatpush1.xpose.msra.mxu0 0.0
    %2840 = vmatprep.subr.mxu0 0.0
    %2841 = vmatpush1.xpose.msra.mxu0 0.0
    %2842 = vmatprep.subr.mxu0 0.0
    %2843 = vmatpush1.xpose.msra.mxu0 0.0
    %2844 = vmatprep.subr.mxu0 0.0
    %2845 = vmatpush1.xpose.msra.mxu0 0.0
    %2846 = vmatprep.mubr.f32.mxu0 0.0
    %2847 = vmatmul.mubr.f32.gmra.mrb[0].mxu0 %v2614
    %v2848 = vpop.f32.mrb[0].mxu0
    %v2849 = vadd.f32 0.0, %v2848
    %v2850 = vpop.f32.mrb[0].mxu0
    %2851 = vdwg.mxu0
    %v2853 = vsel %vm377, %v2849, 0
    %2855 = vmatprep.subr.mxu0 0.0
    %2856 = vmatpush1.msra.mxu0 %v2523
    %2857 = vmatprep.subr.mxu0 0.0
    %2858 = vmatpush1.msra.mxu0 %v2524
    %2859 = vmatprep.subr.mxu0 0.0
    %2860 = vmatpush1.msra.mxu0 0.0
    %2861 = vmatprep.subr.mxu0 0.0
    %2862 = vmatpush1.msra.mxu0 0.0
    %2863 = vmatprep.subr.mxu0 0.0
    %2864 = vmatpush1.msra.mxu0 0.0
    %2865 = vmatprep.subr.mxu0 0.0
    %2866 = vmatpush1.msra.mxu0 0.0
    %2867 = vmatprep.subr.mxu0 0.0
    %2868 = vmatpush1.msra.mxu0 0.0
    %2869 = vmatprep.subr.mxu0 0.0
    %2870 = vmatpush1.msra.mxu0 0.0
    %2871 = vmatprep.subr.mxu0 0.0
    %2872 = vmatpush1.msra.mxu0 0.0
    %2873 = vmatprep.subr.mxu0 0.0
    %2874 = vmatpush1.msra.mxu0 0.0
    %2875 = vmatprep.subr.mxu0 0.0
    %2876 = vmatpush1.msra.mxu0 0.0
    %2877 = vmatprep.subr.mxu0 0.0
    %2878 = vmatpush1.msra.mxu0 0.0
    %2879 = vmatprep.subr.mxu0 0.0
    %2880 = vmatpush1.msra.mxu0 0.0
    %2881 = vmatprep.subr.mxu0 0.0
    %2882 = vmatpush1.msra.mxu0 0.0
    %2883 = vmatprep.subr.mxu0 0.0
    %2884 = vmatpush1.msra.mxu0 0.0
    %2885 = vmatprep.subr.mxu0 0.0
    %2886 = vmatpush1.msra.mxu0 0.0
    %2887 = vmatprep.subr.mxu0 0.0
    %2888 = vmatpush1.msra.mxu0 0.0
    %2889 = vmatprep.subr.mxu0 0.0
    %2890 = vmatpush1.msra.mxu0 0.0
    %2891 = vmatprep.subr.mxu0 0.0
    %2892 = vmatpush1.msra.mxu0 0.0
    %2893 = vmatprep.subr.mxu0 0.0
    %2894 = vmatpush1.msra.mxu0 0.0
    %2895 = vmatprep.subr.mxu0 0.0
    %2896 = vmatpush1.msra.mxu0 0.0
    %2897 = vmatprep.subr.mxu0 0.0
    %2898 = vmatpush1.msra.mxu0 0.0
    %2899 = vmatprep.subr.mxu0 0.0
    %2900 = vmatpush1.msra.mxu0 0.0
    %2901 = vmatprep.subr.mxu0 0.0
    %2902 = vmatpush1.msra.mxu0 0.0
    %2903 = vmatprep.subr.mxu0 0.0
    %2904 = vmatpush1.msra.mxu0 0.0
    %2905 = vmatprep.subr.mxu0 0.0
    %2906 = vmatpush1.msra.mxu0 0.0
    %2907 = vmatprep.subr.mxu0 0.0
    %2908 = vmatpush1.msra.mxu0 0.0
    %2909 = vmatprep.subr.mxu0 0.0
    %2910 = vmatpush1.msra.mxu0 0.0
    %2911 = vmatprep.subr.mxu0 0.0
    %2912 = vmatpush1.msra.mxu0 0.0
    %2913 = vmatprep.subr.mxu0 0.0
    %2914 = vmatpush1.msra.mxu0 0.0
    %2915 = vmatprep.subr.mxu0 0.0
    %2916 = vmatpush1.msra.mxu0 0.0
    %2917 = vmatprep.subr.mxu0 0.0
    %2918 = vmatpush1.msra.mxu0 0.0
    %2919 = vmatprep.mubr.f32.mxu0 0.0
    %2920 = vmatmul.mubr.f32.gmra.mrb[0].mxu0 %v2853
    %v2921 = vpop.f32.mrb[0].mxu0
    %v2922 = vadd.f32 0.0, %v2921
    %v2923 = vpop.f32.mrb[0].mxu0
    %2924 = vdwg.mxu0
    %v2925 = vmul.f32 %v2922, %v2609
    %v2926 = vadd.f32 %v2925, %v2610
    %vm2927 = vcmp.gt.f32.partialorder %v2926, 0.0
    %v2928 = vmul.f32 %v2926, 0.01
    %v2929 = vsel %vm2927, %v2926, %v2928
    %s2930 = scalar_lea.vmem [#allocation9], 1
    %2931 = vst.msk [vmem:[%s2930] sm:$0x1] %vm2770, %v2929
    %s2932 = scalar_lea.vmem [#allocation10], 16
    %2933 = vst.msk [vmem:[%s2932] sm:$0xff] %vm377, %v2523
    %2934 = vst.msk [vmem:[%s2932 + $0x8] sm:$0xff] %vm377, %v2524
    // Predicated region
    $region26: #{forward.1} parent=1 // pred_check
      _
    $region27: #{forward.1} parent=1 // pred_check_branch
      %2936 = sbr.rel (0) target = $region29
    $region28: #{forward.1} parent=1 // pred_region
      %s2938 = ssub.s32 32, 32
      %2939 = vsyncadd [#allocation5], %s2938
      %s2940 = sshll.u32 [#allocation9], 4
      %s2941 = int_to_ptr.vmem [resolvable:$true] %s2940
      %2946 = dma.vmem_to_hbm [thread:$0]  %s2941, 32, %s3, [#allocation5], 16, 16, 1
    $region29: #{forward.1} parent=1 // pred_fallthru
      _
    // Predicated region
    $region30: #{forward.1} parent=1 // pred_check
      _
    $region31: #{forward.1} parent=1 // pred_check_branch
      %2948 = sbr.rel (0) target = $region33
    $region32: #{forward.1} parent=1 // pred_region
      %s2950 = ssub.s32 512, 512
      %2951 = vsyncadd [#allocation11], %s2950
      %s2952 = sshll.u32 [#allocation10], 4
      %s2953 = int_to_ptr.vmem [resolvable:$true] %s2952
      %2958 = dma.vmem_to_hbm [thread:$0]  %s2953, 512, %s4, [#allocation11], 128, 128, 8
    $region33: #{forward.1} parent=1 // pred_fallthru
      _
    // Predicated region
    $region34: #{forward.1} parent=1 // pred_check
      _
    $region35: #{forward.1} parent=1 // pred_check_branch
      %2960 = sbr.rel (0) target = $region37
    $region36: #{forward.1} parent=1 // pred_region
      %2961 = dma.done [#allocation5], 32
    $region37: #{forward.1} parent=1 // pred_fallthru
      _
    // Predicated region
    $region38: #{forward.1} parent=1 // pred_check
      _
    $region39: #{forward.1} parent=1 // pred_check_branch
      %2963 = sbr.rel (0) target = $region41
    $region40: #{forward.1} parent=1 // pred_region
      %2964 = dma.done [#allocation11], 512
    $region41: #{forward.1} parent=1 // pred_fallthru
      _
    %2965 = vsyncpa [#allocation4], 1
    %2966 = vsyncpa [#allocation7], 1
    %2967 = vsyncpa [#allocation5], 1
    %2968 = vsyncpa [#allocation11], 1

</llo_original>
